<compile_context>
chip_gen: v7x
topology: tpu7x:2x2x1
jax: 0.10.0
libtpu: 0.0.40
codegen_flags: <defaults>
</compile_context>

<pallas_src>
import jax
import jax.numpy as jnp
from jax.experimental import pallas as pl
from jax.experimental.pallas import tpu as pltpu


def _round_up(x, m):
    return ((x + m - 1) // m) * m


def _pick_row_tile(Ht, Wt, K_tot, Cp_out, n_batch, fixed_bytes, budget_bytes):
    """Largest row tile (divisor of Ht) whose VMEM footprint fits the budget."""
    divisors = [d for d in range(1, Ht + 1) if Ht % d == 0]

    def fits(th):
        per_tile = th * Wt * K_tot * 2           # bf16 im2col scratch (single buffer)
        per_tile += 2 * th * Wt * Cp_out * 2     # bf16 output tile, double-buffered
        return fixed_bytes + per_tile <= budget_bytes

    good = [d for d in divisors if fits(d)]
    if not good:
        return 1
    if n_batch >= 2:
        return max(good)                          # batch axis already provides parallelism
    multi = [d for d in good if Ht // d >= 2]     # keep >=2 row tiles for megacore
    return max(multi) if multi else max(good)


def _make_kernel(TH, Wt, KH, KW, pad, Cp_in, Cp_out, has_residual):
    """Per-(batch, row-tile) kernel with static shapes baked in."""
    K_tot = KH * KW * Cp_in
    center = (pad * KW + pad) * Cp_in

    def kernel(xpad_ref, w_ref, bias_ref, out_ref, col_ref):
        # xpad_ref : (Hp, Wpad, Cp_in)  bf16, full padded image (resident across r)
        # w_ref    : (K_tot, Cp_out)    bf16, BN scale folded, taps flattened along K
        # bias_ref : (1, Cp_out)        f32, folded BN bias
        # out_ref  : (TH*Wt, Cp_out)    bf16, one spatially-flattened row tile
        # col_ref  : (TH, Wt, K_tot)    bf16 VMEM scratch, im2col block
        r = pl.program_id(1)
        row0 = r * TH

        # Build the im2col block: one aligned (TH, Wpad, Cp_in) row-window load per
        # kh; the KW horizontal shifts are static value slices (register shuffles),
        # not extra sublane-unaligned VMEM reads.
        for kh in range(KH):
            rw = xpad_ref[pl.ds(row0 + kh, TH), :, :]        # (TH, Wpad, Cp_in)
            for kw in range(KW):
                col_ref[:, :, pl.ds((kh * KW + kw) * Cp_in, Cp_in)] = (
                    rw[:, kw:kw + Wt, :])

        # Single MXU matmul, contraction depth K_tot = KH*KW*Cp_in, f32 accumulate.
        lhs = col_ref[...].reshape(TH * Wt, K_tot)           # layout-free: Wt % 8 == 0
        acc = jnp.dot(lhs, w_ref[...], preferred_element_type=jnp.float32)

        # BN scale pre-folded into w; only bias add + ReLU here.
        y = jnp.maximum(acc + bias_ref[...], 0.0)

        if has_residual:
            # Shortcut == centre-tap band of the im2col scratch (lane-aligned read).
            # drop_path_rate == 0 / eval -> identity.
            res = col_ref[:, :, pl.ds(center, Cp_in)].reshape(TH * Wt, Cp_in)
            y = y + res.astype(jnp.float32)

        out_ref[...] = y.astype(out_ref.dtype)               # bf16 store, no reshape

    return kernel


def conv_bn_act(x_nchw, weight_oihw, gamma, beta, running_mean, running_var,
                *, stride=1, eps=1e-5, drop_path_rate=0.0):
    """Forward pass equivalent to ConvBnAct.forward in eval mode."""
    assert stride == 1, "stride > 1 path not implemented"  # TODO(synk): strided conv
    # TODO(synk): drop_path (stochastic depth, training mode) not implemented;
    #             eval / drop_path_rate==0 behaves as identity, matching PyTorch eval.
    N, Cin, H, W = x_nchw.shape
    Cout, Cin_w, KH, KW = weight_oihw.shape
    assert Cin_w == Cin
    assert KH % 2 == 1 and KW % 2 == 1, "even kernel sizes break the pad=k//2 'same' intent"
    pad = KH // 2
    has_residual = (Cin == Cout) and (stride == 1)

    # Lane-dense channel padding; pad the matmul N dim (Cout) to 256 when large
    # enough to fill the 2x256 MXU on v6e/v7x (neutral on v5e's 128-wide MXU).
    Cp_in = _round_up(Cin, 128)
    Cp_out = _round_up(Cout, 256) if Cout >= 256 else _round_up(Cout, 128)
    if has_residual:
        Cp_in = Cp_out = max(Cp_in, Cp_out)      # residual band must match output pad
    K_tot = KH * KW * Cp_in

    # Spatial padding: conv 'same' halo plus H, W rounded up to multiples of 8 so
    # the leading-dim merges in the kernel are layout-free.
    Ht = _round_up(H, 8)
    Wt = _round_up(W, 8)
    Hp = Ht + 2 * pad
    Wpad = Wt + 2 * pad

    # Fold BN: scale goes into the weights, bias stays as a per-channel add.
    scale = (gamma / jnp.sqrt(running_var + eps)).astype(jnp.float32)
    bias = (beta - running_mean * scale).astype(jnp.float32)

    w_hwio = jnp.transpose(weight_oihw, (2, 3, 1, 0)).astype(jnp.float32)
    w_hwio = w_hwio * scale[None, None, None, :]
    w_hwio = jnp.pad(w_hwio, ((0, 0), (0, 0), (0, Cp_in - Cin), (0, Cp_out - Cout)))
    w_flat = w_hwio.reshape(K_tot, Cp_out).astype(jnp.bfloat16)
    bias2d = jnp.pad(bias, (0, Cp_out - Cout)).reshape(1, Cp_out)

    # NCHW -> NHWC, bf16, spatial pad (halo + round-up), channel pad.
    x_nhwc = jnp.transpose(x_nchw, (0, 2, 3, 1)).astype(jnp.bfloat16)
    x_pad = jnp.pad(x_nhwc, ((0, 0),
                             (pad, pad + (Ht - H)),
                             (pad, pad + (Wt - W)),
                             (0, Cp_in - Cin)))

    # VMEM budget: resident input block + weights + bias are "fixed"; the im2col
    # scratch and the double-buffered output tile scale with TH.
    fixed_bytes = (2 * Hp * Wpad * Cp_in * 2      # double-buffered bf16 input block
                   + 2 * K_tot * Cp_out * 2       # double-buffered bf16 weights
                   + 2 * Cp_out * 4)              # double-buffered f32 bias
    TH = _pick_row_tile(Ht, Wt, K_tot, Cp_out, N, fixed_bytes,
                        budget_bytes=24 * 1024 * 1024)
    n_row = Ht // TH
    # TODO(synk): add a W-tiled / halo-DMA fallback when fixed_bytes alone blows
    #             the v7x 64 MiB VMEM budget (very large images).

    kernel = _make_kernel(TH, Wt, KH, KW, pad, Cp_in, Cp_out, has_residual)

    out_flat = pl.pallas_call(
        kernel,
        out_shape=jax.ShapeDtypeStruct((N, Ht * Wt, Cp_out), jnp.bfloat16),
        grid_spec=pltpu.PrefetchScalarGridSpec(
            num_scalar_prefetch=0,
            grid=(N, n_row),
            in_specs=[
                # Full padded image per batch element; block index ignores r, so it
                # stays resident in VMEM across the row-tile axis (one DMA per n).
                pl.BlockSpec((None, Hp, Wpad, Cp_in), lambda n, r: (n, 0, 0, 0)),
                pl.BlockSpec((K_tot, Cp_out), lambda n, r: (0, 0)),
                pl.BlockSpec((1, Cp_out), lambda n, r: (0, 0)),
            ],
            out_specs=pl.BlockSpec((None, TH * Wt, Cp_out), lambda n, r: (n, r, 0)),
            scratch_shapes=[pltpu.VMEM((TH, Wt, K_tot), jnp.bfloat16)],
        ),
        compiler_params=pltpu.CompilerParams(
            # Megacore (v7x) shards the batch axis -> whole images per core; the
            # row-tile axis is a sequential loop over the resident padded image.
            dimension_semantics=("parallel", "arbitrary"),
            vmem_limit_bytes=32 * 1024 * 1024,
        ),
    )(x_pad, w_flat, bias2d)

    # Drop spatial/channel padding, back to NCHW/f32 to match the PyTorch module.
    # NOTE: if the surrounding network runs NHWC bf16, return out_flat (reshaped)
    # directly — this slice + cast + transpose is a pure extra HBM round trip.
    out = out_flat.reshape(N, Ht, Wt, Cp_out)[:, :H, :W, :Cout]
    return jnp.transpose(out.astype(jnp.float32), (0, 3, 1, 2))


def _reference(x_nchw, weight_oihw, gamma, beta, running_mean, running_var,
               *, eps=1e-5):
    """Pure-JAX reference (eval-mode BN, stride=1, pad=k//2).

    Matches the kernel's precision choices: bf16-rounded activations and
    (scale-folded) weights, f32 accumulation, f32 bias/ReLU/residual.
    """
    pad = weight_oihw.shape[-1] // 2
    scale = gamma / jnp.sqrt(running_var + eps)
    bias = beta - running_mean * scale
    w_folded = weight_oihw.astype(jnp.float32) * scale[:, None, None, None]
    w_bf = w_folded.astype(jnp.bfloat16).astype(jnp.float32)
    x_bf = x_nchw.astype(jnp.bfloat16).astype(jnp.float32)
    y = jax.lax.conv_general_dilated(
        x_bf, w_bf,
        window_strides=(1, 1),
        padding=((pad, pad), (pad, pad)),
        dimension_numbers=("NCHW", "OIHW", "NCHW"))
    y = y + bias[None, :, None, None]
    y = jnp.maximum(y, 0.0)
    if x_nchw.shape[1] == weight_oihw.shape[0]:
        y = y + x_bf
    return y


if __name__ == "__main__":
    key = jax.random.PRNGKey(0)
    k_x, k_w, k_g, k_b, k_m, k_v = jax.random.split(key, 6)

    N, C, H, W = 2, 4, 16, 16        # in_channels == out_channels, stride=1 -> residual
    KH = KW = 3

    x = jax.random.normal(k_x, (N, C, H, W), dtype=jnp.float32)
    weight = jax.random.normal(k_w, (C, C, KH, KW), dtype=jnp.float32) * 0.1
    gamma = 1.0 + 0.1 * jax.random.normal(k_g, (C,), dtype=jnp.float32)
    beta = 0.1 * jax.random.normal(k_b, (C,), dtype=jnp.float32)
    running_mean = 0.1 * jax.random.normal(k_m, (C,), dtype=jnp.float32)
    running_var = jnp.abs(jax.random.normal(k_v, (C,), dtype=jnp.float32)) + 0.5

    out = conv_bn_act(x, weight, gamma, beta, running_mean, running_var)
    out = jax.block_until_ready(out)

    ref = _reference(x, weight, gamma, beta, running_mean, running_var)
    assert out.shape == (N, C, H, W)
    # Kernel stores bf16 (halves HBM writeback); tolerance covers that rounding.
    assert jnp.allclose(out, ref, atol=3e-2, rtol=3e-2), (
        float(jnp.max(jnp.abs(out - ref))))

    print("KERNEL_OK")
</pallas_src>

<mosaic_0001>
module attributes {stable_mosaic.version = 11 : i64} {
  func.func @kernel(%arg0: i32, %arg1: i32, %arg2: memref<1x18x18x128xbf16, #tpu.memory_space<vmem>>, %arg3: memref<1152x128xbf16, #tpu.memory_space<vmem>>, %arg4: memref<1x128xf32, #tpu.memory_space<vmem>>, %arg5: memref<1x256x128xbf16, #tpu.memory_space<vmem>>, %arg6: memref<16x16x1152xbf16, #tpu.memory_space<vmem>>) attributes {dimension_semantics = [#tpu.dimension_semantics<parallel>, #tpu.dimension_semantics<arbitrary>], iteration_bounds = array<i64: 2, 1>, scalar_prefetch = 0 : i64, scratch_operands = 1 : i64, tpu.core_type = #tpu.core_type<tc>, window_params = [{transform_indices = @transform_0, window_bounds = array<i64: 1, 18, 18, 128>}, {pipeline_mode = #tpu.pipeline_mode<synchronous>, transform_indices = @transform_1, window_bounds = array<i64: 1152, 128>}, {pipeline_mode = #tpu.pipeline_mode<synchronous>, transform_indices = @transform_2, window_bounds = array<i64: 1, 128>}, {transform_indices = @transform_3, window_bounds = array<i64: 1, 256, 128>}]} {
    %c16_i32 = arith.constant 16 : i32
    %0 = arith.muli %arg1, %c16_i32 : i32
    %c0_i32 = arith.constant 0 : i32
    %1 = arith.addi %0, %c0_i32 : i32
    %c0 = arith.constant 0 : index
    %2 = arith.index_cast %1 : i32 to index
    %c0_0 = arith.constant 0 : index
    %c0_1 = arith.constant 0 : index
    %3 = vector.load %arg2[%c0, %2, %c0_0, %c0_1] : memref<1x18x18x128xbf16, #tpu.memory_space<vmem>>, vector<1x16x18x128xbf16>
    %4 = vector.shape_cast %3 : vector<1x16x18x128xbf16> to vector<16x18x128xbf16>
    %5 = vector.extract_strided_slice %4 {offsets = [0, 0, 0], sizes = [16, 16, 128], strides = [1, 1, 1]} : vector<16x18x128xbf16> to vector<16x16x128xbf16>
    %c0_2 = arith.constant 0 : index
    %c0_3 = arith.constant 0 : index
    %c0_4 = arith.constant 0 : index
    %6 = vector.load %arg6[%c0_2, %c0_3, %c0_4] : memref<16x16x1152xbf16, #tpu.memory_space<vmem>>, vector<16x16x128xbf16>
    tpu.vector_store %arg6[%c0_2, %c0_3, %c0_4], %5 {strides = array<i32>} : memref<16x16x1152xbf16, #tpu.memory_space<vmem>>, vector<16x16x128xbf16>,
    %7 = vector.extract_strided_slice %4 {offsets = [0, 1, 0], sizes = [16, 16, 128], strides = [1, 1, 1]} : vector<16x18x128xbf16> to vector<16x16x128xbf16>
    %c0_5 = arith.constant 0 : index
    %c0_6 = arith.constant 0 : index
    %c128 = arith.constant 128 : index
    %8 = vector.load %arg6[%c0_5, %c0_6, %c128] : memref<16x16x1152xbf16, #tpu.memory_space<vmem>>, vector<16x16x128xbf16>
    tpu.vector_store %arg6[%c0_5, %c0_6, %c128], %7 {strides = array<i32>} : memref<16x16x1152xbf16, #tpu.memory_space<vmem>>, vector<16x16x128xbf16>,
    %9 = vector.extract_strided_slice %4 {offsets = [0, 2, 0], sizes = [16, 16, 128], strides = [1, 1, 1]} : vector<16x18x128xbf16> to vector<16x16x128xbf16>
    %c0_7 = arith.constant 0 : index
    %c0_8 = arith.constant 0 : index
    %c256 = arith.constant 256 : index
    %10 = vector.load %arg6[%c0_7, %c0_8, %c256] : memref<16x16x1152xbf16, #tpu.memory_space<vmem>>, vector<16x16x128xbf16>
    tpu.vector_store %arg6[%c0_7, %c0_8, %c256], %9 {strides = array<i32>} : memref<16x16x1152xbf16, #tpu.memory_space<vmem>>, vector<16x16x128xbf16>,
    %c1_i32 = arith.constant 1 : i32
    %11 = arith.addi %0, %c1_i32 : i32
    %c0_9 = arith.constant 0 : index
    %12 = arith.index_cast %11 : i32 to index
    %c0_10 = arith.constant 0 : index
    %c0_11 = arith.constant 0 : index
    %13 = vector.load %arg2[%c0_9, %12, %c0_10, %c0_11] : memref<1x18x18x128xbf16, #tpu.memory_space<vmem>>, vector<1x16x18x128xbf16>
    %14 = vector.shape_cast %13 : vector<1x16x18x128xbf16> to vector<16x18x128xbf16>
    %15 = vector.extract_strided_slice %14 {offsets = [0, 0, 0], sizes = [16, 16, 128], strides = [1, 1, 1]} : vector<16x18x128xbf16> to vector<16x16x128xbf16>
    %c0_12 = arith.constant 0 : index
    %c0_13 = arith.constant 0 : index
    %c384 = arith.constant 384 : index
    %16 = vector.load %arg6[%c0_12, %c0_13, %c384] : memref<16x16x1152xbf16, #tpu.memory_space<vmem>>, vector<16x16x128xbf16>
    tpu.vector_store %arg6[%c0_12, %c0_13, %c384], %15 {strides = array<i32>} : memref<16x16x1152xbf16, #tpu.memory_space<vmem>>, vector<16x16x128xbf16>,
    %17 = vector.extract_strided_slice %14 {offsets = [0, 1, 0], sizes = [16, 16, 128], strides = [1, 1, 1]} : vector<16x18x128xbf16> to vector<16x16x128xbf16>
    %c0_14 = arith.constant 0 : index
    %c0_15 = arith.constant 0 : index
    %c512 = arith.constant 512 : index
    %18 = vector.load %arg6[%c0_14, %c0_15, %c512] : memref<16x16x1152xbf16, #tpu.memory_space<vmem>>, vector<16x16x128xbf16>
    tpu.vector_store %arg6[%c0_14, %c0_15, %c512], %17 {strides = array<i32>} : memref<16x16x1152xbf16, #tpu.memory_space<vmem>>, vector<16x16x128xbf16>,
    %19 = vector.extract_strided_slice %14 {offsets = [0, 2, 0], sizes = [16, 16, 128], strides = [1, 1, 1]} : vector<16x18x128xbf16> to vector<16x16x128xbf16>
    %c0_16 = arith.constant 0 : index
    %c0_17 = arith.constant 0 : index
    %c640 = arith.constant 640 : index
    %20 = vector.load %arg6[%c0_16, %c0_17, %c640] : memref<16x16x1152xbf16, #tpu.memory_space<vmem>>, vector<16x16x128xbf16>
    tpu.vector_store %arg6[%c0_16, %c0_17, %c640], %19 {strides = array<i32>} : memref<16x16x1152xbf16, #tpu.memory_space<vmem>>, vector<16x16x128xbf16>,
    %c2_i32 = arith.constant 2 : i32
    %21 = arith.addi %0, %c2_i32 : i32
    %c0_18 = arith.constant 0 : index
    %22 = arith.index_cast %21 : i32 to index
    %c0_19 = arith.constant 0 : index
    %c0_20 = arith.constant 0 : index
    %23 = vector.load %arg2[%c0_18, %22, %c0_19, %c0_20] : memref<1x18x18x128xbf16, #tpu.memory_space<vmem>>, vector<1x16x18x128xbf16>
    %24 = vector.shape_cast %23 : vector<1x16x18x128xbf16> to vector<16x18x128xbf16>
    %25 = vector.extract_strided_slice %24 {offsets = [0, 0, 0], sizes = [16, 16, 128], strides = [1, 1, 1]} : vector<16x18x128xbf16> to vector<16x16x128xbf16>
    %c0_21 = arith.constant 0 : index
    %c0_22 = arith.constant 0 : index
    %c768 = arith.constant 768 : index
    %26 = vector.load %arg6[%c0_21, %c0_22, %c768] : memref<16x16x1152xbf16, #tpu.memory_space<vmem>>, vector<16x16x128xbf16>
    tpu.vector_store %arg6[%c0_21, %c0_22, %c768], %25 {strides = array<i32>} : memref<16x16x1152xbf16, #tpu.memory_space<vmem>>, vector<16x16x128xbf16>,
    %27 = vector.extract_strided_slice %24 {offsets = [0, 1, 0], sizes = [16, 16, 128], strides = [1, 1, 1]} : vector<16x18x128xbf16> to vector<16x16x128xbf16>
    %c0_23 = arith.constant 0 : index
    %c0_24 = arith.constant 0 : index
    %c896 = arith.constant 896 : index
    %28 = vector.load %arg6[%c0_23, %c0_24, %c896] : memref<16x16x1152xbf16, #tpu.memory_space<vmem>>, vector<16x16x128xbf16>
    tpu.vector_store %arg6[%c0_23, %c0_24, %c896], %27 {strides = array<i32>} : memref<16x16x1152xbf16, #tpu.memory_space<vmem>>, vector<16x16x128xbf16>,
    %29 = vector.extract_strided_slice %24 {offsets = [0, 2, 0], sizes = [16, 16, 128], strides = [1, 1, 1]} : vector<16x18x128xbf16> to vector<16x16x128xbf16>
    %c0_25 = arith.constant 0 : index
    %c0_26 = arith.constant 0 : index
    %c1024 = arith.constant 1024 : index
    %30 = vector.load %arg6[%c0_25, %c0_26, %c1024] : memref<16x16x1152xbf16, #tpu.memory_space<vmem>>, vector<16x16x128xbf16>
    tpu.vector_store %arg6[%c0_25, %c0_26, %c1024], %29 {strides = array<i32>} : memref<16x16x1152xbf16, #tpu.memory_space<vmem>>, vector<16x16x128xbf16>,
    %c0_27 = arith.constant 0 : index
    %c0_28 = arith.constant 0 : index
    %c0_29 = arith.constant 0 : index
    %31 = vector.load %arg6[%c0_27, %c0_28, %c0_29] : memref<16x16x1152xbf16, #tpu.memory_space<vmem>>, vector<16x16x1152xbf16>
    %32 = vector.shape_cast %31 : vector<16x16x1152xbf16> to vector<256x1152xbf16>
    %c0_30 = arith.constant 0 : index
    %c0_31 = arith.constant 0 : index
    %33 = vector.load %arg3[%c0_30, %c0_31] : memref<1152x128xbf16, #tpu.memory_space<vmem>>, vector<1152x128xbf16>
    %cst = arith.constant dense<0.000000e+00> : vector<256x128xf32>
    %34 = tpu.matmul %32, %33, %cst {dimension_numbers = #tpu.dot_dimension_numbers<[1], [0], [0], [1], [0, 0, 1, 1], [], []>} : vector<256x1152xbf16>, vector<1152x128xbf16>, vector<256x128xf32> -> vector<256x128xf32>
    %c0_32 = arith.constant 0 : index
    %c0_33 = arith.constant 0 : index
    %35 = vector.load %arg4[%c0_32, %c0_33] : memref<1x128xf32, #tpu.memory_space<vmem>>, vector<1x128xf32>
    %36 = vector.broadcast %35 : vector<1x128xf32> to vector<256x128xf32>
    %37 = arith.addf %34, %36 : vector<256x128xf32>
    %cst_34 = arith.constant 0.000000e+00 : f32
    %38 = vector.broadcast %cst_34 : f32 to vector<256x128xf32>
    %39 = arith.maximumf %37, %38 : vector<256x128xf32>
    %c0_35 = arith.constant 0 : index
    %c0_36 = arith.constant 0 : index
    %c512_37 = arith.constant 512 : index
    %40 = vector.load %arg6[%c0_35, %c0_36, %c512_37] : memref<16x16x1152xbf16, #tpu.memory_space<vmem>>, vector<16x16x128xbf16>
    %41 = vector.shape_cast %40 : vector<16x16x128xbf16> to vector<256x128xbf16>
    %42 = arith.extf %41 : vector<256x128xbf16> to vector<256x128xf32>
    %43 = arith.addf %39, %42 : vector<256x128xf32>
    %44 = arith.truncf %43 : vector<256x128xf32> to vector<256x128xbf16>
    %c0_38 = arith.constant 0 : index
    %c0_39 = arith.constant 0 : index
    %c0_40 = arith.constant 0 : index
    %45 = vector.load %arg5[%c0_38, %c0_39, %c0_40] : memref<1x256x128xbf16, #tpu.memory_space<vmem>>, vector<1x256x128xbf16>
    %46 = vector.shape_cast %45 : vector<1x256x128xbf16> to vector<256x128xbf16>
    %47 = vector.shape_cast %44 : vector<256x128xbf16> to vector<1x256x128xbf16>
    tpu.vector_store %arg5[%c0_38, %c0_39, %c0_40], %47 {strides = array<i32>} : memref<1x256x128xbf16, #tpu.memory_space<vmem>>, vector<1x256x128xbf16>,
    return
  }
  func.func @transform_0(%arg0: i32, %arg1: i32) -> (i32, i32, i32, i32) {
    %c0_i32 = arith.constant 0 : i32
    %c0_i32_0 = arith.constant 0 : i32
    %c0_i32_1 = arith.constant 0 : i32
    %c0_i32_2 = arith.constant 0 : i32
    return %arg0, %c0_i32, %c0_i32_0, %c0_i32_1 : i32, i32, i32, i32
  }
  func.func @transform_1(%arg0: i32, %arg1: i32) -> (i32, i32) {
    %c0_i32 = arith.constant 0 : i32
    %c0_i32_0 = arith.constant 0 : i32
    %c0_i32_1 = arith.constant 0 : i32
    return %c0_i32, %c0_i32_0 : i32, i32
  }
  func.func @transform_2(%arg0: i32, %arg1: i32) -> (i32, i32) {
    %c0_i32 = arith.constant 0 : i32
    %c0_i32_0 = arith.constant 0 : i32
    %c0_i32_1 = arith.constant 0 : i32
    return %c0_i32, %c0_i32_0 : i32, i32
  }
  func.func @transform_3(%arg0: i32, %arg1: i32) -> (i32, i32, i32) {
    %c0_i32 = arith.constant 0 : i32
    %c0_i32_0 = arith.constant 0 : i32
    return %arg0, %arg1, %c0_i32 : i32, i32, i32
  }
}

</mosaic_0001>

<llo_original>
// kernel: tpu_custom_call.1
$region0: #{tpu_custom_call.1}
  #allocation0 [shape = 'u32[]', space=smem, size = 0x4, offset = 0x4, fixed_abs, tag = 'smem constant byte address 0x4 - core index']
  #allocation1 [shape = 'u32[144,128]{1,0:T(1,128)}', space=vmem, size = 0x12000, scoped, tag = 'internal scratch']
  #allocation2 [shape = 'bf16[16,16,1152]{2,1,0:T(16,128)(2,1)}', space=vmem, size = 0x90000, scoped, tag = 'scratch operand']
  %s0 = inlined_call_operand.vmem [shape: bf16[2,18,18,128], index: 0, kind: input, shape index: {}]
  %s1 = inlined_call_operand.vmem [shape: bf16[1152,128], index: 1, kind: input, shape index: {}]
  %s2 = inlined_call_operand.vmem [shape: f32[1,128], index: 2, kind: input, shape index: {}]
  %s3 = inlined_call_operand.hbm [shape: bf16[2,256,128], index: 3, kind: output, shape index: {}]
  %s4 = sld [smem:[#allocation0]]
  $region45: #{tpu_custom_call.1} parent=0
    _
  %s6 = ssub.s32 1, %s4
  %s7 = scalar_select 0, %s6, %s4
  $region1: #{tpu_custom_call.1} parent=0
    #allocation3 [shape = 'u8[131072]{0}', space=vmem, size = 0x20000, scoped, tag = 'output window, operand 0']
    #allocation4 [shape = 's32[2]{0}', space=sflag, size = 0x8, scoped, tag = 'scoped memory for tpu_custom_call.1']
    %8 = vsyncpa [#allocation4], 0
    %s9 = scalar_lea.sflag [#allocation4], 1
    %10 = vsyncpa %s9, 0
    loop: start=0, step=1, limit=4
    $region2: #{tpu_custom_call.1} parent=1 // loop_pre_header
      _
    $region3: #{tpu_custom_call.1} parent=1 // loop_header
      %s12 = sphi 0, %s16
      %p13 = scmp.ge.s32.totalorder %s12, 4
      %s19 = sphi 0, %s31
      %s20 = sphi 0, %s27
      %s21 = sphi 0, %s19
      %s22 = sphi 0, %s20
      %s23 = sphi 0, %s21
      %s24 = sphi 0, %s22
      %s34 = sphi 0, %s36
      %s37 = sphi 0, %s34
      %s38 = sphi 0, %s37
      %s54 = sphi 0, %s38
      %s58 = sphi 0, %s58
      %s60 = sphi 0, %s58
      %s61 = sphi 0, %s60
      %s75 = sphi 0, %s61
      %s79 = sphi 0, %s79
      %s81 = sphi 0, %s79
      %s82 = sphi 0, %s81
      %s96 = sphi 0, %s82
      %s104 = sphi 0, %s106
      %s107 = sphi 0, %s104
      %s108 = sphi 0, %s107
      %s124 = sphi 0, %s108
    $region4: #{tpu_custom_call.1} parent=1 // loop_header_branch
      %15 = sbr.rel (%p13) target = $region8
    $region5: #{tpu_custom_call.1} parent=1 // loop_body
      %s17 = ssub.s32 %s12, 1
      %s18 = ssub.s32 %s12, 2
      %s25 = sadd.s32 1, %s20
      %p26 = scmp.ge.s32.totalorder %s25, 1
      %s27 = scalar_select %p26, 0, %s25
      %s28 = sadd.s32 1, %s19
      %s29 = scalar_select %p26, %s28, %s19
      %p30 = scmp.ge.s32.totalorder %s29, 2
      %s31 = scalar_select %p30, 0, %s29
      %s32 = ssub.s32 %s19, %s31
      %p33 = scmp.eq.s32.totalorder %s32, 0
      %s35 = sadd.s32 %s34, 1
      %s36 = scalar_select %p33, %s34, %s35
      %p39 = pneg %p33
      %p40 = scmp.eq.s32.totalorder %s12, 1
      %p41 = por %p39, %p40
      %p42 = scmp.ne.s32.totalorder %s34, %s37
      %p43 = scmp.eq.s32.totalorder %s12, 0
      %p44 = por %p42, %p43
      %p45 = scmp.ne.s32.totalorder %s34, %s37
      %p46 = scmp.eq.s32.totalorder %s17, 1
      %p47 = por %p45, %p46
      %p48 = scmp.ne.s32.totalorder %s37, %s38
      %p49 = scmp.eq.s32.totalorder %s17, 0
      %p50 = por %p48, %p49
      %p51 = scmp.ne.s32.totalorder %s37, %s38
      %p52 = scmp.eq.s32.totalorder %s18, 1
      %p53 = por %p51, %p52
      %p55 = scmp.ne.s32.totalorder %s38, %s54
      %p56 = scmp.eq.s32.totalorder %s18, 0
      %p57 = por %p55, %p56
      %s59 = sadd.s32 %s58, 1
      %p62 = scmp.eq.s32.totalorder %s12, 1
      %p63 = scmp.ne.s32.totalorder %s58, %s60
      %p64 = scmp.eq.s32.totalorder %s12, 0
      %p65 = por %p63, %p64
      %p66 = scmp.ne.s32.totalorder %s58, %s60
      %p67 = scmp.eq.s32.totalorder %s17, 1
      %p68 = por %p66, %p67
      %p69 = scmp.ne.s32.totalorder %s60, %s61
      %p70 = scmp.eq.s32.totalorder %s17, 0
      %p71 = por %p69, %p70
      %p72 = scmp.ne.s32.totalorder %s60, %s61
      %p73 = scmp.eq.s32.totalorder %s18, 1
      %p74 = por %p72, %p73
      %p76 = scmp.ne.s32.totalorder %s61, %s75
      %p77 = scmp.eq.s32.totalorder %s18, 0
      %p78 = por %p76, %p77
      %s80 = sadd.s32 %s79, 1
      %p83 = scmp.eq.s32.totalorder %s12, 1
      %p84 = scmp.ne.s32.totalorder %s79, %s81
      %p85 = scmp.eq.s32.totalorder %s12, 0
      %p86 = por %p84, %p85
      %p87 = scmp.ne.s32.totalorder %s79, %s81
      %p88 = scmp.eq.s32.totalorder %s17, 1
      %p89 = por %p87, %p88
      %p90 = scmp.ne.s32.totalorder %s81, %s82
      %p91 = scmp.eq.s32.totalorder %s17, 0
      %p92 = por %p90, %p91
      %p93 = scmp.ne.s32.totalorder %s81, %s82
      %p94 = scmp.eq.s32.totalorder %s18, 1
      %p95 = por %p93, %p94
      %p97 = scmp.ne.s32.totalorder %s82, %s96
      %p98 = scmp.eq.s32.totalorder %s18, 0
      %p99 = por %p97, %p98
      %s100 = ssub.s32 %s19, %s31
      %s101 = ssub.s32 %s20, %s27
      %s102 = sor.u32 %s100, %s101
      %p103 = scmp.eq.s32.totalorder %s102, 0
      %s105 = sadd.s32 %s104, 1
      %s106 = scalar_select %p103, %s104, %s105
      %p109 = pneg %p103
      %p110 = scmp.eq.s32.totalorder %s12, 1
      %p111 = por %p109, %p110
      %p112 = scmp.ne.s32.totalorder %s104, %s107
      %p113 = scmp.eq.s32.totalorder %s12, 0
      %p114 = por %p112, %p113
      %p115 = scmp.ne.s32.totalorder %s104, %s107
      %p116 = scmp.eq.s32.totalorder %s17, 1
      %p117 = por %p115, %p116
      %p118 = scmp.ne.s32.totalorder %s107, %s108
      %p119 = scmp.eq.s32.totalorder %s17, 0
      %p120 = por %p118, %p119
      %p121 = scmp.ne.s32.totalorder %s107, %s108
      %p122 = scmp.eq.s32.totalorder %s18, 1
      %p123 = por %p121, %p122
      %p125 = scmp.ne.s32.totalorder %s108, %s124
      %p126 = scmp.eq.s32.totalorder %s18, 0
      %p127 = por %p125, %p126
      %p128 = scmp.le.s32.totalorder 1, %s12
      %p129 = scmp.lt.s32.totalorder %s12, 3
      %p130 = pnand %p128, %p129
      %p131 = pneg %p130
      // Predicated region
      $region9: #{tpu_custom_call.1} parent=5 // pred_check
        _
      $region10: #{tpu_custom_call.1} parent=5 // pred_check_branch
        %133 = sbr.rel (%p130) target = $region12
      $region11: #{tpu_custom_call.1} parent=5 // pred_region
        %s134 = ssub.s32 %s12, 1
        // Predicated region
        $region13: #{tpu_custom_call.1} parent=11 // pred_check
          %p135 = pneg %p71
        $region14: #{tpu_custom_call.1} parent=11 // pred_check_branch
          %137 = sbr.rel (%p135) target = $region16
        $region15: #{tpu_custom_call.1} parent=11 // pred_region
          _
        $region16: #{tpu_custom_call.1} parent=11 // pred_fallthru
          _
        // Predicated region
        $region17: #{tpu_custom_call.1} parent=11 // pred_check
          %p138 = pneg %p92
        $region18: #{tpu_custom_call.1} parent=11 // pred_check_branch
          %140 = sbr.rel (%p138) target = $region20
        $region19: #{tpu_custom_call.1} parent=11 // pred_region
          _
        $region20: #{tpu_custom_call.1} parent=11 // pred_fallthru
          _
      $region12: #{tpu_custom_call.1} parent=5 // pred_fallthru
        _
      %p141 = scmp.lt.s32.totalorder %s12, 2
      // Predicated region
      $region21: #{tpu_custom_call.1} parent=5 // pred_check
        %p142 = pneg %p141
      $region22: #{tpu_custom_call.1} parent=5 // pred_check_branch
        %144 = sbr.rel (%p142) target = $region24
      $region23: #{tpu_custom_call.1} parent=5 // pred_region
        // Predicated region
        $region25: #{tpu_custom_call.1} parent=23 // pred_check
          %p145 = pneg %p44
        $region26: #{tpu_custom_call.1} parent=23 // pred_check_branch
          %147 = sbr.rel (%p145) target = $region28
        $region27: #{tpu_custom_call.1} parent=23 // pred_region
          %p148 = scmp.lt.s32.totalorder %s19, 1
          %s149 = scalar_select %p148, %s19, 1
          %s150 = smul.addr %s149, 54
          %s151 = smul.addr %s150, 4
          %s152 = scalar_lea.vmem %s0, %s151
        $region28: #{tpu_custom_call.1} parent=23 // pred_fallthru
          _
      $region24: #{tpu_custom_call.1} parent=5 // pred_fallthru
        _
      %p153 = scmp.le.s32.totalorder 1, %s12
      %p154 = scmp.lt.s32.totalorder %s12, 3
      %p155 = pnand %p153, %p154
      %p156 = pneg %p155
      // Predicated region
      $region29: #{tpu_custom_call.1} parent=5 // pred_check
        _
      $region30: #{tpu_custom_call.1} parent=5 // pred_check_branch
        %158 = sbr.rel (%p155) target = $region32
      $region31: #{tpu_custom_call.1} parent=5 // pred_region
        %s159 = ssub.s32 %s12, 1
        %p160 = scmp.lt.s32.totalorder %s21, 1
        %s161 = scalar_select %p160, %s21, 1
        %s162 = smul.addr %s161, 54
        %s163 = smul.addr %s162, 4
        %s164 = scalar_lea.vmem %s0, %s163
        %p165 = pneg %p50
        %p166 = pneg %p47
        %p167 = pneg %p71
        %p168 = pneg %p68
        %p169 = pneg %p92
        %p170 = pneg %p89
        %p171 = pneg %p120
        %p172 = pneg %p117
        %s173 = sand.u32 %s107, 1
        %s174 = scalar_lea.sflag [#allocation4], %s173
        %s175 = sand.u32 %s107, 1
        %s176 = smul.addr %s175, 128
        %s177 = scalar_lea.vmem [#allocation3], %s176
        %p178 = scmp.lt.s32.totalorder %s21, 1
        %s179 = scalar_select %p178, %s21, 1
        %s180 = smul.addr %s179, 54
        %s181 = smul.addr %s180, 4
        %s182 = scalar_lea.vmem %s0, %s181
        %s183 = smul.u32 32, %s22
        %s185 = smul.u32 %s22, 16
        %s186 = smul.u32 %s185, 3
        %s187 = smul.addr %s186, 4
        %s188 = scalar_lea.vmem %s182, %s187
        %v189 = vld [vmem:[%s188] sm:$0xf]
        %v190 = vld [vmem:[%s188 + $0x4] sm:$0xf]
        %v191 = vld [vmem:[%s188 + $0x8] sm:$0x1]
        %v192 = vld [vmem:[%s188 + $0xc] sm:$0xf]
        %v193 = vld [vmem:[%s188 + $0x10] sm:$0xf]
        %v194 = vld [vmem:[%s188 + $0x14] sm:$0x1]
        %v195 = vld [vmem:[%s188 + $0x18] sm:$0xf]
        %v196 = vld [vmem:[%s188 + $0x1c] sm:$0xf]
        %v197 = vld [vmem:[%s188 + $0x20] sm:$0x1]
        %v198 = vld [vmem:[%s188 + $0x24] sm:$0xf]
        %v199 = vld [vmem:[%s188 + $0x28] sm:$0xf]
        %v200 = vld [vmem:[%s188 + $0x2c] sm:$0x1]
        %v201 = vld [vmem:[%s188 + $0x30] sm:$0xf]
        %v202 = vld [vmem:[%s188 + $0x34] sm:$0xf]
        %v203 = vld [vmem:[%s188 + $0x38] sm:$0x1]
        %v204 = vld [vmem:[%s188 + $0x3c] sm:$0xf]
        %v205 = vld [vmem:[%s188 + $0x40] sm:$0xf]
        %v206 = vld [vmem:[%s188 + $0x44] sm:$0x1]
        %v207 = vld [vmem:[%s188 + $0x48] sm:$0xf]
        %v208 = vld [vmem:[%s188 + $0x4c] sm:$0xf]
        %v209 = vld [vmem:[%s188 + $0x50] sm:$0x1]
        %v210 = vld [vmem:[%s188 + $0x54] sm:$0xf]
        %v211 = vld [vmem:[%s188 + $0x58] sm:$0xf]
        %v212 = vld [vmem:[%s188 + $0x5c] sm:$0x1]
        %v213 = vld [vmem:[%s188 + $0x60] sm:$0xf]
        %v214 = vld [vmem:[%s188 + $0x64] sm:$0xf]
        %v215 = vld [vmem:[%s188 + $0x68] sm:$0x1]
        %v216 = vld [vmem:[%s188 + $0x6c] sm:$0xf]
        %v217 = vld [vmem:[%s188 + $0x70] sm:$0xf]
        %v218 = vld [vmem:[%s188 + $0x74] sm:$0x1]
        %v219 = vld [vmem:[%s188 + $0x78] sm:$0xf]
        %v220 = vld [vmem:[%s188 + $0x7c] sm:$0xf]
        %v221 = vld [vmem:[%s188 + $0x80] sm:$0x1]
        %v222 = vld [vmem:[%s188 + $0x84] sm:$0xf]
        %v223 = vld [vmem:[%s188 + $0x88] sm:$0xf]
        %v224 = vld [vmem:[%s188 + $0x8c] sm:$0x1]
        %v225 = vld [vmem:[%s188 + $0x90] sm:$0xf]
        %v226 = vld [vmem:[%s188 + $0x94] sm:$0xf]
        %v227 = vld [vmem:[%s188 + $0x98] sm:$0x1]
        %v228 = vld [vmem:[%s188 + $0x9c] sm:$0xf]
        %v229 = vld [vmem:[%s188 + $0xa0] sm:$0xf]
        %v230 = vld [vmem:[%s188 + $0xa4] sm:$0x1]
        %v231 = vld [vmem:[%s188 + $0xa8] sm:$0xf]
        %v232 = vld [vmem:[%s188 + $0xac] sm:$0xf]
        %v233 = vld [vmem:[%s188 + $0xb0] sm:$0x1]
        %v234 = vld [vmem:[%s188 + $0xb4] sm:$0xf]
        %v235 = vld [vmem:[%s188 + $0xb8] sm:$0xf]
        %v236 = vld [vmem:[%s188 + $0xbc] sm:$0x1]
        %v269 = vunpack.c.l.b16 %v189
        %v270 = vunpack.c.l.b16 %v190
        %v271 = vunpack.c.l.b16 %v192
        %v272 = vunpack.c.l.b16 %v193
        %v273 = vunpack.c.l.b16 %v195
        %v274 = vunpack.c.l.b16 %v196
        %v275 = vunpack.c.l.b16 %v198
        %v276 = vunpack.c.l.b16 %v199
        %v277 = vunpack.c.l.b16 %v201
        %v278 = vunpack.c.l.b16 %v202
        %v279 = vunpack.c.l.b16 %v204
        %v280 = vunpack.c.l.b16 %v205
        %v281 = vunpack.c.l.b16 %v207
        %v282 = vunpack.c.l.b16 %v208
        %v283 = vunpack.c.l.b16 %v210
        %v284 = vunpack.c.l.b16 %v211
        %v285 = vunpack.c.l.b16 %v213
        %v286 = vunpack.c.l.b16 %v214
        %v287 = vunpack.c.l.b16 %v216
        %v288 = vunpack.c.l.b16 %v217
        %v289 = vunpack.c.l.b16 %v219
        %v290 = vunpack.c.l.b16 %v220
        %v291 = vunpack.c.l.b16 %v222
        %v292 = vunpack.c.l.b16 %v223
        %v293 = vunpack.c.l.b16 %v225
        %v294 = vunpack.c.l.b16 %v226
        %v295 = vunpack.c.l.b16 %v228
        %v296 = vunpack.c.l.b16 %v229
        %v297 = vunpack.c.l.b16 %v231
        %v298 = vunpack.c.l.b16 %v232
        %v299 = vunpack.c.l.b16 %v234
        %v300 = vunpack.c.l.b16 %v235
        %v301 = vpack.c.b16 %v270, %v269
        %v302 = vpack.c.b16 %v272, %v271
        %v303 = vpack.c.b16 %v274, %v273
        %v304 = vpack.c.b16 %v276, %v275
        %v305 = vpack.c.b16 %v278, %v277
        %v306 = vpack.c.b16 %v280, %v279
        %v307 = vpack.c.b16 %v282, %v281
        %v308 = vpack.c.b16 %v284, %v283
        %v309 = vpack.c.b16 %v286, %v285
        %v310 = vpack.c.b16 %v288, %v287
        %v311 = vpack.c.b16 %v290, %v289
        %v312 = vpack.c.b16 %v292, %v291
        %v313 = vpack.c.b16 %v294, %v293
        %v314 = vpack.c.b16 %v296, %v295
        %v315 = vpack.c.b16 %v298, %v297
        %v316 = vpack.c.b16 %v300, %v299
        %333 = vst [vmem:[#allocation2] sm:$0xff] %v301
        %334 = vst [vmem:[#allocation2 + $0x48] sm:$0xff] %v302
        %335 = vst [vmem:[#allocation2 + $0x90] sm:$0xff] %v303
        %336 = vst [vmem:[#allocation2 + $0xd8] sm:$0xff] %v304
        %337 = vst [vmem:[#allocation2 + $0x120] sm:$0xff] %v305
        %338 = vst [vmem:[#allocation2 + $0x168] sm:$0xff] %v306
        %339 = vst [vmem:[#allocation2 + $0x1b0] sm:$0xff] %v307
        %340 = vst [vmem:[#allocation2 + $0x1f8] sm:$0xff] %v308
        %341 = vst [vmem:[#allocation2 + $0x240] sm:$0xff] %v309
        %342 = vst [vmem:[#allocation2 + $0x288] sm:$0xff] %v310
        %343 = vst [vmem:[#allocation2 + $0x2d0] sm:$0xff] %v311
        %344 = vst [vmem:[#allocation2 + $0x318] sm:$0xff] %v312
        %345 = vst [vmem:[#allocation2 + $0x360] sm:$0xff] %v313
        %346 = vst [vmem:[#allocation2 + $0x3a8] sm:$0xff] %v314
        %347 = vst [vmem:[#allocation2 + $0x3f0] sm:$0xff] %v315
        %348 = vst [vmem:[#allocation2 + $0x438] sm:$0xff] %v316
        %v365 = vunpack.c.l.b16 %v191
        %v366 = vunpack.c.l.b16 %v194
        %v367 = vunpack.c.l.b16 %v197
        %v368 = vunpack.c.l.b16 %v200
        %v369 = vunpack.c.l.b16 %v203
        %v370 = vunpack.c.l.b16 %v206
        %v371 = vunpack.c.l.b16 %v209
        %v372 = vunpack.c.l.b16 %v212
        %v373 = vunpack.c.l.b16 %v215
        %v374 = vunpack.c.l.b16 %v218
        %v375 = vunpack.c.l.b16 %v221
        %v376 = vunpack.c.l.b16 %v224
        %v377 = vunpack.c.l.b16 %v227
        %v378 = vunpack.c.l.b16 %v230
        %v379 = vunpack.c.l.b16 %v233
        %v380 = vunpack.c.l.b16 %v236
        %v381 = vpack.c.b16 %v365, %v365
        %v382 = vpack.c.b16 %v366, %v366
        %v383 = vpack.c.b16 %v367, %v367
        %v384 = vpack.c.b16 %v368, %v368
        %v385 = vpack.c.b16 %v369, %v369
        %v386 = vpack.c.b16 %v370, %v370
        %v387 = vpack.c.b16 %v371, %v371
        %v388 = vpack.c.b16 %v372, %v372
        %v389 = vpack.c.b16 %v373, %v373
        %v390 = vpack.c.b16 %v374, %v374
        %v391 = vpack.c.b16 %v375, %v375
        %v392 = vpack.c.b16 %v376, %v376
        %v393 = vpack.c.b16 %v377, %v377
        %v394 = vpack.c.b16 %v378, %v378
        %v395 = vpack.c.b16 %v379, %v379
        %v396 = vpack.c.b16 %v380, %v380
        %vm397 = vsmask.f32 7424
        %v399 = vshrl.u32 %v301, 16
        %v401 = vshll.u32 %v301, 16
        %v403 = vrot.slane %v401, 1
        %v404 = vor.u32 %v399, %v403
        %v406 = vshll.u32 %v381, 16
        %v408 = vrot.slane %v406, 1
        %v409 = vsel %vm397, %v404, %v408
        %v411 = vshrl.u32 %v302, 16
        %v413 = vshll.u32 %v302, 16
        %v415 = vrot.slane %v413, 1
        %v416 = vor.u32 %v411, %v415
        %v418 = vshll.u32 %v382, 16
        %v420 = vrot.slane %v418, 1
        %v421 = vsel %vm397, %v416, %v420
        %v423 = vshrl.u32 %v303, 16
        %v425 = vshll.u32 %v303, 16
        %v427 = vrot.slane %v425, 1
        %v428 = vor.u32 %v423, %v427
        %v430 = vshll.u32 %v383, 16
        %v432 = vrot.slane %v430, 1
        %v433 = vsel %vm397, %v428, %v432
        %v435 = vshrl.u32 %v304, 16
        %v437 = vshll.u32 %v304, 16
        %v439 = vrot.slane %v437, 1
        %v440 = vor.u32 %v435, %v439
        %v442 = vshll.u32 %v384, 16
        %v444 = vrot.slane %v442, 1
        %v445 = vsel %vm397, %v440, %v444
        %v447 = vshrl.u32 %v305, 16
        %v449 = vshll.u32 %v305, 16
        %v451 = vrot.slane %v449, 1
        %v452 = vor.u32 %v447, %v451
        %v454 = vshll.u32 %v385, 16
        %v456 = vrot.slane %v454, 1
        %v457 = vsel %vm397, %v452, %v456
        %v459 = vshrl.u32 %v306, 16
        %v461 = vshll.u32 %v306, 16
        %v463 = vrot.slane %v461, 1
        %v464 = vor.u32 %v459, %v463
        %v466 = vshll.u32 %v386, 16
        %v468 = vrot.slane %v466, 1
        %v469 = vsel %vm397, %v464, %v468
        %v471 = vshrl.u32 %v307, 16
        %v473 = vshll.u32 %v307, 16
        %v475 = vrot.slane %v473, 1
        %v476 = vor.u32 %v471, %v475
        %v478 = vshll.u32 %v387, 16
        %v480 = vrot.slane %v478, 1
        %v481 = vsel %vm397, %v476, %v480
        %v483 = vshrl.u32 %v308, 16
        %v485 = vshll.u32 %v308, 16
        %v487 = vrot.slane %v485, 1
        %v488 = vor.u32 %v483, %v487
        %v490 = vshll.u32 %v388, 16
        %v492 = vrot.slane %v490, 1
        %v493 = vsel %vm397, %v488, %v492
        %v495 = vshrl.u32 %v309, 16
        %v497 = vshll.u32 %v309, 16
        %v499 = vrot.slane %v497, 1
        %v500 = vor.u32 %v495, %v499
        %v502 = vshll.u32 %v389, 16
        %v504 = vrot.slane %v502, 1
        %v505 = vsel %vm397, %v500, %v504
        %v507 = vshrl.u32 %v310, 16
        %v509 = vshll.u32 %v310, 16
        %v511 = vrot.slane %v509, 1
        %v512 = vor.u32 %v507, %v511
        %v514 = vshll.u32 %v390, 16
        %v516 = vrot.slane %v514, 1
        %v517 = vsel %vm397, %v512, %v516
        %v519 = vshrl.u32 %v311, 16
        %v521 = vshll.u32 %v311, 16
        %v523 = vrot.slane %v521, 1
        %v524 = vor.u32 %v519, %v523
        %v526 = vshll.u32 %v391, 16
        %v528 = vrot.slane %v526, 1
        %v529 = vsel %vm397, %v524, %v528
        %v531 = vshrl.u32 %v312, 16
        %v533 = vshll.u32 %v312, 16
        %v535 = vrot.slane %v533, 1
        %v536 = vor.u32 %v531, %v535
        %v538 = vshll.u32 %v392, 16
        %v540 = vrot.slane %v538, 1
        %v541 = vsel %vm397, %v536, %v540
        %v543 = vshrl.u32 %v313, 16
        %v545 = vshll.u32 %v313, 16
        %v547 = vrot.slane %v545, 1
        %v548 = vor.u32 %v543, %v547
        %v550 = vshll.u32 %v393, 16
        %v552 = vrot.slane %v550, 1
        %v553 = vsel %vm397, %v548, %v552
        %v555 = vshrl.u32 %v314, 16
        %v557 = vshll.u32 %v314, 16
        %v559 = vrot.slane %v557, 1
        %v560 = vor.u32 %v555, %v559
        %v562 = vshll.u32 %v394, 16
        %v564 = vrot.slane %v562, 1
        %v565 = vsel %vm397, %v560, %v564
        %v567 = vshrl.u32 %v315, 16
        %v569 = vshll.u32 %v315, 16
        %v571 = vrot.slane %v569, 1
        %v572 = vor.u32 %v567, %v571
        %v574 = vshll.u32 %v395, 16
        %v576 = vrot.slane %v574, 1
        %v577 = vsel %vm397, %v572, %v576
        %v579 = vshrl.u32 %v316, 16
        %v581 = vshll.u32 %v316, 16
        %v583 = vrot.slane %v581, 1
        %v584 = vor.u32 %v579, %v583
        %v586 = vshll.u32 %v396, 16
        %v588 = vrot.slane %v586, 1
        %v589 = vsel %vm397, %v584, %v588
        %606 = vst [vmem:[#allocation2 + $0x8] sm:$0xff] %v409
        %607 = vst [vmem:[#allocation2 + $0x50] sm:$0xff] %v421
        %608 = vst [vmem:[#allocation2 + $0x98] sm:$0xff] %v433
        %609 = vst [vmem:[#allocation2 + $0xe0] sm:$0xff] %v445
        %610 = vst [vmem:[#allocation2 + $0x128] sm:$0xff] %v457
        %611 = vst [vmem:[#allocation2 + $0x170] sm:$0xff] %v469
        %612 = vst [vmem:[#allocation2 + $0x1b8] sm:$0xff] %v481
        %613 = vst [vmem:[#allocation2 + $0x200] sm:$0xff] %v493
        %614 = vst [vmem:[#allocation2 + $0x248] sm:$0xff] %v505
        %615 = vst [vmem:[#allocation2 + $0x290] sm:$0xff] %v517
        %616 = vst [vmem:[#allocation2 + $0x2d8] sm:$0xff] %v529
        %617 = vst [vmem:[#allocation2 + $0x320] sm:$0xff] %v541
        %618 = vst [vmem:[#allocation2 + $0x368] sm:$0xff] %v553
        %619 = vst [vmem:[#allocation2 + $0x3b0] sm:$0xff] %v565
        %620 = vst [vmem:[#allocation2 + $0x3f8] sm:$0xff] %v577
        %621 = vst [vmem:[#allocation2 + $0x440] sm:$0xff] %v589
        %vm622 = vcmask 1046528
        %v623 = vrot.slane %v301, 1
        %v624 = vrot.slane %v381, 1
        %v625 = vsel %vm622, %v623, %v624
        %v626 = vrot.slane %v302, 1
        %v627 = vrot.slane %v382, 1
        %v628 = vsel %vm622, %v626, %v627
        %v629 = vrot.slane %v303, 1
        %v630 = vrot.slane %v383, 1
        %v631 = vsel %vm622, %v629, %v630
        %v632 = vrot.slane %v304, 1
        %v633 = vrot.slane %v384, 1
        %v634 = vsel %vm622, %v632, %v633
        %v635 = vrot.slane %v305, 1
        %v636 = vrot.slane %v385, 1
        %v637 = vsel %vm622, %v635, %v636
        %v638 = vrot.slane %v306, 1
        %v639 = vrot.slane %v386, 1
        %v640 = vsel %vm622, %v638, %v639
        %v641 = vrot.slane %v307, 1
        %v642 = vrot.slane %v387, 1
        %v643 = vsel %vm622, %v641, %v642
        %v644 = vrot.slane %v308, 1
        %v645 = vrot.slane %v388, 1
        %v646 = vsel %vm622, %v644, %v645
        %v647 = vrot.slane %v309, 1
        %v648 = vrot.slane %v389, 1
        %v649 = vsel %vm622, %v647, %v648
        %v650 = vrot.slane %v310, 1
        %v651 = vrot.slane %v390, 1
        %v652 = vsel %vm622, %v650, %v651
        %v653 = vrot.slane %v311, 1
        %v654 = vrot.slane %v391, 1
        %v655 = vsel %vm622, %v653, %v654
        %v656 = vrot.slane %v312, 1
        %v657 = vrot.slane %v392, 1
        %v658 = vsel %vm622, %v656, %v657
        %v659 = vrot.slane %v313, 1
        %v660 = vrot.slane %v393, 1
        %v661 = vsel %vm622, %v659, %v660
        %v662 = vrot.slane %v314, 1
        %v663 = vrot.slane %v394, 1
        %v664 = vsel %vm622, %v662, %v663
        %v665 = vrot.slane %v315, 1
        %v666 = vrot.slane %v395, 1
        %v667 = vsel %vm622, %v665, %v666
        %v668 = vrot.slane %v316, 1
        %v669 = vrot.slane %v396, 1
        %v670 = vsel %vm622, %v668, %v669
        %687 = vst [vmem:[#allocation2 + $0x10] sm:$0xff] %v625
        %688 = vst [vmem:[#allocation2 + $0x58] sm:$0xff] %v628
        %689 = vst [vmem:[#allocation2 + $0xa0] sm:$0xff] %v631
        %690 = vst [vmem:[#allocation2 + $0xe8] sm:$0xff] %v634
        %691 = vst [vmem:[#allocation2 + $0x130] sm:$0xff] %v637
        %692 = vst [vmem:[#allocation2 + $0x178] sm:$0xff] %v640
        %693 = vst [vmem:[#allocation2 + $0x1c0] sm:$0xff] %v643
        %694 = vst [vmem:[#allocation2 + $0x208] sm:$0xff] %v646
        %695 = vst [vmem:[#allocation2 + $0x250] sm:$0xff] %v649
        %696 = vst [vmem:[#allocation2 + $0x298] sm:$0xff] %v652
        %697 = vst [vmem:[#allocation2 + $0x2e0] sm:$0xff] %v655
        %698 = vst [vmem:[#allocation2 + $0x328] sm:$0xff] %v658
        %699 = vst [vmem:[#allocation2 + $0x370] sm:$0xff] %v661
        %700 = vst [vmem:[#allocation2 + $0x3b8] sm:$0xff] %v664
        %701 = vst [vmem:[#allocation2 + $0x400] sm:$0xff] %v667
        %702 = vst [vmem:[#allocation2 + $0x448] sm:$0xff] %v670
        %s703 = sadd.s32 %s185, 1
        %s704 = smul.u32 %s703, 3
        %s705 = smul.addr %s704, 4
        %s706 = scalar_lea.vmem %s182, %s705
        %v707 = vld [vmem:[%s706] sm:$0xf]
        %v708 = vld [vmem:[%s706 + $0x4] sm:$0xf]
        %v709 = vld [vmem:[%s706 + $0x8] sm:$0x1]
        %v710 = vld [vmem:[%s706 + $0xc] sm:$0xf]
        %v711 = vld [vmem:[%s706 + $0x10] sm:$0xf]
        %v712 = vld [vmem:[%s706 + $0x14] sm:$0x1]
        %v713 = vld [vmem:[%s706 + $0x18] sm:$0xf]
        %v714 = vld [vmem:[%s706 + $0x1c] sm:$0xf]
        %v715 = vld [vmem:[%s706 + $0x20] sm:$0x1]
        %v716 = vld [vmem:[%s706 + $0x24] sm:$0xf]
        %v717 = vld [vmem:[%s706 + $0x28] sm:$0xf]
        %v718 = vld [vmem:[%s706 + $0x2c] sm:$0x1]
        %v719 = vld [vmem:[%s706 + $0x30] sm:$0xf]
        %v720 = vld [vmem:[%s706 + $0x34] sm:$0xf]
        %v721 = vld [vmem:[%s706 + $0x38] sm:$0x1]
        %v722 = vld [vmem:[%s706 + $0x3c] sm:$0xf]
        %v723 = vld [vmem:[%s706 + $0x40] sm:$0xf]
        %v724 = vld [vmem:[%s706 + $0x44] sm:$0x1]
        %v725 = vld [vmem:[%s706 + $0x48] sm:$0xf]
        %v726 = vld [vmem:[%s706 + $0x4c] sm:$0xf]
        %v727 = vld [vmem:[%s706 + $0x50] sm:$0x1]
        %v728 = vld [vmem:[%s706 + $0x54] sm:$0xf]
        %v729 = vld [vmem:[%s706 + $0x58] sm:$0xf]
        %v730 = vld [vmem:[%s706 + $0x5c] sm:$0x1]
        %v731 = vld [vmem:[%s706 + $0x60] sm:$0xf]
        %v732 = vld [vmem:[%s706 + $0x64] sm:$0xf]
        %v733 = vld [vmem:[%s706 + $0x68] sm:$0x1]
        %v734 = vld [vmem:[%s706 + $0x6c] sm:$0xf]
        %v735 = vld [vmem:[%s706 + $0x70] sm:$0xf]
        %v736 = vld [vmem:[%s706 + $0x74] sm:$0x1]
        %v737 = vld [vmem:[%s706 + $0x78] sm:$0xf]
        %v738 = vld [vmem:[%s706 + $0x7c] sm:$0xf]
        %v739 = vld [vmem:[%s706 + $0x80] sm:$0x1]
        %v740 = vld [vmem:[%s706 + $0x84] sm:$0xf]
        %v741 = vld [vmem:[%s706 + $0x88] sm:$0xf]
        %v742 = vld [vmem:[%s706 + $0x8c] sm:$0x1]
        %v743 = vld [vmem:[%s706 + $0x90] sm:$0xf]
        %v744 = vld [vmem:[%s706 + $0x94] sm:$0xf]
        %v745 = vld [vmem:[%s706 + $0x98] sm:$0x1]
        %v746 = vld [vmem:[%s706 + $0x9c] sm:$0xf]
        %v747 = vld [vmem:[%s706 + $0xa0] sm:$0xf]
        %v748 = vld [vmem:[%s706 + $0xa4] sm:$0x1]
        %v749 = vld [vmem:[%s706 + $0xa8] sm:$0xf]
        %v750 = vld [vmem:[%s706 + $0xac] sm:$0xf]
        %v751 = vld [vmem:[%s706 + $0xb0] sm:$0x1]
        %v752 = vld [vmem:[%s706 + $0xb4] sm:$0xf]
        %v753 = vld [vmem:[%s706 + $0xb8] sm:$0xf]
        %v754 = vld [vmem:[%s706 + $0xbc] sm:$0x1]
        %v787 = vunpack.c.l.b16 %v707
        %v788 = vunpack.c.l.b16 %v708
        %v789 = vunpack.c.l.b16 %v710
        %v790 = vunpack.c.l.b16 %v711
        %v791 = vunpack.c.l.b16 %v713
        %v792 = vunpack.c.l.b16 %v714
        %v793 = vunpack.c.l.b16 %v716
        %v794 = vunpack.c.l.b16 %v717
        %v795 = vunpack.c.l.b16 %v719
        %v796 = vunpack.c.l.b16 %v720
        %v797 = vunpack.c.l.b16 %v722
        %v798 = vunpack.c.l.b16 %v723
        %v799 = vunpack.c.l.b16 %v725
        %v800 = vunpack.c.l.b16 %v726
        %v801 = vunpack.c.l.b16 %v728
        %v802 = vunpack.c.l.b16 %v729
        %v803 = vunpack.c.l.b16 %v731
        %v804 = vunpack.c.l.b16 %v732
        %v805 = vunpack.c.l.b16 %v734
        %v806 = vunpack.c.l.b16 %v735
        %v807 = vunpack.c.l.b16 %v737
        %v808 = vunpack.c.l.b16 %v738
        %v809 = vunpack.c.l.b16 %v740
        %v810 = vunpack.c.l.b16 %v741
        %v811 = vunpack.c.l.b16 %v743
        %v812 = vunpack.c.l.b16 %v744
        %v813 = vunpack.c.l.b16 %v746
        %v814 = vunpack.c.l.b16 %v747
        %v815 = vunpack.c.l.b16 %v749
        %v816 = vunpack.c.l.b16 %v750
        %v817 = vunpack.c.l.b16 %v752
        %v818 = vunpack.c.l.b16 %v753
        %v819 = vpack.c.b16 %v788, %v787
        %v820 = vpack.c.b16 %v790, %v789
        %v821 = vpack.c.b16 %v792, %v791
        %v822 = vpack.c.b16 %v794, %v793
        %v823 = vpack.c.b16 %v796, %v795
        %v824 = vpack.c.b16 %v798, %v797
        %v825 = vpack.c.b16 %v800, %v799
        %v826 = vpack.c.b16 %v802, %v801
        %v827 = vpack.c.b16 %v804, %v803
        %v828 = vpack.c.b16 %v806, %v805
        %v829 = vpack.c.b16 %v808, %v807
        %v830 = vpack.c.b16 %v810, %v809
        %v831 = vpack.c.b16 %v812, %v811
        %v832 = vpack.c.b16 %v814, %v813
        %v833 = vpack.c.b16 %v816, %v815
        %v834 = vpack.c.b16 %v818, %v817
        %851 = vst [vmem:[#allocation2 + $0x18] sm:$0xff] %v819
        %852 = vst [vmem:[#allocation2 + $0x60] sm:$0xff] %v820
        %853 = vst [vmem:[#allocation2 + $0xa8] sm:$0xff] %v821
        %854 = vst [vmem:[#allocation2 + $0xf0] sm:$0xff] %v822
        %855 = vst [vmem:[#allocation2 + $0x138] sm:$0xff] %v823
        %856 = vst [vmem:[#allocation2 + $0x180] sm:$0xff] %v824
        %857 = vst [vmem:[#allocation2 + $0x1c8] sm:$0xff] %v825
        %858 = vst [vmem:[#allocation2 + $0x210] sm:$0xff] %v826
        %859 = vst [vmem:[#allocation2 + $0x258] sm:$0xff] %v827
        %860 = vst [vmem:[#allocation2 + $0x2a0] sm:$0xff] %v828
        %861 = vst [vmem:[#allocation2 + $0x2e8] sm:$0xff] %v829
        %862 = vst [vmem:[#allocation2 + $0x330] sm:$0xff] %v830
        %863 = vst [vmem:[#allocation2 + $0x378] sm:$0xff] %v831
        %864 = vst [vmem:[#allocation2 + $0x3c0] sm:$0xff] %v832
        %865 = vst [vmem:[#allocation2 + $0x408] sm:$0xff] %v833
        %866 = vst [vmem:[#allocation2 + $0x450] sm:$0xff] %v834
        %v883 = vunpack.c.l.b16 %v709
        %v884 = vunpack.c.l.b16 %v712
        %v885 = vunpack.c.l.b16 %v715
        %v886 = vunpack.c.l.b16 %v718
        %v887 = vunpack.c.l.b16 %v721
        %v888 = vunpack.c.l.b16 %v724
        %v889 = vunpack.c.l.b16 %v727
        %v890 = vunpack.c.l.b16 %v730
        %v891 = vunpack.c.l.b16 %v733
        %v892 = vunpack.c.l.b16 %v736
        %v893 = vunpack.c.l.b16 %v739
        %v894 = vunpack.c.l.b16 %v742
        %v895 = vunpack.c.l.b16 %v745
        %v896 = vunpack.c.l.b16 %v748
        %v897 = vunpack.c.l.b16 %v751
        %v898 = vunpack.c.l.b16 %v754
        %v899 = vpack.c.b16 %v883, %v883
        %v900 = vpack.c.b16 %v884, %v884
        %v901 = vpack.c.b16 %v885, %v885
        %v902 = vpack.c.b16 %v886, %v886
        %v903 = vpack.c.b16 %v887, %v887
        %v904 = vpack.c.b16 %v888, %v888
        %v905 = vpack.c.b16 %v889, %v889
        %v906 = vpack.c.b16 %v890, %v890
        %v907 = vpack.c.b16 %v891, %v891
        %v908 = vpack.c.b16 %v892, %v892
        %v909 = vpack.c.b16 %v893, %v893
        %v910 = vpack.c.b16 %v894, %v894
        %v911 = vpack.c.b16 %v895, %v895
        %v912 = vpack.c.b16 %v896, %v896
        %v913 = vpack.c.b16 %v897, %v897
        %v914 = vpack.c.b16 %v898, %v898
        %v916 = vshrl.u32 %v819, 16
        %v918 = vshll.u32 %v819, 16
        %v920 = vrot.slane %v918, 1
        %v921 = vor.u32 %v916, %v920
        %v923 = vshll.u32 %v899, 16
        %v925 = vrot.slane %v923, 1
        %v926 = vsel %vm397, %v921, %v925
        %v928 = vshrl.u32 %v820, 16
        %v930 = vshll.u32 %v820, 16
        %v932 = vrot.slane %v930, 1
        %v933 = vor.u32 %v928, %v932
        %v935 = vshll.u32 %v900, 16
        %v937 = vrot.slane %v935, 1
        %v938 = vsel %vm397, %v933, %v937
        %v940 = vshrl.u32 %v821, 16
        %v942 = vshll.u32 %v821, 16
        %v944 = vrot.slane %v942, 1
        %v945 = vor.u32 %v940, %v944
        %v947 = vshll.u32 %v901, 16
        %v949 = vrot.slane %v947, 1
        %v950 = vsel %vm397, %v945, %v949
        %v952 = vshrl.u32 %v822, 16
        %v954 = vshll.u32 %v822, 16
        %v956 = vrot.slane %v954, 1
        %v957 = vor.u32 %v952, %v956
        %v959 = vshll.u32 %v902, 16
        %v961 = vrot.slane %v959, 1
        %v962 = vsel %vm397, %v957, %v961
        %v964 = vshrl.u32 %v823, 16
        %v966 = vshll.u32 %v823, 16
        %v968 = vrot.slane %v966, 1
        %v969 = vor.u32 %v964, %v968
        %v971 = vshll.u32 %v903, 16
        %v973 = vrot.slane %v971, 1
        %v974 = vsel %vm397, %v969, %v973
        %v976 = vshrl.u32 %v824, 16
        %v978 = vshll.u32 %v824, 16
        %v980 = vrot.slane %v978, 1
        %v981 = vor.u32 %v976, %v980
        %v983 = vshll.u32 %v904, 16
        %v985 = vrot.slane %v983, 1
        %v986 = vsel %vm397, %v981, %v985
        %v988 = vshrl.u32 %v825, 16
        %v990 = vshll.u32 %v825, 16
        %v992 = vrot.slane %v990, 1
        %v993 = vor.u32 %v988, %v992
        %v995 = vshll.u32 %v905, 16
        %v997 = vrot.slane %v995, 1
        %v998 = vsel %vm397, %v993, %v997
        %v1000 = vshrl.u32 %v826, 16
        %v1002 = vshll.u32 %v826, 16
        %v1004 = vrot.slane %v1002, 1
        %v1005 = vor.u32 %v1000, %v1004
        %v1007 = vshll.u32 %v906, 16
        %v1009 = vrot.slane %v1007, 1
        %v1010 = vsel %vm397, %v1005, %v1009
        %v1012 = vshrl.u32 %v827, 16
        %v1014 = vshll.u32 %v827, 16
        %v1016 = vrot.slane %v1014, 1
        %v1017 = vor.u32 %v1012, %v1016
        %v1019 = vshll.u32 %v907, 16
        %v1021 = vrot.slane %v1019, 1
        %v1022 = vsel %vm397, %v1017, %v1021
        %v1024 = vshrl.u32 %v828, 16
        %v1026 = vshll.u32 %v828, 16
        %v1028 = vrot.slane %v1026, 1
        %v1029 = vor.u32 %v1024, %v1028
        %v1031 = vshll.u32 %v908, 16
        %v1033 = vrot.slane %v1031, 1
        %v1034 = vsel %vm397, %v1029, %v1033
        %v1036 = vshrl.u32 %v829, 16
        %v1038 = vshll.u32 %v829, 16
        %v1040 = vrot.slane %v1038, 1
        %v1041 = vor.u32 %v1036, %v1040
        %v1043 = vshll.u32 %v909, 16
        %v1045 = vrot.slane %v1043, 1
        %v1046 = vsel %vm397, %v1041, %v1045
        %v1048 = vshrl.u32 %v830, 16
        %v1050 = vshll.u32 %v830, 16
        %v1052 = vrot.slane %v1050, 1
        %v1053 = vor.u32 %v1048, %v1052
        %v1055 = vshll.u32 %v910, 16
        %v1057 = vrot.slane %v1055, 1
        %v1058 = vsel %vm397, %v1053, %v1057
        %v1060 = vshrl.u32 %v831, 16
        %v1062 = vshll.u32 %v831, 16
        %v1064 = vrot.slane %v1062, 1
        %v1065 = vor.u32 %v1060, %v1064
        %v1067 = vshll.u32 %v911, 16
        %v1069 = vrot.slane %v1067, 1
        %v1070 = vsel %vm397, %v1065, %v1069
        %v1072 = vshrl.u32 %v832, 16
        %v1074 = vshll.u32 %v832, 16
        %v1076 = vrot.slane %v1074, 1
        %v1077 = vor.u32 %v1072, %v1076
        %v1079 = vshll.u32 %v912, 16
        %v1081 = vrot.slane %v1079, 1
        %v1082 = vsel %vm397, %v1077, %v1081
        %v1084 = vshrl.u32 %v833, 16
        %v1086 = vshll.u32 %v833, 16
        %v1088 = vrot.slane %v1086, 1
        %v1089 = vor.u32 %v1084, %v1088
        %v1091 = vshll.u32 %v913, 16
        %v1093 = vrot.slane %v1091, 1
        %v1094 = vsel %vm397, %v1089, %v1093
        %v1096 = vshrl.u32 %v834, 16
        %v1098 = vshll.u32 %v834, 16
        %v1100 = vrot.slane %v1098, 1
        %v1101 = vor.u32 %v1096, %v1100
        %v1103 = vshll.u32 %v914, 16
        %v1105 = vrot.slane %v1103, 1
        %v1106 = vsel %vm397, %v1101, %v1105
        %1123 = vst [vmem:[#allocation2 + $0x20] sm:$0xff] %v926
        %1124 = vst [vmem:[#allocation2 + $0x68] sm:$0xff] %v938
        %1125 = vst [vmem:[#allocation2 + $0xb0] sm:$0xff] %v950
        %1126 = vst [vmem:[#allocation2 + $0xf8] sm:$0xff] %v962
        %1127 = vst [vmem:[#allocation2 + $0x140] sm:$0xff] %v974
        %1128 = vst [vmem:[#allocation2 + $0x188] sm:$0xff] %v986
        %1129 = vst [vmem:[#allocation2 + $0x1d0] sm:$0xff] %v998
        %1130 = vst [vmem:[#allocation2 + $0x218] sm:$0xff] %v1010
        %1131 = vst [vmem:[#allocation2 + $0x260] sm:$0xff] %v1022
        %1132 = vst [vmem:[#allocation2 + $0x2a8] sm:$0xff] %v1034
        %1133 = vst [vmem:[#allocation2 + $0x2f0] sm:$0xff] %v1046
        %1134 = vst [vmem:[#allocation2 + $0x338] sm:$0xff] %v1058
        %1135 = vst [vmem:[#allocation2 + $0x380] sm:$0xff] %v1070
        %1136 = vst [vmem:[#allocation2 + $0x3c8] sm:$0xff] %v1082
        %1137 = vst [vmem:[#allocation2 + $0x410] sm:$0xff] %v1094
        %1138 = vst [vmem:[#allocation2 + $0x458] sm:$0xff] %v1106
        %v1139 = vrot.slane %v819, 1
        %v1140 = vrot.slane %v899, 1
        %v1141 = vsel %vm622, %v1139, %v1140
        %v1142 = vrot.slane %v820, 1
        %v1143 = vrot.slane %v900, 1
        %v1144 = vsel %vm622, %v1142, %v1143
        %v1145 = vrot.slane %v821, 1
        %v1146 = vrot.slane %v901, 1
        %v1147 = vsel %vm622, %v1145, %v1146
        %v1148 = vrot.slane %v822, 1
        %v1149 = vrot.slane %v902, 1
        %v1150 = vsel %vm622, %v1148, %v1149
        %v1151 = vrot.slane %v823, 1
        %v1152 = vrot.slane %v903, 1
        %v1153 = vsel %vm622, %v1151, %v1152
        %v1154 = vrot.slane %v824, 1
        %v1155 = vrot.slane %v904, 1
        %v1156 = vsel %vm622, %v1154, %v1155
        %v1157 = vrot.slane %v825, 1
        %v1158 = vrot.slane %v905, 1
        %v1159 = vsel %vm622, %v1157, %v1158
        %v1160 = vrot.slane %v826, 1
        %v1161 = vrot.slane %v906, 1
        %v1162 = vsel %vm622, %v1160, %v1161
        %v1163 = vrot.slane %v827, 1
        %v1164 = vrot.slane %v907, 1
        %v1165 = vsel %vm622, %v1163, %v1164
        %v1166 = vrot.slane %v828, 1
        %v1167 = vrot.slane %v908, 1
        %v1168 = vsel %vm622, %v1166, %v1167
        %v1169 = vrot.slane %v829, 1
        %v1170 = vrot.slane %v909, 1
        %v1171 = vsel %vm622, %v1169, %v1170
        %v1172 = vrot.slane %v830, 1
        %v1173 = vrot.slane %v910, 1
        %v1174 = vsel %vm622, %v1172, %v1173
        %v1175 = vrot.slane %v831, 1
        %v1176 = vrot.slane %v911, 1
        %v1177 = vsel %vm622, %v1175, %v1176
        %v1178 = vrot.slane %v832, 1
        %v1179 = vrot.slane %v912, 1
        %v1180 = vsel %vm622, %v1178, %v1179
        %v1181 = vrot.slane %v833, 1
        %v1182 = vrot.slane %v913, 1
        %v1183 = vsel %vm622, %v1181, %v1182
        %v1184 = vrot.slane %v834, 1
        %v1185 = vrot.slane %v914, 1
        %v1186 = vsel %vm622, %v1184, %v1185
        %1203 = vst [vmem:[#allocation2 + $0x28] sm:$0xff] %v1141
        %1204 = vst [vmem:[#allocation2 + $0x70] sm:$0xff] %v1144
        %1205 = vst [vmem:[#allocation2 + $0xb8] sm:$0xff] %v1147
        %1206 = vst [vmem:[#allocation2 + $0x100] sm:$0xff] %v1150
        %1207 = vst [vmem:[#allocation2 + $0x148] sm:$0xff] %v1153
        %1208 = vst [vmem:[#allocation2 + $0x190] sm:$0xff] %v1156
        %1209 = vst [vmem:[#allocation2 + $0x1d8] sm:$0xff] %v1159
        %1210 = vst [vmem:[#allocation2 + $0x220] sm:$0xff] %v1162
        %1211 = vst [vmem:[#allocation2 + $0x268] sm:$0xff] %v1165
        %1212 = vst [vmem:[#allocation2 + $0x2b0] sm:$0xff] %v1168
        %1213 = vst [vmem:[#allocation2 + $0x2f8] sm:$0xff] %v1171
        %1214 = vst [vmem:[#allocation2 + $0x340] sm:$0xff] %v1174
        %1215 = vst [vmem:[#allocation2 + $0x388] sm:$0xff] %v1177
        %1216 = vst [vmem:[#allocation2 + $0x3d0] sm:$0xff] %v1180
        %1217 = vst [vmem:[#allocation2 + $0x418] sm:$0xff] %v1183
        %1218 = vst [vmem:[#allocation2 + $0x460] sm:$0xff] %v1186
        %s1219 = sadd.s32 %s185, 2
        %s1220 = smul.u32 %s1219, 3
        %s1221 = smul.addr %s1220, 4
        %s1222 = scalar_lea.vmem %s182, %s1221
        %v1223 = vld [vmem:[%s1222] sm:$0xf]
        %v1224 = vld [vmem:[%s1222 + $0x4] sm:$0xf]
        %v1225 = vld [vmem:[%s1222 + $0x8] sm:$0x1]
        %v1226 = vld [vmem:[%s1222 + $0xc] sm:$0xf]
        %v1227 = vld [vmem:[%s1222 + $0x10] sm:$0xf]
        %v1228 = vld [vmem:[%s1222 + $0x14] sm:$0x1]
        %v1229 = vld [vmem:[%s1222 + $0x18] sm:$0xf]
        %v1230 = vld [vmem:[%s1222 + $0x1c] sm:$0xf]
        %v1231 = vld [vmem:[%s1222 + $0x20] sm:$0x1]
        %v1232 = vld [vmem:[%s1222 + $0x24] sm:$0xf]
        %v1233 = vld [vmem:[%s1222 + $0x28] sm:$0xf]
        %v1234 = vld [vmem:[%s1222 + $0x2c] sm:$0x1]
        %v1235 = vld [vmem:[%s1222 + $0x30] sm:$0xf]
        %v1236 = vld [vmem:[%s1222 + $0x34] sm:$0xf]
        %v1237 = vld [vmem:[%s1222 + $0x38] sm:$0x1]
        %v1238 = vld [vmem:[%s1222 + $0x3c] sm:$0xf]
        %v1239 = vld [vmem:[%s1222 + $0x40] sm:$0xf]
        %v1240 = vld [vmem:[%s1222 + $0x44] sm:$0x1]
        %v1241 = vld [vmem:[%s1222 + $0x48] sm:$0xf]
        %v1242 = vld [vmem:[%s1222 + $0x4c] sm:$0xf]
        %v1243 = vld [vmem:[%s1222 + $0x50] sm:$0x1]
        %v1244 = vld [vmem:[%s1222 + $0x54] sm:$0xf]
        %v1245 = vld [vmem:[%s1222 + $0x58] sm:$0xf]
        %v1246 = vld [vmem:[%s1222 + $0x5c] sm:$0x1]
        %v1247 = vld [vmem:[%s1222 + $0x60] sm:$0xf]
        %v1248 = vld [vmem:[%s1222 + $0x64] sm:$0xf]
        %v1249 = vld [vmem:[%s1222 + $0x68] sm:$0x1]
        %v1250 = vld [vmem:[%s1222 + $0x6c] sm:$0xf]
        %v1251 = vld [vmem:[%s1222 + $0x70] sm:$0xf]
        %v1252 = vld [vmem:[%s1222 + $0x74] sm:$0x1]
        %v1253 = vld [vmem:[%s1222 + $0x78] sm:$0xf]
        %v1254 = vld [vmem:[%s1222 + $0x7c] sm:$0xf]
        %v1255 = vld [vmem:[%s1222 + $0x80] sm:$0x1]
        %v1256 = vld [vmem:[%s1222 + $0x84] sm:$0xf]
        %v1257 = vld [vmem:[%s1222 + $0x88] sm:$0xf]
        %v1258 = vld [vmem:[%s1222 + $0x8c] sm:$0x1]
        %v1259 = vld [vmem:[%s1222 + $0x90] sm:$0xf]
        %v1260 = vld [vmem:[%s1222 + $0x94] sm:$0xf]
        %v1261 = vld [vmem:[%s1222 + $0x98] sm:$0x1]
        %v1262 = vld [vmem:[%s1222 + $0x9c] sm:$0xf]
        %v1263 = vld [vmem:[%s1222 + $0xa0] sm:$0xf]
        %v1264 = vld [vmem:[%s1222 + $0xa4] sm:$0x1]
        %v1265 = vld [vmem:[%s1222 + $0xa8] sm:$0xf]
        %v1266 = vld [vmem:[%s1222 + $0xac] sm:$0xf]
        %v1267 = vld [vmem:[%s1222 + $0xb0] sm:$0x1]
        %v1268 = vld [vmem:[%s1222 + $0xb4] sm:$0xf]
        %v1269 = vld [vmem:[%s1222 + $0xb8] sm:$0xf]
        %v1270 = vld [vmem:[%s1222 + $0xbc] sm:$0x1]
        %v1303 = vunpack.c.l.b16 %v1223
        %v1304 = vunpack.c.l.b16 %v1224
        %v1305 = vunpack.c.l.b16 %v1226
        %v1306 = vunpack.c.l.b16 %v1227
        %v1307 = vunpack.c.l.b16 %v1229
        %v1308 = vunpack.c.l.b16 %v1230
        %v1309 = vunpack.c.l.b16 %v1232
        %v1310 = vunpack.c.l.b16 %v1233
        %v1311 = vunpack.c.l.b16 %v1235
        %v1312 = vunpack.c.l.b16 %v1236
        %v1313 = vunpack.c.l.b16 %v1238
        %v1314 = vunpack.c.l.b16 %v1239
        %v1315 = vunpack.c.l.b16 %v1241
        %v1316 = vunpack.c.l.b16 %v1242
        %v1317 = vunpack.c.l.b16 %v1244
        %v1318 = vunpack.c.l.b16 %v1245
        %v1319 = vunpack.c.l.b16 %v1247
        %v1320 = vunpack.c.l.b16 %v1248
        %v1321 = vunpack.c.l.b16 %v1250
        %v1322 = vunpack.c.l.b16 %v1251
        %v1323 = vunpack.c.l.b16 %v1253
        %v1324 = vunpack.c.l.b16 %v1254
        %v1325 = vunpack.c.l.b16 %v1256
        %v1326 = vunpack.c.l.b16 %v1257
        %v1327 = vunpack.c.l.b16 %v1259
        %v1328 = vunpack.c.l.b16 %v1260
        %v1329 = vunpack.c.l.b16 %v1262
        %v1330 = vunpack.c.l.b16 %v1263
        %v1331 = vunpack.c.l.b16 %v1265
        %v1332 = vunpack.c.l.b16 %v1266
        %v1333 = vunpack.c.l.b16 %v1268
        %v1334 = vunpack.c.l.b16 %v1269
        %v1335 = vpack.c.b16 %v1304, %v1303
        %v1336 = vpack.c.b16 %v1306, %v1305
        %v1337 = vpack.c.b16 %v1308, %v1307
        %v1338 = vpack.c.b16 %v1310, %v1309
        %v1339 = vpack.c.b16 %v1312, %v1311
        %v1340 = vpack.c.b16 %v1314, %v1313
        %v1341 = vpack.c.b16 %v1316, %v1315
        %v1342 = vpack.c.b16 %v1318, %v1317
        %v1343 = vpack.c.b16 %v1320, %v1319
        %v1344 = vpack.c.b16 %v1322, %v1321
        %v1345 = vpack.c.b16 %v1324, %v1323
        %v1346 = vpack.c.b16 %v1326, %v1325
        %v1347 = vpack.c.b16 %v1328, %v1327
        %v1348 = vpack.c.b16 %v1330, %v1329
        %v1349 = vpack.c.b16 %v1332, %v1331
        %v1350 = vpack.c.b16 %v1334, %v1333
        %1367 = vst [vmem:[#allocation2 + $0x30] sm:$0xff] %v1335
        %1368 = vst [vmem:[#allocation2 + $0x78] sm:$0xff] %v1336
        %1369 = vst [vmem:[#allocation2 + $0xc0] sm:$0xff] %v1337
        %1370 = vst [vmem:[#allocation2 + $0x108] sm:$0xff] %v1338
        %1371 = vst [vmem:[#allocation2 + $0x150] sm:$0xff] %v1339
        %1372 = vst [vmem:[#allocation2 + $0x198] sm:$0xff] %v1340
        %1373 = vst [vmem:[#allocation2 + $0x1e0] sm:$0xff] %v1341
        %1374 = vst [vmem:[#allocation2 + $0x228] sm:$0xff] %v1342
        %1375 = vst [vmem:[#allocation2 + $0x270] sm:$0xff] %v1343
        %1376 = vst [vmem:[#allocation2 + $0x2b8] sm:$0xff] %v1344
        %1377 = vst [vmem:[#allocation2 + $0x300] sm:$0xff] %v1345
        %1378 = vst [vmem:[#allocation2 + $0x348] sm:$0xff] %v1346
        %1379 = vst [vmem:[#allocation2 + $0x390] sm:$0xff] %v1347
        %1380 = vst [vmem:[#allocation2 + $0x3d8] sm:$0xff] %v1348
        %1381 = vst [vmem:[#allocation2 + $0x420] sm:$0xff] %v1349
        %1382 = vst [vmem:[#allocation2 + $0x468] sm:$0xff] %v1350
        %v1399 = vunpack.c.l.b16 %v1225
        %v1400 = vunpack.c.l.b16 %v1228
        %v1401 = vunpack.c.l.b16 %v1231
        %v1402 = vunpack.c.l.b16 %v1234
        %v1403 = vunpack.c.l.b16 %v1237
        %v1404 = vunpack.c.l.b16 %v1240
        %v1405 = vunpack.c.l.b16 %v1243
        %v1406 = vunpack.c.l.b16 %v1246
        %v1407 = vunpack.c.l.b16 %v1249
        %v1408 = vunpack.c.l.b16 %v1252
        %v1409 = vunpack.c.l.b16 %v1255
        %v1410 = vunpack.c.l.b16 %v1258
        %v1411 = vunpack.c.l.b16 %v1261
        %v1412 = vunpack.c.l.b16 %v1264
        %v1413 = vunpack.c.l.b16 %v1267
        %v1414 = vunpack.c.l.b16 %v1270
        %v1415 = vpack.c.b16 %v1399, %v1399
        %v1416 = vpack.c.b16 %v1400, %v1400
        %v1417 = vpack.c.b16 %v1401, %v1401
        %v1418 = vpack.c.b16 %v1402, %v1402
        %v1419 = vpack.c.b16 %v1403, %v1403
        %v1420 = vpack.c.b16 %v1404, %v1404
        %v1421 = vpack.c.b16 %v1405, %v1405
        %v1422 = vpack.c.b16 %v1406, %v1406
        %v1423 = vpack.c.b16 %v1407, %v1407
        %v1424 = vpack.c.b16 %v1408, %v1408
        %v1425 = vpack.c.b16 %v1409, %v1409
        %v1426 = vpack.c.b16 %v1410, %v1410
        %v1427 = vpack.c.b16 %v1411, %v1411
        %v1428 = vpack.c.b16 %v1412, %v1412
        %v1429 = vpack.c.b16 %v1413, %v1413
        %v1430 = vpack.c.b16 %v1414, %v1414
        %v1432 = vshrl.u32 %v1335, 16
        %v1434 = vshll.u32 %v1335, 16
        %v1436 = vrot.slane %v1434, 1
        %v1437 = vor.u32 %v1432, %v1436
        %v1439 = vshll.u32 %v1415, 16
        %v1441 = vrot.slane %v1439, 1
        %v1442 = vsel %vm397, %v1437, %v1441
        %v1444 = vshrl.u32 %v1336, 16
        %v1446 = vshll.u32 %v1336, 16
        %v1448 = vrot.slane %v1446, 1
        %v1449 = vor.u32 %v1444, %v1448
        %v1451 = vshll.u32 %v1416, 16
        %v1453 = vrot.slane %v1451, 1
        %v1454 = vsel %vm397, %v1449, %v1453
        %v1456 = vshrl.u32 %v1337, 16
        %v1458 = vshll.u32 %v1337, 16
        %v1460 = vrot.slane %v1458, 1
        %v1461 = vor.u32 %v1456, %v1460
        %v1463 = vshll.u32 %v1417, 16
        %v1465 = vrot.slane %v1463, 1
        %v1466 = vsel %vm397, %v1461, %v1465
        %v1468 = vshrl.u32 %v1338, 16
        %v1470 = vshll.u32 %v1338, 16
        %v1472 = vrot.slane %v1470, 1
        %v1473 = vor.u32 %v1468, %v1472
        %v1475 = vshll.u32 %v1418, 16
        %v1477 = vrot.slane %v1475, 1
        %v1478 = vsel %vm397, %v1473, %v1477
        %v1480 = vshrl.u32 %v1339, 16
        %v1482 = vshll.u32 %v1339, 16
        %v1484 = vrot.slane %v1482, 1
        %v1485 = vor.u32 %v1480, %v1484
        %v1487 = vshll.u32 %v1419, 16
        %v1489 = vrot.slane %v1487, 1
        %v1490 = vsel %vm397, %v1485, %v1489
        %v1492 = vshrl.u32 %v1340, 16
        %v1494 = vshll.u32 %v1340, 16
        %v1496 = vrot.slane %v1494, 1
        %v1497 = vor.u32 %v1492, %v1496
        %v1499 = vshll.u32 %v1420, 16
        %v1501 = vrot.slane %v1499, 1
        %v1502 = vsel %vm397, %v1497, %v1501
        %v1504 = vshrl.u32 %v1341, 16
        %v1506 = vshll.u32 %v1341, 16
        %v1508 = vrot.slane %v1506, 1
        %v1509 = vor.u32 %v1504, %v1508
        %v1511 = vshll.u32 %v1421, 16
        %v1513 = vrot.slane %v1511, 1
        %v1514 = vsel %vm397, %v1509, %v1513
        %v1516 = vshrl.u32 %v1342, 16
        %v1518 = vshll.u32 %v1342, 16
        %v1520 = vrot.slane %v1518, 1
        %v1521 = vor.u32 %v1516, %v1520
        %v1523 = vshll.u32 %v1422, 16
        %v1525 = vrot.slane %v1523, 1
        %v1526 = vsel %vm397, %v1521, %v1525
        %v1528 = vshrl.u32 %v1343, 16
        %v1530 = vshll.u32 %v1343, 16
        %v1532 = vrot.slane %v1530, 1
        %v1533 = vor.u32 %v1528, %v1532
        %v1535 = vshll.u32 %v1423, 16
        %v1537 = vrot.slane %v1535, 1
        %v1538 = vsel %vm397, %v1533, %v1537
        %v1540 = vshrl.u32 %v1344, 16
        %v1542 = vshll.u32 %v1344, 16
        %v1544 = vrot.slane %v1542, 1
        %v1545 = vor.u32 %v1540, %v1544
        %v1547 = vshll.u32 %v1424, 16
        %v1549 = vrot.slane %v1547, 1
        %v1550 = vsel %vm397, %v1545, %v1549
        %v1552 = vshrl.u32 %v1345, 16
        %v1554 = vshll.u32 %v1345, 16
        %v1556 = vrot.slane %v1554, 1
        %v1557 = vor.u32 %v1552, %v1556
        %v1559 = vshll.u32 %v1425, 16
        %v1561 = vrot.slane %v1559, 1
        %v1562 = vsel %vm397, %v1557, %v1561
        %v1564 = vshrl.u32 %v1346, 16
        %v1566 = vshll.u32 %v1346, 16
        %v1568 = vrot.slane %v1566, 1
        %v1569 = vor.u32 %v1564, %v1568
        %v1571 = vshll.u32 %v1426, 16
        %v1573 = vrot.slane %v1571, 1
        %v1574 = vsel %vm397, %v1569, %v1573
        %v1576 = vshrl.u32 %v1347, 16
        %v1578 = vshll.u32 %v1347, 16
        %v1580 = vrot.slane %v1578, 1
        %v1581 = vor.u32 %v1576, %v1580
        %v1583 = vshll.u32 %v1427, 16
        %v1585 = vrot.slane %v1583, 1
        %v1586 = vsel %vm397, %v1581, %v1585
        %v1588 = vshrl.u32 %v1348, 16
        %v1590 = vshll.u32 %v1348, 16
        %v1592 = vrot.slane %v1590, 1
        %v1593 = vor.u32 %v1588, %v1592
        %v1595 = vshll.u32 %v1428, 16
        %v1597 = vrot.slane %v1595, 1
        %v1598 = vsel %vm397, %v1593, %v1597
        %v1600 = vshrl.u32 %v1349, 16
        %v1602 = vshll.u32 %v1349, 16
        %v1604 = vrot.slane %v1602, 1
        %v1605 = vor.u32 %v1600, %v1604
        %v1607 = vshll.u32 %v1429, 16
        %v1609 = vrot.slane %v1607, 1
        %v1610 = vsel %vm397, %v1605, %v1609
        %v1612 = vshrl.u32 %v1350, 16
        %v1614 = vshll.u32 %v1350, 16
        %v1616 = vrot.slane %v1614, 1
        %v1617 = vor.u32 %v1612, %v1616
        %v1619 = vshll.u32 %v1430, 16
        %v1621 = vrot.slane %v1619, 1
        %v1622 = vsel %vm397, %v1617, %v1621
        %1639 = vst [vmem:[#allocation2 + $0x38] sm:$0xff] %v1442
        %1640 = vst [vmem:[#allocation2 + $0x80] sm:$0xff] %v1454
        %1641 = vst [vmem:[#allocation2 + $0xc8] sm:$0xff] %v1466
        %1642 = vst [vmem:[#allocation2 + $0x110] sm:$0xff] %v1478
        %1643 = vst [vmem:[#allocation2 + $0x158] sm:$0xff] %v1490
        %1644 = vst [vmem:[#allocation2 + $0x1a0] sm:$0xff] %v1502
        %1645 = vst [vmem:[#allocation2 + $0x1e8] sm:$0xff] %v1514
        %1646 = vst [vmem:[#allocation2 + $0x230] sm:$0xff] %v1526
        %1647 = vst [vmem:[#allocation2 + $0x278] sm:$0xff] %v1538
        %1648 = vst [vmem:[#allocation2 + $0x2c0] sm:$0xff] %v1550
        %1649 = vst [vmem:[#allocation2 + $0x308] sm:$0xff] %v1562
        %1650 = vst [vmem:[#allocation2 + $0x350] sm:$0xff] %v1574
        %1651 = vst [vmem:[#allocation2 + $0x398] sm:$0xff] %v1586
        %1652 = vst [vmem:[#allocation2 + $0x3e0] sm:$0xff] %v1598
        %1653 = vst [vmem:[#allocation2 + $0x428] sm:$0xff] %v1610
        %1654 = vst [vmem:[#allocation2 + $0x470] sm:$0xff] %v1622
        %v1655 = vrot.slane %v1335, 1
        %v1656 = vrot.slane %v1415, 1
        %v1657 = vsel %vm622, %v1655, %v1656
        %v1658 = vrot.slane %v1336, 1
        %v1659 = vrot.slane %v1416, 1
        %v1660 = vsel %vm622, %v1658, %v1659
        %v1661 = vrot.slane %v1337, 1
        %v1662 = vrot.slane %v1417, 1
        %v1663 = vsel %vm622, %v1661, %v1662
        %v1664 = vrot.slane %v1338, 1
        %v1665 = vrot.slane %v1418, 1
        %v1666 = vsel %vm622, %v1664, %v1665
        %v1667 = vrot.slane %v1339, 1
        %v1668 = vrot.slane %v1419, 1
        %v1669 = vsel %vm622, %v1667, %v1668
        %v1670 = vrot.slane %v1340, 1
        %v1671 = vrot.slane %v1420, 1
        %v1672 = vsel %vm622, %v1670, %v1671
        %v1673 = vrot.slane %v1341, 1
        %v1674 = vrot.slane %v1421, 1
        %v1675 = vsel %vm622, %v1673, %v1674
        %v1676 = vrot.slane %v1342, 1
        %v1677 = vrot.slane %v1422, 1
        %v1678 = vsel %vm622, %v1676, %v1677
        %v1679 = vrot.slane %v1343, 1
        %v1680 = vrot.slane %v1423, 1
        %v1681 = vsel %vm622, %v1679, %v1680
        %v1682 = vrot.slane %v1344, 1
        %v1683 = vrot.slane %v1424, 1
        %v1684 = vsel %vm622, %v1682, %v1683
        %v1685 = vrot.slane %v1345, 1
        %v1686 = vrot.slane %v1425, 1
        %v1687 = vsel %vm622, %v1685, %v1686
        %v1688 = vrot.slane %v1346, 1
        %v1689 = vrot.slane %v1426, 1
        %v1690 = vsel %vm622, %v1688, %v1689
        %v1691 = vrot.slane %v1347, 1
        %v1692 = vrot.slane %v1427, 1
        %v1693 = vsel %vm622, %v1691, %v1692
        %v1694 = vrot.slane %v1348, 1
        %v1695 = vrot.slane %v1428, 1
        %v1696 = vsel %vm622, %v1694, %v1695
        %v1697 = vrot.slane %v1349, 1
        %v1698 = vrot.slane %v1429, 1
        %v1699 = vsel %vm622, %v1697, %v1698
        %v1700 = vrot.slane %v1350, 1
        %v1701 = vrot.slane %v1430, 1
        %v1702 = vsel %vm622, %v1700, %v1701
        %1719 = vst [vmem:[#allocation2 + $0x40] sm:$0xff] %v1657
        %1720 = vst [vmem:[#allocation2 + $0x88] sm:$0xff] %v1660
        %1721 = vst [vmem:[#allocation2 + $0xd0] sm:$0xff] %v1663
        %1722 = vst [vmem:[#allocation2 + $0x118] sm:$0xff] %v1666
        %1723 = vst [vmem:[#allocation2 + $0x160] sm:$0xff] %v1669
        %1724 = vst [vmem:[#allocation2 + $0x1a8] sm:$0xff] %v1672
        %1725 = vst [vmem:[#allocation2 + $0x1f0] sm:$0xff] %v1675
        %1726 = vst [vmem:[#allocation2 + $0x238] sm:$0xff] %v1678
        %1727 = vst [vmem:[#allocation2 + $0x280] sm:$0xff] %v1681
        %1728 = vst [vmem:[#allocation2 + $0x2c8] sm:$0xff] %v1684
        %1729 = vst [vmem:[#allocation2 + $0x310] sm:$0xff] %v1687
        %1730 = vst [vmem:[#allocation2 + $0x358] sm:$0xff] %v1690
        %1731 = vst [vmem:[#allocation2 + $0x3a0] sm:$0xff] %v1693
        %1732 = vst [vmem:[#allocation2 + $0x3e8] sm:$0xff] %v1696
        %1733 = vst [vmem:[#allocation2 + $0x430] sm:$0xff] %v1699
        %1734 = vst [vmem:[#allocation2 + $0x478] sm:$0xff] %v1702
        %v1735 = vld [vmem:[#allocation2] sm:$0xff]
        %v1736 = vld [vmem:[#allocation2 + $0x8] sm:$0xff]
        %v1737 = vld [vmem:[#allocation2 + $0x10] sm:$0xff]
        %v1738 = vld [vmem:[#allocation2 + $0x18] sm:$0xff]
        %v1739 = vld [vmem:[#allocation2 + $0x20] sm:$0xff]
        %v1740 = vld [vmem:[#allocation2 + $0x28] sm:$0xff]
        %v1741 = vld [vmem:[#allocation2 + $0x30] sm:$0xff]
        %v1742 = vld [vmem:[#allocation2 + $0x38] sm:$0xff]
        %v1743 = vld [vmem:[#allocation2 + $0x40] sm:$0xff]
        %v1744 = vld [vmem:[#allocation2 + $0x48] sm:$0xff]
        %v1745 = vld [vmem:[#allocation2 + $0x50] sm:$0xff]
        %v1746 = vld [vmem:[#allocation2 + $0x58] sm:$0xff]
        %v1747 = vld [vmem:[#allocation2 + $0x60] sm:$0xff]
        %v1748 = vld [vmem:[#allocation2 + $0x68] sm:$0xff]
        %v1749 = vld [vmem:[#allocation2 + $0x70] sm:$0xff]
        %v1750 = vld [vmem:[#allocation2 + $0x78] sm:$0xff]
        %v1751 = vld [vmem:[#allocation2 + $0x80] sm:$0xff]
        %v1752 = vld [vmem:[#allocation2 + $0x88] sm:$0xff]
        %v1753 = vld [vmem:[#allocation2 + $0x90] sm:$0xff]
        %v1754 = vld [vmem:[#allocation2 + $0x98] sm:$0xff]
        %v1755 = vld [vmem:[#allocation2 + $0xa0] sm:$0xff]
        %v1756 = vld [vmem:[#allocation2 + $0xa8] sm:$0xff]
        %v1757 = vld [vmem:[#allocation2 + $0xb0] sm:$0xff]
        %v1758 = vld [vmem:[#allocation2 + $0xb8] sm:$0xff]
        %v1759 = vld [vmem:[#allocation2 + $0xc0] sm:$0xff]
        %v1760 = vld [vmem:[#allocation2 + $0xc8] sm:$0xff]
        %v1761 = vld [vmem:[#allocation2 + $0xd0] sm:$0xff]
        %v1762 = vld [vmem:[#allocation2 + $0xd8] sm:$0xff]
        %v1763 = vld [vmem:[#allocation2 + $0xe0] sm:$0xff]
        %v1764 = vld [vmem:[#allocation2 + $0xe8] sm:$0xff]
        %v1765 = vld [vmem:[#allocation2 + $0xf0] sm:$0xff]
        %v1766 = vld [vmem:[#allocation2 + $0xf8] sm:$0xff]
        %v1767 = vld [vmem:[#allocation2 + $0x100] sm:$0xff]
        %v1768 = vld [vmem:[#allocation2 + $0x108] sm:$0xff]
        %v1769 = vld [vmem:[#allocation2 + $0x110] sm:$0xff]
        %v1770 = vld [vmem:[#allocation2 + $0x118] sm:$0xff]
        %v1771 = vld [vmem:[#allocation2 + $0x120] sm:$0xff]
        %v1772 = vld [vmem:[#allocation2 + $0x128] sm:$0xff]
        %v1773 = vld [vmem:[#allocation2 + $0x130] sm:$0xff]
        %v1774 = vld [vmem:[#allocation2 + $0x138] sm:$0xff]
        %v1775 = vld [vmem:[#allocation2 + $0x140] sm:$0xff]
        %v1776 = vld [vmem:[#allocation2 + $0x148] sm:$0xff]
        %v1777 = vld [vmem:[#allocation2 + $0x150] sm:$0xff]
        %v1778 = vld [vmem:[#allocation2 + $0x158] sm:$0xff]
        %v1779 = vld [vmem:[#allocation2 + $0x160] sm:$0xff]
        %v1780 = vld [vmem:[#allocation2 + $0x168] sm:$0xff]
        %v1781 = vld [vmem:[#allocation2 + $0x170] sm:$0xff]
        %v1782 = vld [vmem:[#allocation2 + $0x178] sm:$0xff]
        %v1783 = vld [vmem:[#allocation2 + $0x180] sm:$0xff]
        %v1784 = vld [vmem:[#allocation2 + $0x188] sm:$0xff]
        %v1785 = vld [vmem:[#allocation2 + $0x190] sm:$0xff]
        %v1786 = vld [vmem:[#allocation2 + $0x198] sm:$0xff]
        %v1787 = vld [vmem:[#allocation2 + $0x1a0] sm:$0xff]
        %v1788 = vld [vmem:[#allocation2 + $0x1a8] sm:$0xff]
        %v1789 = vld [vmem:[#allocation2 + $0x1b0] sm:$0xff]
        %v1790 = vld [vmem:[#allocation2 + $0x1b8] sm:$0xff]
        %v1791 = vld [vmem:[#allocation2 + $0x1c0] sm:$0xff]
        %v1792 = vld [vmem:[#allocation2 + $0x1c8] sm:$0xff]
        %v1793 = vld [vmem:[#allocation2 + $0x1d0] sm:$0xff]
        %v1794 = vld [vmem:[#allocation2 + $0x1d8] sm:$0xff]
        %v1795 = vld [vmem:[#allocation2 + $0x1e0] sm:$0xff]
        %v1796 = vld [vmem:[#allocation2 + $0x1e8] sm:$0xff]
        %v1797 = vld [vmem:[#allocation2 + $0x1f0] sm:$0xff]
        %v1798 = vld [vmem:[#allocation2 + $0x1f8] sm:$0xff]
        %v1799 = vld [vmem:[#allocation2 + $0x200] sm:$0xff]
        %v1800 = vld [vmem:[#allocation2 + $0x208] sm:$0xff]
        %v1801 = vld [vmem:[#allocation2 + $0x210] sm:$0xff]
        %v1802 = vld [vmem:[#allocation2 + $0x218] sm:$0xff]
        %v1803 = vld [vmem:[#allocation2 + $0x220] sm:$0xff]
        %v1804 = vld [vmem:[#allocation2 + $0x228] sm:$0xff]
        %v1805 = vld [vmem:[#allocation2 + $0x230] sm:$0xff]
        %v1806 = vld [vmem:[#allocation2 + $0x238] sm:$0xff]
        %v1807 = vld [vmem:[#allocation2 + $0x240] sm:$0xff]
        %v1808 = vld [vmem:[#allocation2 + $0x248] sm:$0xff]
        %v1809 = vld [vmem:[#allocation2 + $0x250] sm:$0xff]
        %v1810 = vld [vmem:[#allocation2 + $0x258] sm:$0xff]
        %v1811 = vld [vmem:[#allocation2 + $0x260] sm:$0xff]
        %v1812 = vld [vmem:[#allocation2 + $0x268] sm:$0xff]
        %v1813 = vld [vmem:[#allocation2 + $0x270] sm:$0xff]
        %v1814 = vld [vmem:[#allocation2 + $0x278] sm:$0xff]
        %v1815 = vld [vmem:[#allocation2 + $0x280] sm:$0xff]
        %v1816 = vld [vmem:[#allocation2 + $0x288] sm:$0xff]
        %v1817 = vld [vmem:[#allocation2 + $0x290] sm:$0xff]
        %v1818 = vld [vmem:[#allocation2 + $0x298] sm:$0xff]
        %v1819 = vld [vmem:[#allocation2 + $0x2a0] sm:$0xff]
        %v1820 = vld [vmem:[#allocation2 + $0x2a8] sm:$0xff]
        %v1821 = vld [vmem:[#allocation2 + $0x2b0] sm:$0xff]
        %v1822 = vld [vmem:[#allocation2 + $0x2b8] sm:$0xff]
        %v1823 = vld [vmem:[#allocation2 + $0x2c0] sm:$0xff]
        %v1824 = vld [vmem:[#allocation2 + $0x2c8] sm:$0xff]
        %v1825 = vld [vmem:[#allocation2 + $0x2d0] sm:$0xff]
        %v1826 = vld [vmem:[#allocation2 + $0x2d8] sm:$0xff]
        %v1827 = vld [vmem:[#allocation2 + $0x2e0] sm:$0xff]
        %v1828 = vld [vmem:[#allocation2 + $0x2e8] sm:$0xff]
        %v1829 = vld [vmem:[#allocation2 + $0x2f0] sm:$0xff]
        %v1830 = vld [vmem:[#allocation2 + $0x2f8] sm:$0xff]
        %v1831 = vld [vmem:[#allocation2 + $0x300] sm:$0xff]
        %v1832 = vld [vmem:[#allocation2 + $0x308] sm:$0xff]
        %v1833 = vld [vmem:[#allocation2 + $0x310] sm:$0xff]
        %v1834 = vld [vmem:[#allocation2 + $0x318] sm:$0xff]
        %v1835 = vld [vmem:[#allocation2 + $0x320] sm:$0xff]
        %v1836 = vld [vmem:[#allocation2 + $0x328] sm:$0xff]
        %v1837 = vld [vmem:[#allocation2 + $0x330] sm:$0xff]
        %v1838 = vld [vmem:[#allocation2 + $0x338] sm:$0xff]
        %v1839 = vld [vmem:[#allocation2 + $0x340] sm:$0xff]
        %v1840 = vld [vmem:[#allocation2 + $0x348] sm:$0xff]
        %v1841 = vld [vmem:[#allocation2 + $0x350] sm:$0xff]
        %v1842 = vld [vmem:[#allocation2 + $0x358] sm:$0xff]
        %v1843 = vld [vmem:[#allocation2 + $0x360] sm:$0xff]
        %v1844 = vld [vmem:[#allocation2 + $0x368] sm:$0xff]
        %v1845 = vld [vmem:[#allocation2 + $0x370] sm:$0xff]
        %v1846 = vld [vmem:[#allocation2 + $0x378] sm:$0xff]
        %v1847 = vld [vmem:[#allocation2 + $0x380] sm:$0xff]
        %v1848 = vld [vmem:[#allocation2 + $0x388] sm:$0xff]
        %v1849 = vld [vmem:[#allocation2 + $0x390] sm:$0xff]
        %v1850 = vld [vmem:[#allocation2 + $0x398] sm:$0xff]
        %v1851 = vld [vmem:[#allocation2 + $0x3a0] sm:$0xff]
        %v1852 = vld [vmem:[#allocation2 + $0x3a8] sm:$0xff]
        %v1853 = vld [vmem:[#allocation2 + $0x3b0] sm:$0xff]
        %v1854 = vld [vmem:[#allocation2 + $0x3b8] sm:$0xff]
        %v1855 = vld [vmem:[#allocation2 + $0x3c0] sm:$0xff]
        %v1856 = vld [vmem:[#allocation2 + $0x3c8] sm:$0xff]
        %v1857 = vld [vmem:[#allocation2 + $0x3d0] sm:$0xff]
        %v1858 = vld [vmem:[#allocation2 + $0x3d8] sm:$0xff]
        %v1859 = vld [vmem:[#allocation2 + $0x3e0] sm:$0xff]
        %v1860 = vld [vmem:[#allocation2 + $0x3e8] sm:$0xff]
        %v1861 = vld [vmem:[#allocation2 + $0x3f0] sm:$0xff]
        %v1862 = vld [vmem:[#allocation2 + $0x3f8] sm:$0xff]
        %v1863 = vld [vmem:[#allocation2 + $0x400] sm:$0xff]
        %v1864 = vld [vmem:[#allocation2 + $0x408] sm:$0xff]
        %v1865 = vld [vmem:[#allocation2 + $0x410] sm:$0xff]
        %v1866 = vld [vmem:[#allocation2 + $0x418] sm:$0xff]
        %v1867 = vld [vmem:[#allocation2 + $0x420] sm:$0xff]
        %v1868 = vld [vmem:[#allocation2 + $0x428] sm:$0xff]
        %v1869 = vld [vmem:[#allocation2 + $0x430] sm:$0xff]
        %v1870 = vld [vmem:[#allocation2 + $0x438] sm:$0xff]
        %v1871 = vld [vmem:[#allocation2 + $0x440] sm:$0xff]
        %v1872 = vld [vmem:[#allocation2 + $0x448] sm:$0xff]
        %v1873 = vld [vmem:[#allocation2 + $0x450] sm:$0xff]
        %v1874 = vld [vmem:[#allocation2 + $0x458] sm:$0xff]
        %v1875 = vld [vmem:[#allocation2 + $0x460] sm:$0xff]
        %v1876 = vld [vmem:[#allocation2 + $0x468] sm:$0xff]
        %v1877 = vld [vmem:[#allocation2 + $0x470] sm:$0xff]
        %v1878 = vld [vmem:[#allocation2 + $0x478] sm:$0xff]
        %v1879 = vld [vmem:[%s1] sm:$0xf]
        %v1880 = vld [vmem:[%s1 + $0x4] sm:$0xf]
        %v1881 = vld [vmem:[%s1 + $0x8] sm:$0xf]
        %v1882 = vld [vmem:[%s1 + $0xc] sm:$0xf]
        %v1883 = vld [vmem:[%s1 + $0x10] sm:$0xf]
        %v1884 = vld [vmem:[%s1 + $0x14] sm:$0xf]
        %v1885 = vld [vmem:[%s1 + $0x18] sm:$0xf]
        %v1886 = vld [vmem:[%s1 + $0x1c] sm:$0xf]
        %v1887 = vld [vmem:[%s1 + $0x20] sm:$0xf]
        %v1888 = vld [vmem:[%s1 + $0x24] sm:$0xf]
        %v1889 = vld [vmem:[%s1 + $0x28] sm:$0xf]
        %v1890 = vld [vmem:[%s1 + $0x2c] sm:$0xf]
        %v1891 = vld [vmem:[%s1 + $0x30] sm:$0xf]
        %v1892 = vld [vmem:[%s1 + $0x34] sm:$0xf]
        %v1893 = vld [vmem:[%s1 + $0x38] sm:$0xf]
        %v1894 = vld [vmem:[%s1 + $0x3c] sm:$0xf]
        %v1895 = vld [vmem:[%s1 + $0x40] sm:$0xf]
        %v1896 = vld [vmem:[%s1 + $0x44] sm:$0xf]
        %v1897 = vld [vmem:[%s1 + $0x48] sm:$0xf]
        %v1898 = vld [vmem:[%s1 + $0x4c] sm:$0xf]
        %v1899 = vld [vmem:[%s1 + $0x50] sm:$0xf]
        %v1900 = vld [vmem:[%s1 + $0x54] sm:$0xf]
        %v1901 = vld [vmem:[%s1 + $0x58] sm:$0xf]
        %v1902 = vld [vmem:[%s1 + $0x5c] sm:$0xf]
        %v1903 = vld [vmem:[%s1 + $0x60] sm:$0xf]
        %v1904 = vld [vmem:[%s1 + $0x64] sm:$0xf]
        %v1905 = vld [vmem:[%s1 + $0x68] sm:$0xf]
        %v1906 = vld [vmem:[%s1 + $0x6c] sm:$0xf]
        %v1907 = vld [vmem:[%s1 + $0x70] sm:$0xf]
        %v1908 = vld [vmem:[%s1 + $0x74] sm:$0xf]
        %v1909 = vld [vmem:[%s1 + $0x78] sm:$0xf]
        %v1910 = vld [vmem:[%s1 + $0x7c] sm:$0xf]
        %v1911 = vld [vmem:[%s1 + $0x80] sm:$0xf]
        %v1912 = vld [vmem:[%s1 + $0x84] sm:$0xf]
        %v1913 = vld [vmem:[%s1 + $0x88] sm:$0xf]
        %v1914 = vld [vmem:[%s1 + $0x8c] sm:$0xf]
        %v1915 = vld [vmem:[%s1 + $0x90] sm:$0xf]
        %v1916 = vld [vmem:[%s1 + $0x94] sm:$0xf]
        %v1917 = vld [vmem:[%s1 + $0x98] sm:$0xf]
        %v1918 = vld [vmem:[%s1 + $0x9c] sm:$0xf]
        %v1919 = vld [vmem:[%s1 + $0xa0] sm:$0xf]
        %v1920 = vld [vmem:[%s1 + $0xa4] sm:$0xf]
        %v1921 = vld [vmem:[%s1 + $0xa8] sm:$0xf]
        %v1922 = vld [vmem:[%s1 + $0xac] sm:$0xf]
        %v1923 = vld [vmem:[%s1 + $0xb0] sm:$0xf]
        %v1924 = vld [vmem:[%s1 + $0xb4] sm:$0xf]
        %v1925 = vld [vmem:[%s1 + $0xb8] sm:$0xf]
        %v1926 = vld [vmem:[%s1 + $0xbc] sm:$0xf]
        %v1927 = vld [vmem:[%s1 + $0xc0] sm:$0xf]
        %v1928 = vld [vmem:[%s1 + $0xc4] sm:$0xf]
        %v1929 = vld [vmem:[%s1 + $0xc8] sm:$0xf]
        %v1930 = vld [vmem:[%s1 + $0xcc] sm:$0xf]
        %v1931 = vld [vmem:[%s1 + $0xd0] sm:$0xf]
        %v1932 = vld [vmem:[%s1 + $0xd4] sm:$0xf]
        %v1933 = vld [vmem:[%s1 + $0xd8] sm:$0xf]
        %v1934 = vld [vmem:[%s1 + $0xdc] sm:$0xf]
        %v1935 = vld [vmem:[%s1 + $0xe0] sm:$0xf]
        %v1936 = vld [vmem:[%s1 + $0xe4] sm:$0xf]
        %v1937 = vld [vmem:[%s1 + $0xe8] sm:$0xf]
        %v1938 = vld [vmem:[%s1 + $0xec] sm:$0xf]
        %v1939 = vld [vmem:[%s1 + $0xf0] sm:$0xf]
        %v1940 = vld [vmem:[%s1 + $0xf4] sm:$0xf]
        %v1941 = vld [vmem:[%s1 + $0xf8] sm:$0xf]
        %v1942 = vld [vmem:[%s1 + $0xfc] sm:$0xf]
        %v1943 = vld [vmem:[%s1 + $0x100] sm:$0xf]
        %v1944 = vld [vmem:[%s1 + $0x104] sm:$0xf]
        %v1945 = vld [vmem:[%s1 + $0x108] sm:$0xf]
        %v1946 = vld [vmem:[%s1 + $0x10c] sm:$0xf]
        %v1947 = vld [vmem:[%s1 + $0x110] sm:$0xf]
        %v1948 = vld [vmem:[%s1 + $0x114] sm:$0xf]
        %v1949 = vld [vmem:[%s1 + $0x118] sm:$0xf]
        %v1950 = vld [vmem:[%s1 + $0x11c] sm:$0xf]
        %v1951 = vld [vmem:[%s1 + $0x120] sm:$0xf]
        %v1952 = vld [vmem:[%s1 + $0x124] sm:$0xf]
        %v1953 = vld [vmem:[%s1 + $0x128] sm:$0xf]
        %v1954 = vld [vmem:[%s1 + $0x12c] sm:$0xf]
        %v1955 = vld [vmem:[%s1 + $0x130] sm:$0xf]
        %v1956 = vld [vmem:[%s1 + $0x134] sm:$0xf]
        %v1957 = vld [vmem:[%s1 + $0x138] sm:$0xf]
        %v1958 = vld [vmem:[%s1 + $0x13c] sm:$0xf]
        %v1959 = vld [vmem:[%s1 + $0x140] sm:$0xf]
        %v1960 = vld [vmem:[%s1 + $0x144] sm:$0xf]
        %v1961 = vld [vmem:[%s1 + $0x148] sm:$0xf]
        %v1962 = vld [vmem:[%s1 + $0x14c] sm:$0xf]
        %v1963 = vld [vmem:[%s1 + $0x150] sm:$0xf]
        %v1964 = vld [vmem:[%s1 + $0x154] sm:$0xf]
        %v1965 = vld [vmem:[%s1 + $0x158] sm:$0xf]
        %v1966 = vld [vmem:[%s1 + $0x15c] sm:$0xf]
        %v1967 = vld [vmem:[%s1 + $0x160] sm:$0xf]
        %v1968 = vld [vmem:[%s1 + $0x164] sm:$0xf]
        %v1969 = vld [vmem:[%s1 + $0x168] sm:$0xf]
        %v1970 = vld [vmem:[%s1 + $0x16c] sm:$0xf]
        %v1971 = vld [vmem:[%s1 + $0x170] sm:$0xf]
        %v1972 = vld [vmem:[%s1 + $0x174] sm:$0xf]
        %v1973 = vld [vmem:[%s1 + $0x178] sm:$0xf]
        %v1974 = vld [vmem:[%s1 + $0x17c] sm:$0xf]
        %v1975 = vld [vmem:[%s1 + $0x180] sm:$0xf]
        %v1976 = vld [vmem:[%s1 + $0x184] sm:$0xf]
        %v1977 = vld [vmem:[%s1 + $0x188] sm:$0xf]
        %v1978 = vld [vmem:[%s1 + $0x18c] sm:$0xf]
        %v1979 = vld [vmem:[%s1 + $0x190] sm:$0xf]
        %v1980 = vld [vmem:[%s1 + $0x194] sm:$0xf]
        %v1981 = vld [vmem:[%s1 + $0x198] sm:$0xf]
        %v1982 = vld [vmem:[%s1 + $0x19c] sm:$0xf]
        %v1983 = vld [vmem:[%s1 + $0x1a0] sm:$0xf]
        %v1984 = vld [vmem:[%s1 + $0x1a4] sm:$0xf]
        %v1985 = vld [vmem:[%s1 + $0x1a8] sm:$0xf]
        %v1986 = vld [vmem:[%s1 + $0x1ac] sm:$0xf]
        %v1987 = vld [vmem:[%s1 + $0x1b0] sm:$0xf]
        %v1988 = vld [vmem:[%s1 + $0x1b4] sm:$0xf]
        %v1989 = vld [vmem:[%s1 + $0x1b8] sm:$0xf]
        %v1990 = vld [vmem:[%s1 + $0x1bc] sm:$0xf]
        %v1991 = vld [vmem:[%s1 + $0x1c0] sm:$0xf]
        %v1992 = vld [vmem:[%s1 + $0x1c4] sm:$0xf]
        %v1993 = vld [vmem:[%s1 + $0x1c8] sm:$0xf]
        %v1994 = vld [vmem:[%s1 + $0x1cc] sm:$0xf]
        %v1995 = vld [vmem:[%s1 + $0x1d0] sm:$0xf]
        %v1996 = vld [vmem:[%s1 + $0x1d4] sm:$0xf]
        %v1997 = vld [vmem:[%s1 + $0x1d8] sm:$0xf]
        %v1998 = vld [vmem:[%s1 + $0x1dc] sm:$0xf]
        %v1999 = vld [vmem:[%s1 + $0x1e0] sm:$0xf]
        %v2000 = vld [vmem:[%s1 + $0x1e4] sm:$0xf]
        %v2001 = vld [vmem:[%s1 + $0x1e8] sm:$0xf]
        %v2002 = vld [vmem:[%s1 + $0x1ec] sm:$0xf]
        %v2003 = vld [vmem:[%s1 + $0x1f0] sm:$0xf]
        %v2004 = vld [vmem:[%s1 + $0x1f4] sm:$0xf]
        %v2005 = vld [vmem:[%s1 + $0x1f8] sm:$0xf]
        %v2006 = vld [vmem:[%s1 + $0x1fc] sm:$0xf]
        %v2007 = vld [vmem:[%s1 + $0x200] sm:$0xf]
        %v2008 = vld [vmem:[%s1 + $0x204] sm:$0xf]
        %v2009 = vld [vmem:[%s1 + $0x208] sm:$0xf]
        %v2010 = vld [vmem:[%s1 + $0x20c] sm:$0xf]
        %v2011 = vld [vmem:[%s1 + $0x210] sm:$0xf]
        %v2012 = vld [vmem:[%s1 + $0x214] sm:$0xf]
        %v2013 = vld [vmem:[%s1 + $0x218] sm:$0xf]
        %v2014 = vld [vmem:[%s1 + $0x21c] sm:$0xf]
        %v2015 = vld [vmem:[%s1 + $0x220] sm:$0xf]
        %v2016 = vld [vmem:[%s1 + $0x224] sm:$0xf]
        %v2017 = vld [vmem:[%s1 + $0x228] sm:$0xf]
        %v2018 = vld [vmem:[%s1 + $0x22c] sm:$0xf]
        %v2019 = vld [vmem:[%s1 + $0x230] sm:$0xf]
        %v2020 = vld [vmem:[%s1 + $0x234] sm:$0xf]
        %v2021 = vld [vmem:[%s1 + $0x238] sm:$0xf]
        %v2022 = vld [vmem:[%s1 + $0x23c] sm:$0xf]
        %v2023 = vld [vmem:[%s2] sm:$0x1]
        %v2025 = vlaneseq
        %v2026 = vshrl.u32 %v2025, 7
        %v2027 = vsub.s32 0, %v2026
        %v2028 = vrot.slane %v2023, %v2027
        %v2174 = vunpack.c.l.b16 %v1879
        %v2175 = vunpack.c.l.b16 %v1880
        %v2176 = vunpack.c.l.b16 %v1881
        %v2177 = vunpack.c.l.b16 %v1882
        %v2178 = vunpack.c.l.b16 %v1883
        %v2179 = vunpack.c.l.b16 %v1884
        %v2180 = vunpack.c.l.b16 %v1885
        %v2181 = vunpack.c.l.b16 %v1886
        %v2182 = vunpack.c.l.b16 %v1887
        %v2183 = vunpack.c.l.b16 %v1888
        %v2184 = vunpack.c.l.b16 %v1889
        %v2185 = vunpack.c.l.b16 %v1890
        %v2186 = vunpack.c.l.b16 %v1891
        %v2187 = vunpack.c.l.b16 %v1892
        %v2188 = vunpack.c.l.b16 %v1893
        %v2189 = vunpack.c.l.b16 %v1894
        %v2190 = vunpack.c.l.b16 %v1895
        %v2191 = vunpack.c.l.b16 %v1896
        %v2192 = vunpack.c.l.b16 %v1897
        %v2193 = vunpack.c.l.b16 %v1898
        %v2194 = vunpack.c.l.b16 %v1899
        %v2195 = vunpack.c.l.b16 %v1900
        %v2196 = vunpack.c.l.b16 %v1901
        %v2197 = vunpack.c.l.b16 %v1902
        %v2198 = vunpack.c.l.b16 %v1903
        %v2199 = vunpack.c.l.b16 %v1904
        %v2200 = vunpack.c.l.b16 %v1905
        %v2201 = vunpack.c.l.b16 %v1906
        %v2202 = vunpack.c.l.b16 %v1907
        %v2203 = vunpack.c.l.b16 %v1908
        %v2204 = vunpack.c.l.b16 %v1909
        %v2205 = vunpack.c.l.b16 %v1910
        %v2206 = vunpack.c.l.b16 %v1911
        %v2207 = vunpack.c.l.b16 %v1912
        %v2208 = vunpack.c.l.b16 %v1913
        %v2209 = vunpack.c.l.b16 %v1914
        %v2210 = vunpack.c.l.b16 %v1915
        %v2211 = vunpack.c.l.b16 %v1916
        %v2212 = vunpack.c.l.b16 %v1917
        %v2213 = vunpack.c.l.b16 %v1918
        %v2214 = vunpack.c.l.b16 %v1919
        %v2215 = vunpack.c.l.b16 %v1920
        %v2216 = vunpack.c.l.b16 %v1921
        %v2217 = vunpack.c.l.b16 %v1922
        %v2218 = vunpack.c.l.b16 %v1923
        %v2219 = vunpack.c.l.b16 %v1924
        %v2220 = vunpack.c.l.b16 %v1925
        %v2221 = vunpack.c.l.b16 %v1926
        %v2222 = vunpack.c.l.b16 %v1927
        %v2223 = vunpack.c.l.b16 %v1928
        %v2224 = vunpack.c.l.b16 %v1929
        %v2225 = vunpack.c.l.b16 %v1930
        %v2226 = vunpack.c.l.b16 %v1931
        %v2227 = vunpack.c.l.b16 %v1932
        %v2228 = vunpack.c.l.b16 %v1933
        %v2229 = vunpack.c.l.b16 %v1934
        %v2230 = vunpack.c.l.b16 %v1935
        %v2231 = vunpack.c.l.b16 %v1936
        %v2232 = vunpack.c.l.b16 %v1937
        %v2233 = vunpack.c.l.b16 %v1938
        %v2234 = vunpack.c.l.b16 %v1939
        %v2235 = vunpack.c.l.b16 %v1940
        %v2236 = vunpack.c.l.b16 %v1941
        %v2237 = vunpack.c.l.b16 %v1942
        %v2238 = vunpack.c.l.b16 %v1943
        %v2239 = vunpack.c.l.b16 %v1944
        %v2240 = vunpack.c.l.b16 %v1945
        %v2241 = vunpack.c.l.b16 %v1946
        %v2242 = vunpack.c.l.b16 %v1947
        %v2243 = vunpack.c.l.b16 %v1948
        %v2244 = vunpack.c.l.b16 %v1949
        %v2245 = vunpack.c.l.b16 %v1950
        %v2246 = vunpack.c.l.b16 %v1951
        %v2247 = vunpack.c.l.b16 %v1952
        %v2248 = vunpack.c.l.b16 %v1953
        %v2249 = vunpack.c.l.b16 %v1954
        %v2250 = vunpack.c.l.b16 %v1955
        %v2251 = vunpack.c.l.b16 %v1956
        %v2252 = vunpack.c.l.b16 %v1957
        %v2253 = vunpack.c.l.b16 %v1958
        %v2254 = vunpack.c.l.b16 %v1959
        %v2255 = vunpack.c.l.b16 %v1960
        %v2256 = vunpack.c.l.b16 %v1961
        %v2257 = vunpack.c.l.b16 %v1962
        %v2258 = vunpack.c.l.b16 %v1963
        %v2259 = vunpack.c.l.b16 %v1964
        %v2260 = vunpack.c.l.b16 %v1965
        %v2261 = vunpack.c.l.b16 %v1966
        %v2262 = vunpack.c.l.b16 %v1967
        %v2263 = vunpack.c.l.b16 %v1968
        %v2264 = vunpack.c.l.b16 %v1969
        %v2265 = vunpack.c.l.b16 %v1970
        %v2266 = vunpack.c.l.b16 %v1971
        %v2267 = vunpack.c.l.b16 %v1972
        %v2268 = vunpack.c.l.b16 %v1973
        %v2269 = vunpack.c.l.b16 %v1974
        %v2270 = vunpack.c.l.b16 %v1975
        %v2271 = vunpack.c.l.b16 %v1976
        %v2272 = vunpack.c.l.b16 %v1977
        %v2273 = vunpack.c.l.b16 %v1978
        %v2274 = vunpack.c.l.b16 %v1979
        %v2275 = vunpack.c.l.b16 %v1980
        %v2276 = vunpack.c.l.b16 %v1981
        %v2277 = vunpack.c.l.b16 %v1982
        %v2278 = vunpack.c.l.b16 %v1983
        %v2279 = vunpack.c.l.b16 %v1984
        %v2280 = vunpack.c.l.b16 %v1985
        %v2281 = vunpack.c.l.b16 %v1986
        %v2282 = vunpack.c.l.b16 %v1987
        %v2283 = vunpack.c.l.b16 %v1988
        %v2284 = vunpack.c.l.b16 %v1989
        %v2285 = vunpack.c.l.b16 %v1990
        %v2286 = vunpack.c.l.b16 %v1991
        %v2287 = vunpack.c.l.b16 %v1992
        %v2288 = vunpack.c.l.b16 %v1993
        %v2289 = vunpack.c.l.b16 %v1994
        %v2290 = vunpack.c.l.b16 %v1995
        %v2291 = vunpack.c.l.b16 %v1996
        %v2292 = vunpack.c.l.b16 %v1997
        %v2293 = vunpack.c.l.b16 %v1998
        %v2294 = vunpack.c.l.b16 %v1999
        %v2295 = vunpack.c.l.b16 %v2000
        %v2296 = vunpack.c.l.b16 %v2001
        %v2297 = vunpack.c.l.b16 %v2002
        %v2298 = vunpack.c.l.b16 %v2003
        %v2299 = vunpack.c.l.b16 %v2004
        %v2300 = vunpack.c.l.b16 %v2005
        %v2301 = vunpack.c.l.b16 %v2006
        %v2302 = vunpack.c.l.b16 %v2007
        %v2303 = vunpack.c.l.b16 %v2008
        %v2304 = vunpack.c.l.b16 %v2009
        %v2305 = vunpack.c.l.b16 %v2010
        %v2306 = vunpack.c.l.b16 %v2011
        %v2307 = vunpack.c.l.b16 %v2012
        %v2308 = vunpack.c.l.b16 %v2013
        %v2309 = vunpack.c.l.b16 %v2014
        %v2310 = vunpack.c.l.b16 %v2015
        %v2311 = vunpack.c.l.b16 %v2016
        %v2312 = vunpack.c.l.b16 %v2017
        %v2313 = vunpack.c.l.b16 %v2018
        %v2314 = vunpack.c.l.b16 %v2019
        %v2315 = vunpack.c.l.b16 %v2020
        %v2316 = vunpack.c.l.b16 %v2021
        %v2317 = vunpack.c.l.b16 %v2022
        %v2318 = vpack.c.b16 %v2175, %v2174
        %v2319 = vpack.c.b16 %v2177, %v2176
        %v2320 = vpack.c.b16 %v2179, %v2178
        %v2321 = vpack.c.b16 %v2181, %v2180
        %v2322 = vpack.c.b16 %v2183, %v2182
        %v2323 = vpack.c.b16 %v2185, %v2184
        %v2324 = vpack.c.b16 %v2187, %v2186
        %v2325 = vpack.c.b16 %v2189, %v2188
        %v2326 = vpack.c.b16 %v2191, %v2190
        %v2327 = vpack.c.b16 %v2193, %v2192
        %v2328 = vpack.c.b16 %v2195, %v2194
        %v2329 = vpack.c.b16 %v2197, %v2196
        %v2330 = vpack.c.b16 %v2199, %v2198
        %v2331 = vpack.c.b16 %v2201, %v2200
        %v2332 = vpack.c.b16 %v2203, %v2202
        %v2333 = vpack.c.b16 %v2205, %v2204
        %v2334 = vpack.c.b16 %v2207, %v2206
        %v2335 = vpack.c.b16 %v2209, %v2208
        %v2336 = vpack.c.b16 %v2211, %v2210
        %v2337 = vpack.c.b16 %v2213, %v2212
        %v2338 = vpack.c.b16 %v2215, %v2214
        %v2339 = vpack.c.b16 %v2217, %v2216
        %v2340 = vpack.c.b16 %v2219, %v2218
        %v2341 = vpack.c.b16 %v2221, %v2220
        %v2342 = vpack.c.b16 %v2223, %v2222
        %v2343 = vpack.c.b16 %v2225, %v2224
        %v2344 = vpack.c.b16 %v2227, %v2226
        %v2345 = vpack.c.b16 %v2229, %v2228
        %v2346 = vpack.c.b16 %v2231, %v2230
        %v2347 = vpack.c.b16 %v2233, %v2232
        %v2348 = vpack.c.b16 %v2235, %v2234
        %v2349 = vpack.c.b16 %v2237, %v2236
        %v2350 = vpack.c.b16 %v2239, %v2238
        %v2351 = vpack.c.b16 %v2241, %v2240
        %v2352 = vpack.c.b16 %v2243, %v2242
        %v2353 = vpack.c.b16 %v2245, %v2244
        %v2354 = vpack.c.b16 %v2247, %v2246
        %v2355 = vpack.c.b16 %v2249, %v2248
        %v2356 = vpack.c.b16 %v2251, %v2250
        %v2357 = vpack.c.b16 %v2253, %v2252
        %v2358 = vpack.c.b16 %v2255, %v2254
        %v2359 = vpack.c.b16 %v2257, %v2256
        %v2360 = vpack.c.b16 %v2259, %v2258
        %v2361 = vpack.c.b16 %v2261, %v2260
        %v2362 = vpack.c.b16 %v2263, %v2262
        %v2363 = vpack.c.b16 %v2265, %v2264
        %v2364 = vpack.c.b16 %v2267, %v2266
        %v2365 = vpack.c.b16 %v2269, %v2268
        %v2366 = vpack.c.b16 %v2271, %v2270
        %v2367 = vpack.c.b16 %v2273, %v2272
        %v2368 = vpack.c.b16 %v2275, %v2274
        %v2369 = vpack.c.b16 %v2277, %v2276
        %v2370 = vpack.c.b16 %v2279, %v2278
        %v2371 = vpack.c.b16 %v2281, %v2280
        %v2372 = vpack.c.b16 %v2283, %v2282
        %v2373 = vpack.c.b16 %v2285, %v2284
        %v2374 = vpack.c.b16 %v2287, %v2286
        %v2375 = vpack.c.b16 %v2289, %v2288
        %v2376 = vpack.c.b16 %v2291, %v2290
        %v2377 = vpack.c.b16 %v2293, %v2292
        %v2378 = vpack.c.b16 %v2295, %v2294
        %v2379 = vpack.c.b16 %v2297, %v2296
        %v2380 = vpack.c.b16 %v2299, %v2298
        %v2381 = vpack.c.b16 %v2301, %v2300
        %v2382 = vpack.c.b16 %v2303, %v2302
        %v2383 = vpack.c.b16 %v2305, %v2304
        %v2384 = vpack.c.b16 %v2307, %v2306
        %v2385 = vpack.c.b16 %v2309, %v2308
        %v2386 = vpack.c.b16 %v2311, %v2310
        %v2387 = vpack.c.b16 %v2313, %v2312
        %v2388 = vpack.c.b16 %v2315, %v2314
        %v2389 = vpack.c.b16 %v2317, %v2316
        %2462 = vmatprep.subr.bf16.mxu0 0
        %2463 = vmatpush1.bf16.msra.mxu0 %v2318
        %2464 = vmatprep.subr.bf16.mxu0 0
        %2465 = vmatpush1.bf16.msra.mxu0 %v2319
        %2466 = vmatprep.subr.bf16.mxu0 0
        %2467 = vmatpush1.bf16.msra.mxu0 %v2320
        %2468 = vmatprep.subr.bf16.mxu0 0
        %2469 = vmatpush1.bf16.msra.mxu0 %v2321
        %2470 = vmatprep.subr.bf16.mxu0 0
        %2471 = vmatpush1.bf16.msra.mxu0 %v2322
        %2472 = vmatprep.subr.bf16.mxu0 0
        %2473 = vmatpush1.bf16.msra.mxu0 %v2323
        %2474 = vmatprep.subr.bf16.mxu0 0
        %2475 = vmatpush1.bf16.msra.mxu0 %v2324
        %2476 = vmatprep.subr.bf16.mxu0 0
        %2477 = vmatpush1.bf16.msra.mxu0 %v2325
        %2478 = vmatprep.subr.bf16.mxu0 0
        %2479 = vmatpush1.bf16.msra.mxu0 %v2326
        %2480 = vmatprep.subr.bf16.mxu0 0
        %2481 = vmatpush1.bf16.msra.mxu0 %v2327
        %2482 = vmatprep.subr.bf16.mxu0 0
        %2483 = vmatpush1.bf16.msra.mxu0 %v2328
        %2484 = vmatprep.subr.bf16.mxu0 0
        %2485 = vmatpush1.bf16.msra.mxu0 %v2329
        %2486 = vmatprep.subr.bf16.mxu0 0
        %2487 = vmatpush1.bf16.msra.mxu0 %v2330
        %2488 = vmatprep.subr.bf16.mxu0 0
        %2489 = vmatpush1.bf16.msra.mxu0 %v2331
        %2490 = vmatprep.subr.bf16.mxu0 0
        %2491 = vmatpush1.bf16.msra.mxu0 %v2332
        %2492 = vmatprep.subr.bf16.mxu0 0
        %2493 = vmatpush1.bf16.msra.mxu0 %v2333
        %2494 = vmatprep.mubr.bf16.mxu0 %v1736
        %2495 = vmatmul.mubr.bf16.gmra.mrb[0].mxu0 %v1735
        %v2496 = vpop.f32.mrb[0].mxu0
        %v2497 = vadd.f32 %v2028, %v2496
        %v2498 = vpop.f32.mrb[0].mxu0
        %v2499 = vpop.f32.mrb[0].mxu0
        %v2500 = vadd.f32 %v2028, %v2499
        %v2501 = vpop.f32.mrb[0].mxu0
        %2502 = vmatprep.mubr.bf16.mxu0 %v1745
        %2503 = vmatmul.mubr.bf16.gmra.mrb[0].mxu0 %v1744
        %v2504 = vpop.f32.mrb[0].mxu0
        %v2505 = vadd.f32 %v2028, %v2504
        %v2506 = vpop.f32.mrb[0].mxu0
        %v2507 = vpop.f32.mrb[0].mxu0
        %v2508 = vadd.f32 %v2028, %v2507
        %v2509 = vpop.f32.mrb[0].mxu0
        %2510 = vmatprep.mubr.bf16.mxu0 %v1754
        %2511 = vmatmul.mubr.bf16.gmra.mrb[0].mxu0 %v1753
        %v2512 = vpop.f32.mrb[0].mxu0
        %v2513 = vadd.f32 %v2028, %v2512
        %v2514 = vpop.f32.mrb[0].mxu0
        %v2515 = vpop.f32.mrb[0].mxu0
        %v2516 = vadd.f32 %v2028, %v2515
        %v2517 = vpop.f32.mrb[0].mxu0
        %2518 = vmatprep.mubr.bf16.mxu0 %v1763
        %2519 = vmatmul.mubr.bf16.gmra.mrb[0].mxu0 %v1762
        %v2520 = vpop.f32.mrb[0].mxu0
        %v2521 = vadd.f32 %v2028, %v2520
        %v2522 = vpop.f32.mrb[0].mxu0
        %v2523 = vpop.f32.mrb[0].mxu0
        %v2524 = vadd.f32 %v2028, %v2523
        %v2525 = vpop.f32.mrb[0].mxu0
        %2526 = vmatprep.mubr.bf16.mxu0 %v1772
        %2527 = vmatmul.mubr.bf16.gmra.mrb[0].mxu0 %v1771
        %v2528 = vpop.f32.mrb[0].mxu0
        %v2529 = vadd.f32 %v2028, %v2528
        %v2530 = vpop.f32.mrb[0].mxu0
        %v2531 = vpop.f32.mrb[0].mxu0
        %v2532 = vadd.f32 %v2028, %v2531
        %v2533 = vpop.f32.mrb[0].mxu0
        %2534 = vmatprep.mubr.bf16.mxu0 %v1781
        %2535 = vmatmul.mubr.bf16.gmra.mrb[0].mxu0 %v1780
        %v2536 = vpop.f32.mrb[0].mxu0
        %v2537 = vadd.f32 %v2028, %v2536
        %v2538 = vpop.f32.mrb[0].mxu0
        %v2539 = vpop.f32.mrb[0].mxu0
        %v2540 = vadd.f32 %v2028, %v2539
        %v2541 = vpop.f32.mrb[0].mxu0
        %2542 = vmatprep.mubr.bf16.mxu0 %v1790
        %2543 = vmatmul.mubr.bf16.gmra.mrb[0].mxu0 %v1789
        %v2544 = vpop.f32.mrb[0].mxu0
        %v2545 = vadd.f32 %v2028, %v2544
        %v2546 = vpop.f32.mrb[0].mxu0
        %v2547 = vpop.f32.mrb[0].mxu0
        %v2548 = vadd.f32 %v2028, %v2547
        %v2549 = vpop.f32.mrb[0].mxu0
        %2550 = vmatprep.mubr.bf16.mxu0 %v1799
        %2551 = vmatmul.mubr.bf16.gmra.mrb[0].mxu0 %v1798
        %v2552 = vpop.f32.mrb[0].mxu0
        %v2553 = vadd.f32 %v2028, %v2552
        %v2554 = vpop.f32.mrb[0].mxu0
        %v2555 = vpop.f32.mrb[0].mxu0
        %v2556 = vadd.f32 %v2028, %v2555
        %v2557 = vpop.f32.mrb[0].mxu0
        %2558 = vmatprep.mubr.bf16.mxu0 %v1808
        %2559 = vmatmul.mubr.bf16.gmra.mrb[0].mxu0 %v1807
        %v2560 = vpop.f32.mrb[0].mxu0
        %v2561 = vadd.f32 %v2028, %v2560
        %v2562 = vpop.f32.mrb[0].mxu0
        %v2563 = vpop.f32.mrb[0].mxu0
        %v2564 = vadd.f32 %v2028, %v2563
        %v2565 = vpop.f32.mrb[0].mxu0
        %2566 = vmatprep.mubr.bf16.mxu0 %v1817
        %2567 = vmatmul.mubr.bf16.gmra.mrb[0].mxu0 %v1816
        %v2568 = vpop.f32.mrb[0].mxu0
        %v2569 = vadd.f32 %v2028, %v2568
        %v2570 = vpop.f32.mrb[0].mxu0
        %v2571 = vpop.f32.mrb[0].mxu0
        %v2572 = vadd.f32 %v2028, %v2571
        %v2573 = vpop.f32.mrb[0].mxu0
        %2574 = vmatprep.mubr.bf16.mxu0 %v1826
        %2575 = vmatmul.mubr.bf16.gmra.mrb[0].mxu0 %v1825
        %v2576 = vpop.f32.mrb[0].mxu0
        %v2577 = vadd.f32 %v2028, %v2576
        %v2578 = vpop.f32.mrb[0].mxu0
        %v2579 = vpop.f32.mrb[0].mxu0
        %v2580 = vadd.f32 %v2028, %v2579
        %v2581 = vpop.f32.mrb[0].mxu0
        %2582 = vmatprep.mubr.bf16.mxu0 %v1835
        %2583 = vmatmul.mubr.bf16.gmra.mrb[0].mxu0 %v1834
        %v2584 = vpop.f32.mrb[0].mxu0
        %v2585 = vadd.f32 %v2028, %v2584
        %v2586 = vpop.f32.mrb[0].mxu0
        %v2587 = vpop.f32.mrb[0].mxu0
        %v2588 = vadd.f32 %v2028, %v2587
        %v2589 = vpop.f32.mrb[0].mxu0
        %2590 = vmatprep.mubr.bf16.mxu0 %v1844
        %2591 = vmatmul.mubr.bf16.gmra.mrb[0].mxu0 %v1843
        %v2592 = vpop.f32.mrb[0].mxu0
        %v2593 = vadd.f32 %v2028, %v2592
        %v2594 = vpop.f32.mrb[0].mxu0
        %v2595 = vpop.f32.mrb[0].mxu0
        %v2596 = vadd.f32 %v2028, %v2595
        %v2597 = vpop.f32.mrb[0].mxu0
        %2598 = vmatprep.mubr.bf16.mxu0 %v1853
        %2599 = vmatmul.mubr.bf16.gmra.mrb[0].mxu0 %v1852
        %v2600 = vpop.f32.mrb[0].mxu0
        %v2601 = vadd.f32 %v2028, %v2600
        %v2602 = vpop.f32.mrb[0].mxu0
        %v2603 = vpop.f32.mrb[0].mxu0
        %v2604 = vadd.f32 %v2028, %v2603
        %v2605 = vpop.f32.mrb[0].mxu0
        %2606 = vmatprep.mubr.bf16.mxu0 %v1862
        %2607 = vmatmul.mubr.bf16.gmra.mrb[0].mxu0 %v1861
        %v2608 = vpop.f32.mrb[0].mxu0
        %v2609 = vadd.f32 %v2028, %v2608
        %v2610 = vpop.f32.mrb[0].mxu0
        %v2611 = vpop.f32.mrb[0].mxu0
        %v2612 = vadd.f32 %v2028, %v2611
        %v2613 = vpop.f32.mrb[0].mxu0
        %2614 = vmatprep.mubr.bf16.mxu0 %v1871
        %2615 = vmatmul.mubr.bf16.gmra.mrb[0].mxu0 %v1870
        %v2616 = vpop.f32.mrb[0].mxu0
        %v2617 = vadd.f32 %v2028, %v2616
        %v2618 = vpop.f32.mrb[0].mxu0
        %v2619 = vpop.f32.mrb[0].mxu0
        %v2620 = vadd.f32 %v2028, %v2619
        %v2621 = vpop.f32.mrb[0].mxu0
        %2622 = vdwg.mxu0
        %2623 = vmatprep.subr.bf16.mxu0 0
        %2624 = vmatpush1.bf16.msra.mxu0 %v2334
        %2625 = vmatprep.subr.bf16.mxu0 0
        %2626 = vmatpush1.bf16.msra.mxu0 %v2335
        %2627 = vmatprep.subr.bf16.mxu0 0
        %2628 = vmatpush1.bf16.msra.mxu0 %v2336
        %2629 = vmatprep.subr.bf16.mxu0 0
        %2630 = vmatpush1.bf16.msra.mxu0 %v2337
        %2631 = vmatprep.subr.bf16.mxu0 0
        %2632 = vmatpush1.bf16.msra.mxu0 %v2338
        %2633 = vmatprep.subr.bf16.mxu0 0
        %2634 = vmatpush1.bf16.msra.mxu0 %v2339
        %2635 = vmatprep.subr.bf16.mxu0 0
        %2636 = vmatpush1.bf16.msra.mxu0 %v2340
        %2637 = vmatprep.subr.bf16.mxu0 0
        %2638 = vmatpush1.bf16.msra.mxu0 %v2341
        %2639 = vmatprep.subr.bf16.mxu0 0
        %2640 = vmatpush1.bf16.msra.mxu0 %v2342
        %2641 = vmatprep.subr.bf16.mxu0 0
        %2642 = vmatpush1.bf16.msra.mxu0 %v2343
        %2643 = vmatprep.subr.bf16.mxu0 0
        %2644 = vmatpush1.bf16.msra.mxu0 %v2344
        %2645 = vmatprep.subr.bf16.mxu0 0
        %2646 = vmatpush1.bf16.msra.mxu0 %v2345
        %2647 = vmatprep.subr.bf16.mxu0 0
        %2648 = vmatpush1.bf16.msra.mxu0 %v2346
        %2649 = vmatprep.subr.bf16.mxu0 0
        %2650 = vmatpush1.bf16.msra.mxu0 %v2347
        %2651 = vmatprep.subr.bf16.mxu0 0
        %2652 = vmatpush1.bf16.msra.mxu0 %v2348
        %2653 = vmatprep.subr.bf16.mxu0 0
        %2654 = vmatpush1.bf16.msra.mxu0 %v2349
        %2655 = vmatprep.mubr.bf16.mxu0 %v1738
        %2656 = vmatmul.mubr.bf16.gmra.mrb[0].mxu0 %v1737
        %v2657 = vpop.f32.mrb[0].mxu0
        %v2658 = vadd.f32 %v2497, %v2657
        %v2659 = vpop.f32.mrb[0].mxu0
        %v2660 = vpop.f32.mrb[0].mxu0
        %v2661 = vadd.f32 %v2500, %v2660
        %v2662 = vpop.f32.mrb[0].mxu0
        %2663 = vmatprep.mubr.bf16.mxu0 %v1747
        %2664 = vmatmul.mubr.bf16.gmra.mrb[0].mxu0 %v1746
        %v2665 = vpop.f32.mrb[0].mxu0
        %v2666 = vadd.f32 %v2505, %v2665
        %v2667 = vpop.f32.mrb[0].mxu0
        %v2668 = vpop.f32.mrb[0].mxu0
        %v2669 = vadd.f32 %v2508, %v2668
        %v2670 = vpop.f32.mrb[0].mxu0
        %2671 = vmatprep.mubr.bf16.mxu0 %v1756
        %2672 = vmatmul.mubr.bf16.gmra.mrb[0].mxu0 %v1755
        %v2673 = vpop.f32.mrb[0].mxu0
        %v2674 = vadd.f32 %v2513, %v2673
        %v2675 = vpop.f32.mrb[0].mxu0
        %v2676 = vpop.f32.mrb[0].mxu0
        %v2677 = vadd.f32 %v2516, %v2676
        %v2678 = vpop.f32.mrb[0].mxu0
        %2679 = vmatprep.mubr.bf16.mxu0 %v1765
        %2680 = vmatmul.mubr.bf16.gmra.mrb[0].mxu0 %v1764
        %v2681 = vpop.f32.mrb[0].mxu0
        %v2682 = vadd.f32 %v2521, %v2681
        %v2683 = vpop.f32.mrb[0].mxu0
        %v2684 = vpop.f32.mrb[0].mxu0
        %v2685 = vadd.f32 %v2524, %v2684
        %v2686 = vpop.f32.mrb[0].mxu0
        %2687 = vmatprep.mubr.bf16.mxu0 %v1774
        %2688 = vmatmul.mubr.bf16.gmra.mrb[0].mxu0 %v1773
        %v2689 = vpop.f32.mrb[0].mxu0
        %v2690 = vadd.f32 %v2529, %v2689
        %v2691 = vpop.f32.mrb[0].mxu0
        %v2692 = vpop.f32.mrb[0].mxu0
        %v2693 = vadd.f32 %v2532, %v2692
        %v2694 = vpop.f32.mrb[0].mxu0
        %2695 = vmatprep.mubr.bf16.mxu0 %v1783
        %2696 = vmatmul.mubr.bf16.gmra.mrb[0].mxu0 %v1782
        %v2697 = vpop.f32.mrb[0].mxu0
        %v2698 = vadd.f32 %v2537, %v2697
        %v2699 = vpop.f32.mrb[0].mxu0
        %v2700 = vpop.f32.mrb[0].mxu0
        %v2701 = vadd.f32 %v2540, %v2700
        %v2702 = vpop.f32.mrb[0].mxu0
        %2703 = vmatprep.mubr.bf16.mxu0 %v1792
        %2704 = vmatmul.mubr.bf16.gmra.mrb[0].mxu0 %v1791
        %v2705 = vpop.f32.mrb[0].mxu0
        %v2706 = vadd.f32 %v2545, %v2705
        %v2707 = vpop.f32.mrb[0].mxu0
        %v2708 = vpop.f32.mrb[0].mxu0
        %v2709 = vadd.f32 %v2548, %v2708
        %v2710 = vpop.f32.mrb[0].mxu0
        %2711 = vmatprep.mubr.bf16.mxu0 %v1801
        %2712 = vmatmul.mubr.bf16.gmra.mrb[0].mxu0 %v1800
        %v2713 = vpop.f32.mrb[0].mxu0
        %v2714 = vadd.f32 %v2553, %v2713
        %v2715 = vpop.f32.mrb[0].mxu0
        %v2716 = vpop.f32.mrb[0].mxu0
        %v2717 = vadd.f32 %v2556, %v2716
        %v2718 = vpop.f32.mrb[0].mxu0
        %2719 = vmatprep.mubr.bf16.mxu0 %v1810
        %2720 = vmatmul.mubr.bf16.gmra.mrb[0].mxu0 %v1809
        %v2721 = vpop.f32.mrb[0].mxu0
        %v2722 = vadd.f32 %v2561, %v2721
        %v2723 = vpop.f32.mrb[0].mxu0
        %v2724 = vpop.f32.mrb[0].mxu0
        %v2725 = vadd.f32 %v2564, %v2724
        %v2726 = vpop.f32.mrb[0].mxu0
        %2727 = vmatprep.mubr.bf16.mxu0 %v1819
        %2728 = vmatmul.mubr.bf16.gmra.mrb[0].mxu0 %v1818
        %v2729 = vpop.f32.mrb[0].mxu0
        %v2730 = vadd.f32 %v2569, %v2729
        %v2731 = vpop.f32.mrb[0].mxu0
        %v2732 = vpop.f32.mrb[0].mxu0
        %v2733 = vadd.f32 %v2572, %v2732
        %v2734 = vpop.f32.mrb[0].mxu0
        %2735 = vmatprep.mubr.bf16.mxu0 %v1828
        %2736 = vmatmul.mubr.bf16.gmra.mrb[0].mxu0 %v1827
        %v2737 = vpop.f32.mrb[0].mxu0
        %v2738 = vadd.f32 %v2577, %v2737
        %v2739 = vpop.f32.mrb[0].mxu0
        %v2740 = vpop.f32.mrb[0].mxu0
        %v2741 = vadd.f32 %v2580, %v2740
        %v2742 = vpop.f32.mrb[0].mxu0
        %2743 = vmatprep.mubr.bf16.mxu0 %v1837
        %2744 = vmatmul.mubr.bf16.gmra.mrb[0].mxu0 %v1836
        %v2745 = vpop.f32.mrb[0].mxu0
        %v2746 = vadd.f32 %v2585, %v2745
        %v2747 = vpop.f32.mrb[0].mxu0
        %v2748 = vpop.f32.mrb[0].mxu0
        %v2749 = vadd.f32 %v2588, %v2748
        %v2750 = vpop.f32.mrb[0].mxu0
        %2751 = vmatprep.mubr.bf16.mxu0 %v1846
        %2752 = vmatmul.mubr.bf16.gmra.mrb[0].mxu0 %v1845
        %v2753 = vpop.f32.mrb[0].mxu0
        %v2754 = vadd.f32 %v2593, %v2753
        %v2755 = vpop.f32.mrb[0].mxu0
        %v2756 = vpop.f32.mrb[0].mxu0
        %v2757 = vadd.f32 %v2596, %v2756
        %v2758 = vpop.f32.mrb[0].mxu0
        %2759 = vmatprep.mubr.bf16.mxu0 %v1855
        %2760 = vmatmul.mubr.bf16.gmra.mrb[0].mxu0 %v1854
        %v2761 = vpop.f32.mrb[0].mxu0
        %v2762 = vadd.f32 %v2601, %v2761
        %v2763 = vpop.f32.mrb[0].mxu0
        %v2764 = vpop.f32.mrb[0].mxu0
        %v2765 = vadd.f32 %v2604, %v2764
        %v2766 = vpop.f32.mrb[0].mxu0
        %2767 = vmatprep.mubr.bf16.mxu0 %v1864
        %2768 = vmatmul.mubr.bf16.gmra.mrb[0].mxu0 %v1863
        %v2769 = vpop.f32.mrb[0].mxu0
        %v2770 = vadd.f32 %v2609, %v2769
        %v2771 = vpop.f32.mrb[0].mxu0
        %v2772 = vpop.f32.mrb[0].mxu0
        %v2773 = vadd.f32 %v2612, %v2772
        %v2774 = vpop.f32.mrb[0].mxu0
        %2775 = vmatprep.mubr.bf16.mxu0 %v1873
        %2776 = vmatmul.mubr.bf16.gmra.mrb[0].mxu0 %v1872
        %v2777 = vpop.f32.mrb[0].mxu0
        %v2778 = vadd.f32 %v2617, %v2777
        %v2779 = vpop.f32.mrb[0].mxu0
        %v2780 = vpop.f32.mrb[0].mxu0
        %v2781 = vadd.f32 %v2620, %v2780
        %v2782 = vpop.f32.mrb[0].mxu0
        %2783 = vdwg.mxu0
        %2784 = vmatprep.subr.bf16.mxu0 0
        %2785 = vmatpush1.bf16.msra.mxu0 %v2350
        %2786 = vmatprep.subr.bf16.mxu0 0
        %2787 = vmatpush1.bf16.msra.mxu0 %v2351
        %2788 = vmatprep.subr.bf16.mxu0 0
        %2789 = vmatpush1.bf16.msra.mxu0 %v2352
        %2790 = vmatprep.subr.bf16.mxu0 0
        %2791 = vmatpush1.bf16.msra.mxu0 %v2353
        %2792 = vmatprep.subr.bf16.mxu0 0
        %2793 = vmatpush1.bf16.msra.mxu0 %v2354
        %2794 = vmatprep.subr.bf16.mxu0 0
        %2795 = vmatpush1.bf16.msra.mxu0 %v2355
        %2796 = vmatprep.subr.bf16.mxu0 0
        %2797 = vmatpush1.bf16.msra.mxu0 %v2356
        %2798 = vmatprep.subr.bf16.mxu0 0
        %2799 = vmatpush1.bf16.msra.mxu0 %v2357
        %2800 = vmatprep.subr.bf16.mxu0 0
        %2801 = vmatpush1.bf16.msra.mxu0 %v2358
        %2802 = vmatprep.subr.bf16.mxu0 0
        %2803 = vmatpush1.bf16.msra.mxu0 %v2359
        %2804 = vmatprep.subr.bf16.mxu0 0
        %2805 = vmatpush1.bf16.msra.mxu0 %v2360
        %2806 = vmatprep.subr.bf16.mxu0 0
        %2807 = vmatpush1.bf16.msra.mxu0 %v2361
        %2808 = vmatprep.subr.bf16.mxu0 0
        %2809 = vmatpush1.bf16.msra.mxu0 %v2362
        %2810 = vmatprep.subr.bf16.mxu0 0
        %2811 = vmatpush1.bf16.msra.mxu0 %v2363
        %2812 = vmatprep.subr.bf16.mxu0 0
        %2813 = vmatpush1.bf16.msra.mxu0 %v2364
        %2814 = vmatprep.subr.bf16.mxu0 0
        %2815 = vmatpush1.bf16.msra.mxu0 %v2365
        %2816 = vmatprep.mubr.bf16.mxu0 %v1740
        %2817 = vmatmul.mubr.bf16.gmra.mrb[0].mxu0 %v1739
        %v2818 = vpop.f32.mrb[0].mxu0
        %v2819 = vadd.f32 %v2658, %v2818
        %v2820 = vpop.f32.mrb[0].mxu0
        %v2821 = vpop.f32.mrb[0].mxu0
        %v2822 = vadd.f32 %v2661, %v2821
        %v2823 = vpop.f32.mrb[0].mxu0
        %2824 = vmatprep.mubr.bf16.mxu0 %v1749
        %2825 = vmatmul.mubr.bf16.gmra.mrb[0].mxu0 %v1748
        %v2826 = vpop.f32.mrb[0].mxu0
        %v2827 = vadd.f32 %v2666, %v2826
        %v2828 = vpop.f32.mrb[0].mxu0
        %v2829 = vpop.f32.mrb[0].mxu0
        %v2830 = vadd.f32 %v2669, %v2829
        %v2831 = vpop.f32.mrb[0].mxu0
        %2832 = vmatprep.mubr.bf16.mxu0 %v1758
        %2833 = vmatmul.mubr.bf16.gmra.mrb[0].mxu0 %v1757
        %v2834 = vpop.f32.mrb[0].mxu0
        %v2835 = vadd.f32 %v2674, %v2834
        %v2836 = vpop.f32.mrb[0].mxu0
        %v2837 = vpop.f32.mrb[0].mxu0
        %v2838 = vadd.f32 %v2677, %v2837
        %v2839 = vpop.f32.mrb[0].mxu0
        %2840 = vmatprep.mubr.bf16.mxu0 %v1767
        %2841 = vmatmul.mubr.bf16.gmra.mrb[0].mxu0 %v1766
        %v2842 = vpop.f32.mrb[0].mxu0
        %v2843 = vadd.f32 %v2682, %v2842
        %v2844 = vpop.f32.mrb[0].mxu0
        %v2845 = vpop.f32.mrb[0].mxu0
        %v2846 = vadd.f32 %v2685, %v2845
        %v2847 = vpop.f32.mrb[0].mxu0
        %2848 = vmatprep.mubr.bf16.mxu0 %v1776
        %2849 = vmatmul.mubr.bf16.gmra.mrb[0].mxu0 %v1775
        %v2850 = vpop.f32.mrb[0].mxu0
        %v2851 = vadd.f32 %v2690, %v2850
        %v2852 = vpop.f32.mrb[0].mxu0
        %v2853 = vpop.f32.mrb[0].mxu0
        %v2854 = vadd.f32 %v2693, %v2853
        %v2855 = vpop.f32.mrb[0].mxu0
        %2856 = vmatprep.mubr.bf16.mxu0 %v1785
        %2857 = vmatmul.mubr.bf16.gmra.mrb[0].mxu0 %v1784
        %v2858 = vpop.f32.mrb[0].mxu0
        %v2859 = vadd.f32 %v2698, %v2858
        %v2860 = vpop.f32.mrb[0].mxu0
        %v2861 = vpop.f32.mrb[0].mxu0
        %v2862 = vadd.f32 %v2701, %v2861
        %v2863 = vpop.f32.mrb[0].mxu0
        %2864 = vmatprep.mubr.bf16.mxu0 %v1794
        %2865 = vmatmul.mubr.bf16.gmra.mrb[0].mxu0 %v1793
        %v2866 = vpop.f32.mrb[0].mxu0
        %v2867 = vadd.f32 %v2706, %v2866
        %v2868 = vpop.f32.mrb[0].mxu0
        %v2869 = vpop.f32.mrb[0].mxu0
        %v2870 = vadd.f32 %v2709, %v2869
        %v2871 = vpop.f32.mrb[0].mxu0
        %2872 = vmatprep.mubr.bf16.mxu0 %v1803
        %2873 = vmatmul.mubr.bf16.gmra.mrb[0].mxu0 %v1802
        %v2874 = vpop.f32.mrb[0].mxu0
        %v2875 = vadd.f32 %v2714, %v2874
        %v2876 = vpop.f32.mrb[0].mxu0
        %v2877 = vpop.f32.mrb[0].mxu0
        %v2878 = vadd.f32 %v2717, %v2877
        %v2879 = vpop.f32.mrb[0].mxu0
        %2880 = vmatprep.mubr.bf16.mxu0 %v1812
        %2881 = vmatmul.mubr.bf16.gmra.mrb[0].mxu0 %v1811
        %v2882 = vpop.f32.mrb[0].mxu0
        %v2883 = vadd.f32 %v2722, %v2882
        %v2884 = vpop.f32.mrb[0].mxu0
        %v2885 = vpop.f32.mrb[0].mxu0
        %v2886 = vadd.f32 %v2725, %v2885
        %v2887 = vpop.f32.mrb[0].mxu0
        %2888 = vmatprep.mubr.bf16.mxu0 %v1821
        %2889 = vmatmul.mubr.bf16.gmra.mrb[0].mxu0 %v1820
        %v2890 = vpop.f32.mrb[0].mxu0
        %v2891 = vadd.f32 %v2730, %v2890
        %v2892 = vpop.f32.mrb[0].mxu0
        %v2893 = vpop.f32.mrb[0].mxu0
        %v2894 = vadd.f32 %v2733, %v2893
        %v2895 = vpop.f32.mrb[0].mxu0
        %2896 = vmatprep.mubr.bf16.mxu0 %v1830
        %2897 = vmatmul.mubr.bf16.gmra.mrb[0].mxu0 %v1829
        %v2898 = vpop.f32.mrb[0].mxu0
        %v2899 = vadd.f32 %v2738, %v2898
        %v2900 = vpop.f32.mrb[0].mxu0
        %v2901 = vpop.f32.mrb[0].mxu0
        %v2902 = vadd.f32 %v2741, %v2901
        %v2903 = vpop.f32.mrb[0].mxu0
        %2904 = vmatprep.mubr.bf16.mxu0 %v1839
        %2905 = vmatmul.mubr.bf16.gmra.mrb[0].mxu0 %v1838
        %v2906 = vpop.f32.mrb[0].mxu0
        %v2907 = vadd.f32 %v2746, %v2906
        %v2908 = vpop.f32.mrb[0].mxu0
        %v2909 = vpop.f32.mrb[0].mxu0
        %v2910 = vadd.f32 %v2749, %v2909
        %v2911 = vpop.f32.mrb[0].mxu0
        %2912 = vmatprep.mubr.bf16.mxu0 %v1848
        %2913 = vmatmul.mubr.bf16.gmra.mrb[0].mxu0 %v1847
        %v2914 = vpop.f32.mrb[0].mxu0
        %v2915 = vadd.f32 %v2754, %v2914
        %v2916 = vpop.f32.mrb[0].mxu0
        %v2917 = vpop.f32.mrb[0].mxu0
        %v2918 = vadd.f32 %v2757, %v2917
        %v2919 = vpop.f32.mrb[0].mxu0
        %2920 = vmatprep.mubr.bf16.mxu0 %v1857
        %2921 = vmatmul.mubr.bf16.gmra.mrb[0].mxu0 %v1856
        %v2922 = vpop.f32.mrb[0].mxu0
        %v2923 = vadd.f32 %v2762, %v2922
        %v2924 = vpop.f32.mrb[0].mxu0
        %v2925 = vpop.f32.mrb[0].mxu0
        %v2926 = vadd.f32 %v2765, %v2925
        %v2927 = vpop.f32.mrb[0].mxu0
        %2928 = vmatprep.mubr.bf16.mxu0 %v1866
        %2929 = vmatmul.mubr.bf16.gmra.mrb[0].mxu0 %v1865
        %v2930 = vpop.f32.mrb[0].mxu0
        %v2931 = vadd.f32 %v2770, %v2930
        %v2932 = vpop.f32.mrb[0].mxu0
        %v2933 = vpop.f32.mrb[0].mxu0
        %v2934 = vadd.f32 %v2773, %v2933
        %v2935 = vpop.f32.mrb[0].mxu0
        %2936 = vmatprep.mubr.bf16.mxu0 %v1875
        %2937 = vmatmul.mubr.bf16.gmra.mrb[0].mxu0 %v1874
        %v2938 = vpop.f32.mrb[0].mxu0
        %v2939 = vadd.f32 %v2778, %v2938
        %v2940 = vpop.f32.mrb[0].mxu0
        %v2941 = vpop.f32.mrb[0].mxu0
        %v2942 = vadd.f32 %v2781, %v2941
        %v2943 = vpop.f32.mrb[0].mxu0
        %2944 = vdwg.mxu0
        %2945 = vmatprep.subr.bf16.mxu0 0
        %2946 = vmatpush1.bf16.msra.mxu0 %v2366
        %2947 = vmatprep.subr.bf16.mxu0 0
        %2948 = vmatpush1.bf16.msra.mxu0 %v2367
        %2949 = vmatprep.subr.bf16.mxu0 0
        %2950 = vmatpush1.bf16.msra.mxu0 %v2368
        %2951 = vmatprep.subr.bf16.mxu0 0
        %2952 = vmatpush1.bf16.msra.mxu0 %v2369
        %2953 = vmatprep.subr.bf16.mxu0 0
        %2954 = vmatpush1.bf16.msra.mxu0 %v2370
        %2955 = vmatprep.subr.bf16.mxu0 0
        %2956 = vmatpush1.bf16.msra.mxu0 %v2371
        %2957 = vmatprep.subr.bf16.mxu0 0
        %2958 = vmatpush1.bf16.msra.mxu0 %v2372
        %2959 = vmatprep.subr.bf16.mxu0 0
        %2960 = vmatpush1.bf16.msra.mxu0 %v2373
        %2961 = vmatprep.subr.bf16.mxu0 0
        %2962 = vmatpush1.bf16.msra.mxu0 %v2374
        %2963 = vmatprep.subr.bf16.mxu0 0
        %2964 = vmatpush1.bf16.msra.mxu0 %v2375
        %2965 = vmatprep.subr.bf16.mxu0 0
        %2966 = vmatpush1.bf16.msra.mxu0 %v2376
        %2967 = vmatprep.subr.bf16.mxu0 0
        %2968 = vmatpush1.bf16.msra.mxu0 %v2377
        %2969 = vmatprep.subr.bf16.mxu0 0
        %2970 = vmatpush1.bf16.msra.mxu0 %v2378
        %2971 = vmatprep.subr.bf16.mxu0 0
        %2972 = vmatpush1.bf16.msra.mxu0 %v2379
        %2973 = vmatprep.subr.bf16.mxu0 0
        %2974 = vmatpush1.bf16.msra.mxu0 %v2380
        %2975 = vmatprep.subr.bf16.mxu0 0
        %2976 = vmatpush1.bf16.msra.mxu0 %v2381
        %2977 = vmatprep.mubr.bf16.mxu0 %v1742
        %2978 = vmatmul.mubr.bf16.gmra.mrb[0].mxu0 %v1741
        %v2979 = vpop.f32.mrb[0].mxu0
        %v2980 = vadd.f32 %v2819, %v2979
        %v2981 = vpop.f32.mrb[0].mxu0
        %v2982 = vpop.f32.mrb[0].mxu0
        %v2983 = vadd.f32 %v2822, %v2982
        %v2984 = vpop.f32.mrb[0].mxu0
        %2985 = vmatprep.mubr.bf16.mxu0 %v1751
        %2986 = vmatmul.mubr.bf16.gmra.mrb[0].mxu0 %v1750
        %v2987 = vpop.f32.mrb[0].mxu0
        %v2988 = vadd.f32 %v2827, %v2987
        %v2989 = vpop.f32.mrb[0].mxu0
        %v2990 = vpop.f32.mrb[0].mxu0
        %v2991 = vadd.f32 %v2830, %v2990
        %v2992 = vpop.f32.mrb[0].mxu0
        %2993 = vmatprep.mubr.bf16.mxu0 %v1760
        %2994 = vmatmul.mubr.bf16.gmra.mrb[0].mxu0 %v1759
        %v2995 = vpop.f32.mrb[0].mxu0
        %v2996 = vadd.f32 %v2835, %v2995
        %v2997 = vpop.f32.mrb[0].mxu0
        %v2998 = vpop.f32.mrb[0].mxu0
        %v2999 = vadd.f32 %v2838, %v2998
        %v3000 = vpop.f32.mrb[0].mxu0
        %3001 = vmatprep.mubr.bf16.mxu0 %v1769
        %3002 = vmatmul.mubr.bf16.gmra.mrb[0].mxu0 %v1768
        %v3003 = vpop.f32.mrb[0].mxu0
        %v3004 = vadd.f32 %v2843, %v3003
        %v3005 = vpop.f32.mrb[0].mxu0
        %v3006 = vpop.f32.mrb[0].mxu0
        %v3007 = vadd.f32 %v2846, %v3006
        %v3008 = vpop.f32.mrb[0].mxu0
        %3009 = vmatprep.mubr.bf16.mxu0 %v1778
        %3010 = vmatmul.mubr.bf16.gmra.mrb[0].mxu0 %v1777
        %v3011 = vpop.f32.mrb[0].mxu0
        %v3012 = vadd.f32 %v2851, %v3011
        %v3013 = vpop.f32.mrb[0].mxu0
        %v3014 = vpop.f32.mrb[0].mxu0
        %v3015 = vadd.f32 %v2854, %v3014
        %v3016 = vpop.f32.mrb[0].mxu0
        %3017 = vmatprep.mubr.bf16.mxu0 %v1787
        %3018 = vmatmul.mubr.bf16.gmra.mrb[0].mxu0 %v1786
        %v3019 = vpop.f32.mrb[0].mxu0
        %v3020 = vadd.f32 %v2859, %v3019
        %v3021 = vpop.f32.mrb[0].mxu0
        %v3022 = vpop.f32.mrb[0].mxu0
        %v3023 = vadd.f32 %v2862, %v3022
        %v3024 = vpop.f32.mrb[0].mxu0
        %3025 = vmatprep.mubr.bf16.mxu0 %v1796
        %3026 = vmatmul.mubr.bf16.gmra.mrb[0].mxu0 %v1795
        %v3027 = vpop.f32.mrb[0].mxu0
        %v3028 = vadd.f32 %v2867, %v3027
        %v3029 = vpop.f32.mrb[0].mxu0
        %v3030 = vpop.f32.mrb[0].mxu0
        %v3031 = vadd.f32 %v2870, %v3030
        %v3032 = vpop.f32.mrb[0].mxu0
        %3033 = vmatprep.mubr.bf16.mxu0 %v1805
        %3034 = vmatmul.mubr.bf16.gmra.mrb[0].mxu0 %v1804
        %v3035 = vpop.f32.mrb[0].mxu0
        %v3036 = vadd.f32 %v2875, %v3035
        %v3037 = vpop.f32.mrb[0].mxu0
        %v3038 = vpop.f32.mrb[0].mxu0
        %v3039 = vadd.f32 %v2878, %v3038
        %v3040 = vpop.f32.mrb[0].mxu0
        %3041 = vmatprep.mubr.bf16.mxu0 %v1814
        %3042 = vmatmul.mubr.bf16.gmra.mrb[0].mxu0 %v1813
        %v3043 = vpop.f32.mrb[0].mxu0
        %v3044 = vadd.f32 %v2883, %v3043
        %v3045 = vpop.f32.mrb[0].mxu0
        %v3046 = vpop.f32.mrb[0].mxu0
        %v3047 = vadd.f32 %v2886, %v3046
        %v3048 = vpop.f32.mrb[0].mxu0
        %3049 = vmatprep.mubr.bf16.mxu0 %v1823
        %3050 = vmatmul.mubr.bf16.gmra.mrb[0].mxu0 %v1822
        %v3051 = vpop.f32.mrb[0].mxu0
        %v3052 = vadd.f32 %v2891, %v3051
        %v3053 = vpop.f32.mrb[0].mxu0
        %v3054 = vpop.f32.mrb[0].mxu0
        %v3055 = vadd.f32 %v2894, %v3054
        %v3056 = vpop.f32.mrb[0].mxu0
        %3057 = vmatprep.mubr.bf16.mxu0 %v1832
        %3058 = vmatmul.mubr.bf16.gmra.mrb[0].mxu0 %v1831
        %v3059 = vpop.f32.mrb[0].mxu0
        %v3060 = vadd.f32 %v2899, %v3059
        %v3061 = vpop.f32.mrb[0].mxu0
        %v3062 = vpop.f32.mrb[0].mxu0
        %v3063 = vadd.f32 %v2902, %v3062
        %v3064 = vpop.f32.mrb[0].mxu0
        %3065 = vmatprep.mubr.bf16.mxu0 %v1841
        %3066 = vmatmul.mubr.bf16.gmra.mrb[0].mxu0 %v1840
        %v3067 = vpop.f32.mrb[0].mxu0
        %v3068 = vadd.f32 %v2907, %v3067
        %v3069 = vpop.f32.mrb[0].mxu0
        %v3070 = vpop.f32.mrb[0].mxu0
        %v3071 = vadd.f32 %v2910, %v3070
        %v3072 = vpop.f32.mrb[0].mxu0
        %3073 = vmatprep.mubr.bf16.mxu0 %v1850
        %3074 = vmatmul.mubr.bf16.gmra.mrb[0].mxu0 %v1849
        %v3075 = vpop.f32.mrb[0].mxu0
        %v3076 = vadd.f32 %v2915, %v3075
        %v3077 = vpop.f32.mrb[0].mxu0
        %v3078 = vpop.f32.mrb[0].mxu0
        %v3079 = vadd.f32 %v2918, %v3078
        %v3080 = vpop.f32.mrb[0].mxu0
        %3081 = vmatprep.mubr.bf16.mxu0 %v1859
        %3082 = vmatmul.mubr.bf16.gmra.mrb[0].mxu0 %v1858
        %v3083 = vpop.f32.mrb[0].mxu0
        %v3084 = vadd.f32 %v2923, %v3083
        %v3085 = vpop.f32.mrb[0].mxu0
        %v3086 = vpop.f32.mrb[0].mxu0
        %v3087 = vadd.f32 %v2926, %v3086
        %v3088 = vpop.f32.mrb[0].mxu0
        %3089 = vmatprep.mubr.bf16.mxu0 %v1868
        %3090 = vmatmul.mubr.bf16.gmra.mrb[0].mxu0 %v1867
        %v3091 = vpop.f32.mrb[0].mxu0
        %v3092 = vadd.f32 %v2931, %v3091
        %v3093 = vpop.f32.mrb[0].mxu0
        %v3094 = vpop.f32.mrb[0].mxu0
        %v3095 = vadd.f32 %v2934, %v3094
        %v3096 = vpop.f32.mrb[0].mxu0
        %3097 = vmatprep.mubr.bf16.mxu0 %v1877
        %3098 = vmatmul.mubr.bf16.gmra.mrb[0].mxu0 %v1876
        %v3099 = vpop.f32.mrb[0].mxu0
        %v3100 = vadd.f32 %v2939, %v3099
        %v3101 = vpop.f32.mrb[0].mxu0
        %v3102 = vpop.f32.mrb[0].mxu0
        %v3103 = vadd.f32 %v2942, %v3102
        %v3104 = vpop.f32.mrb[0].mxu0
        %3105 = vdwg.mxu0
        %3106 = vmatprep.subr.bf16.mxu0 0
        %3107 = vmatpush1.bf16.msra.mxu0 %v2382
        %3108 = vmatprep.subr.bf16.mxu0 0
        %3109 = vmatpush1.bf16.msra.mxu0 %v2383
        %3110 = vmatprep.subr.bf16.mxu0 0
        %3111 = vmatpush1.bf16.msra.mxu0 %v2384
        %3112 = vmatprep.subr.bf16.mxu0 0
        %3113 = vmatpush1.bf16.msra.mxu0 %v2385
        %3114 = vmatprep.subr.bf16.mxu0 0
        %3115 = vmatpush1.bf16.msra.mxu0 %v2386
        %3116 = vmatprep.subr.bf16.mxu0 0
        %3117 = vmatpush1.bf16.msra.mxu0 %v2387
        %3118 = vmatprep.subr.bf16.mxu0 0
        %3119 = vmatpush1.bf16.msra.mxu0 %v2388
        %3120 = vmatprep.subr.bf16.mxu0 0
        %3121 = vmatpush1.bf16.msra.mxu0 %v2389
        %3122 = vmatprep.subr.bf16.mxu0 0
        %3123 = vmatpush1.bf16.msra.mxu0 0
        %3124 = vmatprep.subr.bf16.mxu0 0
        %3125 = vmatpush1.bf16.msra.mxu0 0
        %3126 = vmatprep.subr.bf16.mxu0 0
        %3127 = vmatpush1.bf16.msra.mxu0 0
        %3128 = vmatprep.subr.bf16.mxu0 0
        %3129 = vmatpush1.bf16.msra.mxu0 0
        %3130 = vmatprep.subr.bf16.mxu0 0
        %3131 = vmatpush1.bf16.msra.mxu0 0
        %3132 = vmatprep.subr.bf16.mxu0 0
        %3133 = vmatpush1.bf16.msra.mxu0 0
        %3134 = vmatprep.subr.bf16.mxu0 0
        %3135 = vmatpush1.bf16.msra.mxu0 0
        %3136 = vmatprep.subr.bf16.mxu0 0
        %3137 = vmatpush1.bf16.msra.mxu0 0
        %3138 = vmatprep.mubr.bf16.mxu0 0
        %3139 = vmatmul.mubr.bf16.gmra.mrb[0].mxu0 %v1743
        %v3140 = vpop.f32.mrb[0].mxu0
        %v3141 = vadd.f32 %v2980, %v3140
        %v3142 = vpop.f32.mrb[0].mxu0
        %v3143 = vpop.f32.mrb[0].mxu0
        %v3144 = vadd.f32 %v2983, %v3143
        %v3145 = vpop.f32.mrb[0].mxu0
        %3146 = vmatprep.mubr.bf16.mxu0 0
        %3147 = vmatmul.mubr.bf16.gmra.mrb[0].mxu0 %v1752
        %v3148 = vpop.f32.mrb[0].mxu0
        %v3149 = vadd.f32 %v2988, %v3148
        %v3150 = vpop.f32.mrb[0].mxu0
        %v3151 = vpop.f32.mrb[0].mxu0
        %v3152 = vadd.f32 %v2991, %v3151
        %v3153 = vpop.f32.mrb[0].mxu0
        %3154 = vmatprep.mubr.bf16.mxu0 0
        %3155 = vmatmul.mubr.bf16.gmra.mrb[0].mxu0 %v1761
        %v3156 = vpop.f32.mrb[0].mxu0
        %v3157 = vadd.f32 %v2996, %v3156
        %v3158 = vpop.f32.mrb[0].mxu0
        %v3159 = vpop.f32.mrb[0].mxu0
        %v3160 = vadd.f32 %v2999, %v3159
        %v3161 = vpop.f32.mrb[0].mxu0
        %3162 = vmatprep.mubr.bf16.mxu0 0
        %3163 = vmatmul.mubr.bf16.gmra.mrb[0].mxu0 %v1770
        %v3164 = vpop.f32.mrb[0].mxu0
        %v3165 = vadd.f32 %v3004, %v3164
        %v3166 = vpop.f32.mrb[0].mxu0
        %v3167 = vpop.f32.mrb[0].mxu0
        %v3168 = vadd.f32 %v3007, %v3167
        %v3169 = vpop.f32.mrb[0].mxu0
        %3170 = vmatprep.mubr.bf16.mxu0 0
        %3171 = vmatmul.mubr.bf16.gmra.mrb[0].mxu0 %v1779
        %v3172 = vpop.f32.mrb[0].mxu0
        %v3173 = vadd.f32 %v3012, %v3172
        %v3174 = vpop.f32.mrb[0].mxu0
        %v3175 = vpop.f32.mrb[0].mxu0
        %v3176 = vadd.f32 %v3015, %v3175
        %v3177 = vpop.f32.mrb[0].mxu0
        %3178 = vmatprep.mubr.bf16.mxu0 0
        %3179 = vmatmul.mubr.bf16.gmra.mrb[0].mxu0 %v1788
        %v3180 = vpop.f32.mrb[0].mxu0
        %v3181 = vadd.f32 %v3020, %v3180
        %v3182 = vpop.f32.mrb[0].mxu0
        %v3183 = vpop.f32.mrb[0].mxu0
        %v3184 = vadd.f32 %v3023, %v3183
        %v3185 = vpop.f32.mrb[0].mxu0
        %3186 = vmatprep.mubr.bf16.mxu0 0
        %3187 = vmatmul.mubr.bf16.gmra.mrb[0].mxu0 %v1797
        %v3188 = vpop.f32.mrb[0].mxu0
        %v3189 = vadd.f32 %v3028, %v3188
        %v3190 = vpop.f32.mrb[0].mxu0
        %v3191 = vpop.f32.mrb[0].mxu0
        %v3192 = vadd.f32 %v3031, %v3191
        %v3193 = vpop.f32.mrb[0].mxu0
        %3194 = vmatprep.mubr.bf16.mxu0 0
        %3195 = vmatmul.mubr.bf16.gmra.mrb[0].mxu0 %v1806
        %v3196 = vpop.f32.mrb[0].mxu0
        %v3197 = vadd.f32 %v3036, %v3196
        %v3198 = vpop.f32.mrb[0].mxu0
        %v3199 = vpop.f32.mrb[0].mxu0
        %v3200 = vadd.f32 %v3039, %v3199
        %v3201 = vpop.f32.mrb[0].mxu0
        %3202 = vmatprep.mubr.bf16.mxu0 0
        %3203 = vmatmul.mubr.bf16.gmra.mrb[0].mxu0 %v1815
        %v3204 = vpop.f32.mrb[0].mxu0
        %v3205 = vadd.f32 %v3044, %v3204
        %v3206 = vpop.f32.mrb[0].mxu0
        %v3207 = vpop.f32.mrb[0].mxu0
        %v3208 = vadd.f32 %v3047, %v3207
        %v3209 = vpop.f32.mrb[0].mxu0
        %3210 = vmatprep.mubr.bf16.mxu0 0
        %3211 = vmatmul.mubr.bf16.gmra.mrb[0].mxu0 %v1824
        %v3212 = vpop.f32.mrb[0].mxu0
        %v3213 = vadd.f32 %v3052, %v3212
        %v3214 = vpop.f32.mrb[0].mxu0
        %v3215 = vpop.f32.mrb[0].mxu0
        %v3216 = vadd.f32 %v3055, %v3215
        %v3217 = vpop.f32.mrb[0].mxu0
        %3218 = vmatprep.mubr.bf16.mxu0 0
        %3219 = vmatmul.mubr.bf16.gmra.mrb[0].mxu0 %v1833
        %v3220 = vpop.f32.mrb[0].mxu0
        %v3221 = vadd.f32 %v3060, %v3220
        %v3222 = vpop.f32.mrb[0].mxu0
        %v3223 = vpop.f32.mrb[0].mxu0
        %v3224 = vadd.f32 %v3063, %v3223
        %v3225 = vpop.f32.mrb[0].mxu0
        %3226 = vmatprep.mubr.bf16.mxu0 0
        %3227 = vmatmul.mubr.bf16.gmra.mrb[0].mxu0 %v1842
        %v3228 = vpop.f32.mrb[0].mxu0
        %v3229 = vadd.f32 %v3068, %v3228
        %v3230 = vpop.f32.mrb[0].mxu0
        %v3231 = vpop.f32.mrb[0].mxu0
        %v3232 = vadd.f32 %v3071, %v3231
        %v3233 = vpop.f32.mrb[0].mxu0
        %3234 = vmatprep.mubr.bf16.mxu0 0
        %3235 = vmatmul.mubr.bf16.gmra.mrb[0].mxu0 %v1851
        %v3236 = vpop.f32.mrb[0].mxu0
        %v3237 = vadd.f32 %v3076, %v3236
        %v3238 = vpop.f32.mrb[0].mxu0
        %v3239 = vpop.f32.mrb[0].mxu0
        %v3240 = vadd.f32 %v3079, %v3239
        %v3241 = vpop.f32.mrb[0].mxu0
        %3242 = vmatprep.mubr.bf16.mxu0 0
        %3243 = vmatmul.mubr.bf16.gmra.mrb[0].mxu0 %v1860
        %v3244 = vpop.f32.mrb[0].mxu0
        %v3245 = vadd.f32 %v3084, %v3244
        %v3246 = vpop.f32.mrb[0].mxu0
        %v3247 = vpop.f32.mrb[0].mxu0
        %v3248 = vadd.f32 %v3087, %v3247
        %v3249 = vpop.f32.mrb[0].mxu0
        %3250 = vmatprep.mubr.bf16.mxu0 0
        %3251 = vmatmul.mubr.bf16.gmra.mrb[0].mxu0 %v1869
        %v3252 = vpop.f32.mrb[0].mxu0
        %v3253 = vadd.f32 %v3092, %v3252
        %v3254 = vpop.f32.mrb[0].mxu0
        %v3255 = vpop.f32.mrb[0].mxu0
        %v3256 = vadd.f32 %v3095, %v3255
        %v3257 = vpop.f32.mrb[0].mxu0
        %3258 = vmatprep.mubr.bf16.mxu0 0
        %3259 = vmatmul.mubr.bf16.gmra.mrb[0].mxu0 %v1878
        %v3260 = vpop.f32.mrb[0].mxu0
        %v3261 = vadd.f32 %v3100, %v3260
        %v3262 = vpop.f32.mrb[0].mxu0
        %v3263 = vpop.f32.mrb[0].mxu0
        %v3264 = vadd.f32 %v3103, %v3263
        %v3265 = vpop.f32.mrb[0].mxu0
        %3266 = vdwg.mxu0
        %v3267 = vmax.f32 %v3141, 0.0
        %v3268 = vmax.f32 %v3144, 0.0
        %v3269 = vmax.f32 %v3149, 0.0
        %v3270 = vmax.f32 %v3152, 0.0
        %v3271 = vmax.f32 %v3157, 0.0
        %v3272 = vmax.f32 %v3160, 0.0
        %v3273 = vmax.f32 %v3165, 0.0
        %v3274 = vmax.f32 %v3168, 0.0
        %v3275 = vmax.f32 %v3173, 0.0
        %v3276 = vmax.f32 %v3176, 0.0
        %v3277 = vmax.f32 %v3181, 0.0
        %v3278 = vmax.f32 %v3184, 0.0
        %v3279 = vmax.f32 %v3189, 0.0
        %v3280 = vmax.f32 %v3192, 0.0
        %v3281 = vmax.f32 %v3197, 0.0
        %v3282 = vmax.f32 %v3200, 0.0
        %v3283 = vmax.f32 %v3205, 0.0
        %v3284 = vmax.f32 %v3208, 0.0
        %v3285 = vmax.f32 %v3213, 0.0
        %v3286 = vmax.f32 %v3216, 0.0
        %v3287 = vmax.f32 %v3221, 0.0
        %v3288 = vmax.f32 %v3224, 0.0
        %v3289 = vmax.f32 %v3229, 0.0
        %v3290 = vmax.f32 %v3232, 0.0
        %v3291 = vmax.f32 %v3237, 0.0
        %v3292 = vmax.f32 %v3240, 0.0
        %v3293 = vmax.f32 %v3245, 0.0
        %v3294 = vmax.f32 %v3248, 0.0
        %v3295 = vmax.f32 %v3253, 0.0
        %v3296 = vmax.f32 %v3256, 0.0
        %v3297 = vmax.f32 %v3261, 0.0
        %v3298 = vmax.f32 %v3264, 0.0
        %v3299 = vld [vmem:[#allocation2 + $0x20] sm:$0xff]
        %v3300 = vld [vmem:[#allocation2 + $0x68] sm:$0xff]
        %v3301 = vld [vmem:[#allocation2 + $0xb0] sm:$0xff]
        %v3302 = vld [vmem:[#allocation2 + $0xf8] sm:$0xff]
        %v3303 = vld [vmem:[#allocation2 + $0x140] sm:$0xff]
        %v3304 = vld [vmem:[#allocation2 + $0x188] sm:$0xff]
        %v3305 = vld [vmem:[#allocation2 + $0x1d0] sm:$0xff]
        %v3306 = vld [vmem:[#allocation2 + $0x218] sm:$0xff]
        %v3307 = vld [vmem:[#allocation2 + $0x260] sm:$0xff]
        %v3308 = vld [vmem:[#allocation2 + $0x2a8] sm:$0xff]
        %v3309 = vld [vmem:[#allocation2 + $0x2f0] sm:$0xff]
        %v3310 = vld [vmem:[#allocation2 + $0x338] sm:$0xff]
        %v3311 = vld [vmem:[#allocation2 + $0x380] sm:$0xff]
        %v3312 = vld [vmem:[#allocation2 + $0x3c8] sm:$0xff]
        %v3313 = vld [vmem:[#allocation2 + $0x410] sm:$0xff]
        %v3314 = vld [vmem:[#allocation2 + $0x458] sm:$0xff]
        %v3315 = vunpack.c.l.bf16 %v3299
        %v3316 = vunpack.c.h.bf16 %v3299
        %v3317 = vunpack.c.l.bf16 %v3300
        %v3318 = vunpack.c.h.bf16 %v3300
        %v3319 = vunpack.c.l.bf16 %v3301
        %v3320 = vunpack.c.h.bf16 %v3301
        %v3321 = vunpack.c.l.bf16 %v3302
        %v3322 = vunpack.c.h.bf16 %v3302
        %v3323 = vunpack.c.l.bf16 %v3303
        %v3324 = vunpack.c.h.bf16 %v3303
        %v3325 = vunpack.c.l.bf16 %v3304
        %v3326 = vunpack.c.h.bf16 %v3304
        %v3327 = vunpack.c.l.bf16 %v3305
        %v3328 = vunpack.c.h.bf16 %v3305
        %v3329 = vunpack.c.l.bf16 %v3306
        %v3330 = vunpack.c.h.bf16 %v3306
        %v3331 = vunpack.c.l.bf16 %v3307
        %v3332 = vunpack.c.h.bf16 %v3307
        %v3333 = vunpack.c.l.bf16 %v3308
        %v3334 = vunpack.c.h.bf16 %v3308
        %v3335 = vunpack.c.l.bf16 %v3309
        %v3336 = vunpack.c.h.bf16 %v3309
        %v3337 = vunpack.c.l.bf16 %v3310
        %v3338 = vunpack.c.h.bf16 %v3310
        %v3339 = vunpack.c.l.bf16 %v3311
        %v3340 = vunpack.c.h.bf16 %v3311
        %v3341 = vunpack.c.l.bf16 %v3312
        %v3342 = vunpack.c.h.bf16 %v3312
        %v3343 = vunpack.c.l.bf16 %v3313
        %v3344 = vunpack.c.h.bf16 %v3313
        %v3345 = vunpack.c.l.bf16 %v3314
        %v3346 = vunpack.c.h.bf16 %v3314
        %v3347 = vadd.f32 %v3267, %v3315
        %v3348 = vadd.f32 %v3268, %v3316
        %v3349 = vadd.f32 %v3269, %v3317
        %v3350 = vadd.f32 %v3270, %v3318
        %v3351 = vadd.f32 %v3271, %v3319
        %v3352 = vadd.f32 %v3272, %v3320
        %v3353 = vadd.f32 %v3273, %v3321
        %v3354 = vadd.f32 %v3274, %v3322
        %v3355 = vadd.f32 %v3275, %v3323
        %v3356 = vadd.f32 %v3276, %v3324
        %v3357 = vadd.f32 %v3277, %v3325
        %v3358 = vadd.f32 %v3278, %v3326
        %v3359 = vadd.f32 %v3279, %v3327
        %v3360 = vadd.f32 %v3280, %v3328
        %v3361 = vadd.f32 %v3281, %v3329
        %v3362 = vadd.f32 %v3282, %v3330
        %v3363 = vadd.f32 %v3283, %v3331
        %v3364 = vadd.f32 %v3284, %v3332
        %v3365 = vadd.f32 %v3285, %v3333
        %v3366 = vadd.f32 %v3286, %v3334
        %v3367 = vadd.f32 %v3287, %v3335
        %v3368 = vadd.f32 %v3288, %v3336
        %v3369 = vadd.f32 %v3289, %v3337
        %v3370 = vadd.f32 %v3290, %v3338
        %v3371 = vadd.f32 %v3291, %v3339
        %v3372 = vadd.f32 %v3292, %v3340
        %v3373 = vadd.f32 %v3293, %v3341
        %v3374 = vadd.f32 %v3294, %v3342
        %v3375 = vadd.f32 %v3295, %v3343
        %v3376 = vadd.f32 %v3296, %v3344
        %v3377 = vadd.f32 %v3297, %v3345
        %v3378 = vadd.f32 %v3298, %v3346
        %v3379 = vpack.c.bf16 %v3348, %v3347
        %v3380 = vpack.c.bf16 %v3350, %v3349
        %v3381 = vpack.c.bf16 %v3352, %v3351
        %v3382 = vpack.c.bf16 %v3354, %v3353
        %v3383 = vpack.c.bf16 %v3356, %v3355
        %v3384 = vpack.c.bf16 %v3358, %v3357
        %v3385 = vpack.c.bf16 %v3360, %v3359
        %v3386 = vpack.c.bf16 %v3362, %v3361
        %v3387 = vpack.c.bf16 %v3364, %v3363
        %v3388 = vpack.c.bf16 %v3366, %v3365
        %v3389 = vpack.c.bf16 %v3368, %v3367
        %v3390 = vpack.c.bf16 %v3370, %v3369
        %v3391 = vpack.c.bf16 %v3372, %v3371
        %v3392 = vpack.c.bf16 %v3374, %v3373
        %v3393 = vpack.c.bf16 %v3376, %v3375
        %v3394 = vpack.c.bf16 %v3378, %v3377
        %v3411 = vunpack.c.l.b16 %v3379
        %v3412 = vunpack.c.h.b16 %v3379
        %v3413 = vunpack.c.l.b16 %v3380
        %v3414 = vunpack.c.h.b16 %v3380
        %v3415 = vunpack.c.l.b16 %v3381
        %v3416 = vunpack.c.h.b16 %v3381
        %v3417 = vunpack.c.l.b16 %v3382
        %v3418 = vunpack.c.h.b16 %v3382
        %v3419 = vunpack.c.l.b16 %v3383
        %v3420 = vunpack.c.h.b16 %v3383
        %v3421 = vunpack.c.l.b16 %v3384
        %v3422 = vunpack.c.h.b16 %v3384
        %v3423 = vunpack.c.l.b16 %v3385
        %v3424 = vunpack.c.h.b16 %v3385
        %v3425 = vunpack.c.l.b16 %v3386
        %v3426 = vunpack.c.h.b16 %v3386
        %v3427 = vunpack.c.l.b16 %v3387
        %v3428 = vunpack.c.h.b16 %v3387
        %v3429 = vunpack.c.l.b16 %v3388
        %v3430 = vunpack.c.h.b16 %v3388
        %v3431 = vunpack.c.l.b16 %v3389
        %v3432 = vunpack.c.h.b16 %v3389
        %v3433 = vunpack.c.l.b16 %v3390
        %v3434 = vunpack.c.h.b16 %v3390
        %v3435 = vunpack.c.l.b16 %v3391
        %v3436 = vunpack.c.h.b16 %v3391
        %v3437 = vunpack.c.l.b16 %v3392
        %v3438 = vunpack.c.h.b16 %v3392
        %v3439 = vunpack.c.l.b16 %v3393
        %v3440 = vunpack.c.h.b16 %v3393
        %v3441 = vunpack.c.l.b16 %v3394
        %v3442 = vunpack.c.h.b16 %v3394
        %v3443 = vpack.c.b16 %v3411, %v3411
        %v3444 = vpack.c.b16 %v3412, %v3412
        %v3445 = vpack.c.b16 %v3413, %v3413
        %v3446 = vpack.c.b16 %v3414, %v3414
        %v3447 = vpack.c.b16 %v3415, %v3415
        %v3448 = vpack.c.b16 %v3416, %v3416
        %v3449 = vpack.c.b16 %v3417, %v3417
        %v3450 = vpack.c.b16 %v3418, %v3418
        %v3451 = vpack.c.b16 %v3419, %v3419
        %v3452 = vpack.c.b16 %v3420, %v3420
        %v3453 = vpack.c.b16 %v3421, %v3421
        %v3454 = vpack.c.b16 %v3422, %v3422
        %v3455 = vpack.c.b16 %v3423, %v3423
        %v3456 = vpack.c.b16 %v3424, %v3424
        %v3457 = vpack.c.b16 %v3425, %v3425
        %v3458 = vpack.c.b16 %v3426, %v3426
        %v3459 = vpack.c.b16 %v3427, %v3427
        %v3460 = vpack.c.b16 %v3428, %v3428
        %v3461 = vpack.c.b16 %v3429, %v3429
        %v3462 = vpack.c.b16 %v3430, %v3430
        %v3463 = vpack.c.b16 %v3431, %v3431
        %v3464 = vpack.c.b16 %v3432, %v3432
        %v3465 = vpack.c.b16 %v3433, %v3433
        %v3466 = vpack.c.b16 %v3434, %v3434
        %v3467 = vpack.c.b16 %v3435, %v3435
        %v3468 = vpack.c.b16 %v3436, %v3436
        %v3469 = vpack.c.b16 %v3437, %v3437
        %v3470 = vpack.c.b16 %v3438, %v3438
        %v3471 = vpack.c.b16 %v3439, %v3439
        %v3472 = vpack.c.b16 %v3440, %v3440
        %v3473 = vpack.c.b16 %v3441, %v3441
        %v3474 = vpack.c.b16 %v3442, %v3442
        %3507 = vst [vmem:[%s177] sm:$0xf] %v3443
        %3508 = vst [vmem:[%s177 + $0x4] sm:$0xf] %v3444
        %3509 = vst [vmem:[%s177 + $0x8] sm:$0xf] %v3445
        %3510 = vst [vmem:[%s177 + $0xc] sm:$0xf] %v3446
        %3511 = vst [vmem:[%s177 + $0x10] sm:$0xf] %v3447
        %3512 = vst [vmem:[%s177 + $0x14] sm:$0xf] %v3448
        %3513 = vst [vmem:[%s177 + $0x18] sm:$0xf] %v3449
        %3514 = vst [vmem:[%s177 + $0x1c] sm:$0xf] %v3450
        %3515 = vst [vmem:[%s177 + $0x20] sm:$0xf] %v3451
        %3516 = vst [vmem:[%s177 + $0x24] sm:$0xf] %v3452
        %3517 = vst [vmem:[%s177 + $0x28] sm:$0xf] %v3453
        %3518 = vst [vmem:[%s177 + $0x2c] sm:$0xf] %v3454
        %3519 = vst [vmem:[%s177 + $0x30] sm:$0xf] %v3455
        %3520 = vst [vmem:[%s177 + $0x34] sm:$0xf] %v3456
        %3521 = vst [vmem:[%s177 + $0x38] sm:$0xf] %v3457
        %3522 = vst [vmem:[%s177 + $0x3c] sm:$0xf] %v3458
        %3523 = vst [vmem:[%s177 + $0x40] sm:$0xf] %v3459
        %3524 = vst [vmem:[%s177 + $0x44] sm:$0xf] %v3460
        %3525 = vst [vmem:[%s177 + $0x48] sm:$0xf] %v3461
        %3526 = vst [vmem:[%s177 + $0x4c] sm:$0xf] %v3462
        %3527 = vst [vmem:[%s177 + $0x50] sm:$0xf] %v3463
        %3528 = vst [vmem:[%s177 + $0x54] sm:$0xf] %v3464
        %3529 = vst [vmem:[%s177 + $0x58] sm:$0xf] %v3465
        %3530 = vst [vmem:[%s177 + $0x5c] sm:$0xf] %v3466
        %3531 = vst [vmem:[%s177 + $0x60] sm:$0xf] %v3467
        %3532 = vst [vmem:[%s177 + $0x64] sm:$0xf] %v3468
        %3533 = vst [vmem:[%s177 + $0x68] sm:$0xf] %v3469
        %3534 = vst [vmem:[%s177 + $0x6c] sm:$0xf] %v3470
        %3535 = vst [vmem:[%s177 + $0x70] sm:$0xf] %v3471
        %3536 = vst [vmem:[%s177 + $0x74] sm:$0xf] %v3472
        %3537 = vst [vmem:[%s177 + $0x78] sm:$0xf] %v3473
        %3538 = vst [vmem:[%s177 + $0x7c] sm:$0xf] %v3474
        %s3539 = sand.u32 %s107, 1
        %s3540 = scalar_lea.sflag [#allocation4], %s3539
        %s3541 = sand.u32 %s107, 1
        %s3542 = smul.addr %s3541, 128
        %s3543 = scalar_lea.vmem [#allocation3], %s3542
        // Predicated region
        $region33: #{tpu_custom_call.1} parent=31 // pred_check
          %p3544 = pneg %p117
        $region34: #{tpu_custom_call.1} parent=31 // pred_check_branch
          %3546 = sbr.rel (%p3544) target = $region36
        $region35: #{tpu_custom_call.1} parent=31 // pred_region
          %s3547 = smul.u32 32, %s22
          %s3549 = ssub.s32 2048, 2048
          %3550 = vsyncadd %s3540, %s3549
          %s3551 = smul.addr %s21, 32
          %s3552 = sadd.s32 %s3547, %s3551
          %s3553 = smul.addr %s3552, 64
          %s3554 = scalar_lea.hbm %s3, %s3553
          %s3555 = sshll.u32 %s3543, 4
          %s3556 = int_to_ptr.vmem [resolvable:$true] %s3555
          %3561 = dma.vmem_to_hbm [thread:$0]  %s3556, 2048, %s3554, %s3540, 64, 64, 4
        $region36: #{tpu_custom_call.1} parent=31 // pred_fallthru
          _
      $region32: #{tpu_custom_call.1} parent=5 // pred_fallthru
        _
      %p3562 = scmp.le.s32.totalorder 2, %s12
      // Predicated region
      $region37: #{tpu_custom_call.1} parent=5 // pred_check
        %p3563 = pneg %p3562
      $region38: #{tpu_custom_call.1} parent=5 // pred_check_branch
        %3565 = sbr.rel (%p3563) target = $region40
      $region39: #{tpu_custom_call.1} parent=5 // pred_region
        %s3566 = ssub.s32 %s12, 2
        // Predicated region
        $region41: #{tpu_custom_call.1} parent=39 // pred_check
          %p3567 = pneg %p123
        $region42: #{tpu_custom_call.1} parent=39 // pred_check_branch
          %3569 = sbr.rel (%p3567) target = $region44
        $region43: #{tpu_custom_call.1} parent=39 // pred_region
          %s3570 = sand.u32 %s108, 1
          %s3571 = scalar_lea.sflag [#allocation4], %s3570
          %s3572 = sand.u32 %s108, 1
          %s3573 = smul.addr %s3572, 128
          %s3574 = scalar_lea.vmem [#allocation3], %s3573
          %3575 = dma.done %s3571, 2048
        $region44: #{tpu_custom_call.1} parent=39 // pred_fallthru
          _
      $region40: #{tpu_custom_call.1} parent=5 // pred_fallthru
        _
    $region6: #{tpu_custom_call.1} parent=1 // loop_footer
      %s16 = sadd.s32 1, %s12
    $region7: #{tpu_custom_call.1} parent=1 // loop_footer_branch
      %11 = sbr.rel target = $region3
    $region8: #{tpu_custom_call.1} parent=1 // loop_exit
      _
    %3576 = vsyncpa [#allocation4], 1
    %s3577 = scalar_lea.sflag [#allocation4], 1
    %3578 = vsyncpa %s3577, 1

</llo_original>
